<compile_context>
chip_gen: v6e
topology: v6e:2x2x1
jax: 0.10.0
libtpu: 0.0.40
codegen_flags: <defaults>
</compile_context>

<pallas_src>
import functools

import jax
import jax.numpy as jnp
from jax import lax
from jax.experimental import pallas as pl
from jax.experimental.pallas import tpu as pltpu


# ----------------------------- interpolation ------------------------------

def _interp_matrix(n_in, n_out):
    """Row-interpolation matrix for bilinear upsampling, align_corners=True."""
    assert n_in >= 2, "align_corners=True bilinear needs >= 2 input samples"
    i = jnp.arange(n_out, dtype=jnp.float32)
    src = i * (n_in - 1) / (n_out - 1)
    lo = jnp.clip(jnp.floor(src).astype(jnp.int32), 0, n_in - 2)
    frac = src - lo.astype(jnp.float32)
    m = jnp.zeros((n_out, n_in), jnp.float32)
    rows = jnp.arange(n_out)
    m = m.at[rows, lo].add(1.0 - frac)
    m = m.at[rows, lo + 1].add(frac)
    return m


# ----------------------------- fused kernel --------------------------------

def _conv_taps(canvases, w_ref, b_ref, kh, kw, wu, out_len, relu):
    """Direct 'valid' conv on fixed-row-stride flat canvases.

    canvases: list of (Cin_g, len_in) f32 arrays; their channel groups are
      stacked in the same order as the weight's input-channel axis.
    w_ref: (kh*kw, Cout, sum(Cin_g)) per-tap weights (tap t = i*kw + j).
    b_ref: (Cout, 1) bias.
    Returns (Cout, out_len) on the same fixed-width canvas; only positions
    belonging to valid output rows/cols hold real conv results, the slack /
    wrap positions hold garbage that later stages never read.
    """
    bounds = []
    c0 = 0
    for can in canvases:
        bounds.append((can, c0, c0 + can.shape[0]))
        c0 += can.shape[0]

    acc = None
    for t in range(kh * kw):
        off = (t // kw) * wu + (t % kw)
        w_t = w_ref[t]                                        # (Cout, Cin_total)
        for can, lo, hi in bounds:
            part = jnp.dot(w_t[:, lo:hi], can[:, off:off + out_len],
                           preferred_element_type=jnp.float32)
            acc = part if acc is None else acc + part
    acc = acc + b_ref[...]
    if relu:
        acc = jnp.maximum(acc, 0.0)
    return acc


def _expanding_block_kernel(x_ref, skip_ref, mup_ref,
                            w1_ref, b1_ref, w2_ref, b2_ref, w3_ref, b3_ref,
                            o_ref, *, wu, len1, len2, len3):
    # 1) bilinear 2x upsample: one lane-dense matmul, result stays in VMEM.
    x = x_ref[0].astype(jnp.float32)                          # (C, H*W)
    up = jnp.dot(x, mup_ref[...],
                 preferred_element_type=jnp.float32)          # (C, len_up)

    # 2) conv1 (2x2, no activation)
    h1 = _conv_taps([up], w1_ref, b1_ref, 2, 2, wu, len1, relu=False)

    # 3) skip connection: already center-cropped into the same canvas layout;
    #    conv2 consumes [h1 ; skip] without materializing the concat.
    skip = skip_ref[0].astype(jnp.float32)                    # (Cmid, len1)

    # 4) conv2 + ReLU, 5) conv3 + ReLU
    h2 = _conv_taps([h1, skip], w2_ref, b2_ref, 3, 3, wu, len2, relu=True)
    h3 = _conv_taps([h2], w3_ref, b3_ref, 3, 3, wu, len3, relu=True)

    o_ref[0] = h3.astype(o_ref.dtype)


def _weight_taps(w):
    """(Cout, Cin, kh, kw) -> (kh*kw, Cout, Cin), tap index t = i*kw + j."""
    co, ci, kh, kw = w.shape
    return jnp.transpose(w, (2, 3, 0, 1)).reshape(kh * kw, co, ci)


def expanding_block(params, x, skip_con_x):
    """Forward pass matching the PyTorch ExpandingBlock."""
    B, C, H, W = x.shape
    Cmid = C // 2
    Hu, Wu = 2 * H, 2 * W

    # valid conv output sizes (stride 1)
    Ho1, Wo1 = Hu - 1, Wu - 1          # conv1: 2x2
    Ho2, Wo2 = Ho1 - 2, Wo1 - 2        # conv2: 3x3
    Ho3, Wo3 = Ho2 - 2, Wo2 - 2        # conv3: 3x3

    # flat-canvas lengths: row stride Wu, slack rows shrink by 1 per conv so
    # every shifted read stays in bounds.
    s_up, s1, s2, s3 = 3, 2, 1, 0
    len_up = (Hu + s_up) * Wu
    len1 = (Ho1 + s1) * Wu
    len2 = (Ho2 + s2) * Wu
    len3 = (Ho3 + s3) * Wu
    # static in-bounds checks for the shifted-tap reads
    assert len1 - 1 + 1 * Wu + 1 <= len_up - 1
    assert len2 - 1 + 2 * Wu + 2 <= len1 - 1
    assert len3 - 1 + 2 * Wu + 2 <= len2 - 1

    # upsample as a single matmul: kron of the two 1-D interpolation matrices,
    # zero columns appended for the slack rows of the canvas.
    mh = _interp_matrix(H, Hu)                     # (Hu, H)
    mw = _interp_matrix(W, Wu)                     # (Wu, W)
    mup = jnp.kron(mh, mw).T                       # (H*W, Hu*Wu)
    mup = jnp.pad(mup, ((0, 0), (0, s_up * Wu)))   # (H*W, len_up)

    x_flat = x.reshape(B, C, H * W)

    # center-crop the skip connection to conv1's spatial size, widened to the
    # canvas (Wu columns, Ho1 + s1 rows); zero-pad if the source is too small.
    Bs, Cs, Hs, Ws = skip_con_x.shape
    r0 = Hs // 2 - Ho1 // 2
    c0 = Ws // 2 - Wo1 // 2
    rows, cols = Ho1 + s1, Wu
    r1, c1 = min(r0 + rows, Hs), min(c0 + cols, Ws)
    sk = skip_con_x[:, :, r0:r1, c0:c1]
    sk = jnp.pad(sk, ((0, 0), (0, 0),
                      (0, rows - (r1 - r0)), (0, cols - (c1 - c0))))
    skip_flat = sk.reshape(Bs, Cs, rows * cols)    # (B, Cmid, len1)

    w1t = _weight_taps(params["w1"])               # (4, Cmid, C)
    w2t = _weight_taps(params["w2"])               # (9, Cmid, C)  [x | skip]
    w3t = _weight_taps(params["w3"])               # (9, Cmid, Cmid)
    b1 = params["b1"].reshape(Cmid, 1)
    b2 = params["b2"].reshape(Cmid, 1)
    b3 = params["b3"].reshape(Cmid, 1)

    kern = functools.partial(_expanding_block_kernel,
                             wu=Wu, len1=len1, len2=len2, len3=len3)

    batch3 = lambda b: (b, 0, 0)
    const2 = lambda b: (0, 0)
    const3 = lambda b: (0, 0, 0)

    out = pl.pallas_call(
        kern,
        out_shape=jax.ShapeDtypeStruct((B, Cmid, len3), x.dtype),
        grid=(B,),
        in_specs=[
            pl.BlockSpec((1, C, H * W), batch3),
            pl.BlockSpec((1, Cs, rows * cols), batch3),
            pl.BlockSpec((H * W, len_up), const2),
            pl.BlockSpec(tuple(w1t.shape), const3),
            pl.BlockSpec(tuple(b1.shape), const2),
            pl.BlockSpec(tuple(w2t.shape), const3),
            pl.BlockSpec(tuple(b2.shape), const2),
            pl.BlockSpec(tuple(w3t.shape), const3),
            pl.BlockSpec(tuple(b3.shape), const2),
        ],
        out_specs=pl.BlockSpec((1, Cmid, len3), batch3),
        compiler_params=pltpu.CompilerParams(
            dimension_semantics=("parallel",)),
    )(x_flat, skip_flat, mup, w1t, b1, w2t, b2, w3t, b3)

    # strip the canvas padding: (B, Cmid, len3) -> (B, Cmid, Ho3, Wu) -> crop W
    out = out.reshape(B, Cmid, Ho3 + s3, Wu)[:, :, :Ho3, :Wo3]
    return out


# ----------------------------- pure-JAX reference ---------------------------

def crop(image, new_shape):
    mh = image.shape[2] // 2
    mw = image.shape[3] // 2
    sh = mh - new_shape[2] // 2
    sw = mw - new_shape[3] // 2
    return image[:, :, sh:sh + new_shape[2], sw:sw + new_shape[3]]


def _ref_conv(x, w, b):
    out = lax.conv_general_dilated(
        x, w, (1, 1), "VALID",
        dimension_numbers=("NCHW", "OIHW", "NCHW"),
        precision=lax.Precision.HIGHEST)
    return out + b.reshape(1, -1, 1, 1)


def _ref_forward(params, x, skip):
    B, C, H, W = x.shape
    mh = _interp_matrix(H, 2 * H)
    mw = _interp_matrix(W, 2 * W)
    x = jnp.einsum("ih,bchw->bciw", mh, x)
    x = jnp.einsum("jw,bciw->bcij", mw, x)
    x = _ref_conv(x, params["w1"], params["b1"])
    skip = crop(skip, x.shape)
    x = jnp.concatenate([x, skip], axis=1)
    x = jnp.maximum(_ref_conv(x, params["w2"], params["b2"]), 0.0)
    x = jnp.maximum(_ref_conv(x, params["w3"], params["b3"]), 0.0)
    return x


# ----------------------------- main ------------------------------------------

if __name__ == "__main__":
    key = jax.random.PRNGKey(0)
    ks = jax.random.split(key, 8)

    input_channels = 8
    B, H, W = 2, 8, 8

    # x: (B, C, H, W); skip from the contracting path has C/2 channels and a
    # larger spatial extent.
    x = jax.random.normal(ks[0], (B, input_channels, H, W), jnp.float32)
    skip_con_x = jax.random.normal(ks[1], (B, input_channels // 2, 20, 20),
                                   jnp.float32)

    co = input_channels // 2
    params = {
        "w1": 0.1 * jax.random.normal(ks[2], (co, input_channels, 2, 2), jnp.float32),
        "b1": 0.1 * jax.random.normal(ks[3], (co,), jnp.float32),
        "w2": 0.1 * jax.random.normal(ks[4], (co, input_channels, 3, 3), jnp.float32),
        "b2": 0.1 * jax.random.normal(ks[5], (co,), jnp.float32),
        "w3": 0.1 * jax.random.normal(ks[6], (co, co, 3, 3), jnp.float32),
        "b3": 0.1 * jax.random.normal(ks[7], (co,), jnp.float32),
    }

    out = jax.block_until_ready(expanding_block(params, x, skip_con_x))
    ref = jax.block_until_ready(_ref_forward(params, x, skip_con_x))

    expected_shape = (B, co, 2 * H - 5, 2 * W - 5)
    assert out.shape == expected_shape, (out.shape, expected_shape)
    max_err = float(jnp.max(jnp.abs(out - ref)))
    assert max_err < 1e-2, f"mismatch vs reference, max abs err {max_err}"

    print("KERNEL_OK")
</pallas_src>

<mosaic_0001>
module attributes {stable_mosaic.version = 11 : i64} {
  func.func @_expanding_block_kernel(%arg0: i32, %arg1: memref<1x8x64xf32, #tpu.memory_space<vmem>>, %arg2: memref<1x4x272xf32, #tpu.memory_space<vmem>>, %arg3: memref<64x304xf32, #tpu.memory_space<vmem>>, %arg4: memref<4x4x8xf32, #tpu.memory_space<vmem>>, %arg5: memref<4x1xf32, #tpu.memory_space<vmem>>, %arg6: memref<9x4x8xf32, #tpu.memory_space<vmem>>, %arg7: memref<4x1xf32, #tpu.memory_space<vmem>>, %arg8: memref<9x4x4xf32, #tpu.memory_space<vmem>>, %arg9: memref<4x1xf32, #tpu.memory_space<vmem>>, %arg10: memref<1x4x176xf32, #tpu.memory_space<vmem>>) attributes {dimension_semantics = [#tpu.dimension_semantics<parallel>], iteration_bounds = array<i64: 2>, scalar_prefetch = 0 : i64, scratch_operands = 0 : i64, tpu.core_type = #tpu.core_type<tc>, window_params = [{transform_indices = @transform_0, window_bounds = array<i64: 1, 8, 64>}, {transform_indices = @transform_1, window_bounds = array<i64: 1, 4, 272>}, {pipeline_mode = #tpu.pipeline_mode<synchronous>, transform_indices = @transform_2, window_bounds = array<i64: 64, 304>}, {pipeline_mode = #tpu.pipeline_mode<synchronous>, transform_indices = @transform_3, window_bounds = array<i64: 4, 4, 8>}, {pipeline_mode = #tpu.pipeline_mode<synchronous>, transform_indices = @transform_4, window_bounds = array<i64: 4, 1>}, {pipeline_mode = #tpu.pipeline_mode<synchronous>, transform_indices = @transform_5, window_bounds = array<i64: 9, 4, 8>}, {pipeline_mode = #tpu.pipeline_mode<synchronous>, transform_indices = @transform_6, window_bounds = array<i64: 4, 1>}, {pipeline_mode = #tpu.pipeline_mode<synchronous>, transform_indices = @transform_7, window_bounds = array<i64: 9, 4, 4>}, {pipeline_mode = #tpu.pipeline_mode<synchronous>, transform_indices = @transform_8, window_bounds = array<i64: 4, 1>}, {transform_indices = @transform_9, window_bounds = array<i64: 1, 4, 176>}]} {
    %c0 = arith.constant 0 : index
    %c0_0 = arith.constant 0 : index
    %c0_1 = arith.constant 0 : index
    %0 = vector.load %arg1[%c0, %c0_0, %c0_1] : memref<1x8x64xf32, #tpu.memory_space<vmem>>, vector<1x8x64xf32>
    %1 = vector.shape_cast %0 : vector<1x8x64xf32> to vector<8x64xf32>
    %c0_2 = arith.constant 0 : index
    %c0_3 = arith.constant 0 : index
    %2 = vector.load %arg3[%c0_2, %c0_3] : memref<64x304xf32, #tpu.memory_space<vmem>>, vector<64x304xf32>
    %cst = arith.constant dense<0.000000e+00> : vector<8x304xf32>
    %3 = tpu.matmul %1, %2, %cst {dimension_numbers = #tpu.dot_dimension_numbers<[1], [0], [0], [1], [0, 0, 1, 1], [], []>} : vector<8x64xf32>, vector<64x304xf32>, vector<8x304xf32> -> vector<8x304xf32>
    %c0_4 = arith.constant 0 : index
    %c0_5 = arith.constant 0 : index
    %c0_6 = arith.constant 0 : index
    %4 = vector.load %arg4[%c0_4, %c0_5, %c0_6] : memref<4x4x8xf32, #tpu.memory_space<vmem>>, vector<1x4x8xf32>
    %5 = vector.shape_cast %4 : vector<1x4x8xf32> to vector<4x8xf32>
    %6 = vector.extract_strided_slice %3 {offsets = [0, 0], sizes = [8, 272], strides = [1, 1]} : vector<8x304xf32> to vector<8x272xf32>
    %cst_7 = arith.constant dense<0.000000e+00> : vector<4x272xf32>
    %7 = tpu.matmul %5, %6, %cst_7 {dimension_numbers = #tpu.dot_dimension_numbers<[1], [0], [0], [1], [0, 0, 1, 1], [], []>} : vector<4x8xf32>, vector<8x272xf32>, vector<4x272xf32> -> vector<4x272xf32>
    %c1 = arith.constant 1 : index
    %c0_8 = arith.constant 0 : index
    %c0_9 = arith.constant 0 : index
    %8 = vector.load %arg4[%c1, %c0_8, %c0_9] : memref<4x4x8xf32, #tpu.memory_space<vmem>>, vector<1x4x8xf32>
    %9 = vector.shape_cast %8 : vector<1x4x8xf32> to vector<4x8xf32>
    %10 = vector.extract_strided_slice %3 {offsets = [0, 1], sizes = [8, 272], strides = [1, 1]} : vector<8x304xf32> to vector<8x272xf32>
    %cst_10 = arith.constant dense<0.000000e+00> : vector<4x272xf32>
    %11 = tpu.matmul %9, %10, %cst_10 {dimension_numbers = #tpu.dot_dimension_numbers<[1], [0], [0], [1], [0, 0, 1, 1], [], []>} : vector<4x8xf32>, vector<8x272xf32>, vector<4x272xf32> -> vector<4x272xf32>
    %12 = arith.addf %7, %11 : vector<4x272xf32>
    %c2 = arith.constant 2 : index
    %c0_11 = arith.constant 0 : index
    %c0_12 = arith.constant 0 : index
    %13 = vector.load %arg4[%c2, %c0_11, %c0_12] : memref<4x4x8xf32, #tpu.memory_space<vmem>>, vector<1x4x8xf32>
    %14 = vector.shape_cast %13 : vector<1x4x8xf32> to vector<4x8xf32>
    %15 = vector.extract_strided_slice %3 {offsets = [0, 16], sizes = [8, 272], strides = [1, 1]} : vector<8x304xf32> to vector<8x272xf32>
    %cst_13 = arith.constant dense<0.000000e+00> : vector<4x272xf32>
    %16 = tpu.matmul %14, %15, %cst_13 {dimension_numbers = #tpu.dot_dimension_numbers<[1], [0], [0], [1], [0, 0, 1, 1], [], []>} : vector<4x8xf32>, vector<8x272xf32>, vector<4x272xf32> -> vector<4x272xf32>
    %17 = arith.addf %12, %16 : vector<4x272xf32>
    %c3 = arith.constant 3 : index
    %c0_14 = arith.constant 0 : index
    %c0_15 = arith.constant 0 : index
    %18 = vector.load %arg4[%c3, %c0_14, %c0_15] : memref<4x4x8xf32, #tpu.memory_space<vmem>>, vector<1x4x8xf32>
    %19 = vector.shape_cast %18 : vector<1x4x8xf32> to vector<4x8xf32>
    %20 = vector.extract_strided_slice %3 {offsets = [0, 17], sizes = [8, 272], strides = [1, 1]} : vector<8x304xf32> to vector<8x272xf32>
    %cst_16 = arith.constant dense<0.000000e+00> : vector<4x272xf32>
    %21 = tpu.matmul %19, %20, %cst_16 {dimension_numbers = #tpu.dot_dimension_numbers<[1], [0], [0], [1], [0, 0, 1, 1], [], []>} : vector<4x8xf32>, vector<8x272xf32>, vector<4x272xf32> -> vector<4x272xf32>
    %22 = arith.addf %17, %21 : vector<4x272xf32>
    %c0_17 = arith.constant 0 : index
    %c0_18 = arith.constant 0 : index
    %23 = vector.load %arg5[%c0_17, %c0_18] : memref<4x1xf32, #tpu.memory_space<vmem>>, vector<4x1xf32>
    %24 = vector.broadcast %23 : vector<4x1xf32> to vector<4x272xf32>
    %25 = arith.addf %22, %24 : vector<4x272xf32>
    %c0_19 = arith.constant 0 : index
    %c0_20 = arith.constant 0 : index
    %c0_21 = arith.constant 0 : index
    %26 = vector.load %arg2[%c0_19, %c0_20, %c0_21] : memref<1x4x272xf32, #tpu.memory_space<vmem>>, vector<1x4x272xf32>
    %27 = vector.shape_cast %26 : vector<1x4x272xf32> to vector<4x272xf32>
    %c0_22 = arith.constant 0 : index
    %c0_23 = arith.constant 0 : index
    %c0_24 = arith.constant 0 : index
    %28 = vector.load %arg6[%c0_22, %c0_23, %c0_24] : memref<9x4x8xf32, #tpu.memory_space<vmem>>, vector<1x4x8xf32>
    %29 = vector.shape_cast %28 : vector<1x4x8xf32> to vector<4x8xf32>
    %30 = vector.extract_strided_slice %29 {offsets = [0, 0], sizes = [4, 4], strides = [1, 1]} : vector<4x8xf32> to vector<4x4xf32>
    %31 = vector.extract_strided_slice %25 {offsets = [0, 0], sizes = [4, 224], strides = [1, 1]} : vector<4x272xf32> to vector<4x224xf32>
    %cst_25 = arith.constant dense<0.000000e+00> : vector<4x224xf32>
    %32 = tpu.matmul %30, %31, %cst_25 {dimension_numbers = #tpu.dot_dimension_numbers<[1], [0], [0], [1], [0, 0, 1, 1], [], []>} : vector<4x4xf32>, vector<4x224xf32>, vector<4x224xf32> -> vector<4x224xf32>
    %33 = vector.extract_strided_slice %29 {offsets = [0, 4], sizes = [4, 4], strides = [1, 1]} : vector<4x8xf32> to vector<4x4xf32>
    %34 = vector.extract_strided_slice %27 {offsets = [0, 0], sizes = [4, 224], strides = [1, 1]} : vector<4x272xf32> to vector<4x224xf32>
    %cst_26 = arith.constant dense<0.000000e+00> : vector<4x224xf32>
    %35 = tpu.matmul %33, %34, %cst_26 {dimension_numbers = #tpu.dot_dimension_numbers<[1], [0], [0], [1], [0, 0, 1, 1], [], []>} : vector<4x4xf32>, vector<4x224xf32>, vector<4x224xf32> -> vector<4x224xf32>
    %36 = arith.addf %32, %35 : vector<4x224xf32>
    %c1_27 = arith.constant 1 : index
    %c0_28 = arith.constant 0 : index
    %c0_29 = arith.constant 0 : index
    %37 = vector.load %arg6[%c1_27, %c0_28, %c0_29] : memref<9x4x8xf32, #tpu.memory_space<vmem>>, vector<1x4x8xf32>
    %38 = vector.shape_cast %37 : vector<1x4x8xf32> to vector<4x8xf32>
    %39 = vector.extract_strided_slice %38 {offsets = [0, 0], sizes = [4, 4], strides = [1, 1]} : vector<4x8xf32> to vector<4x4xf32>
    %40 = vector.extract_strided_slice %25 {offsets = [0, 1], sizes = [4, 224], strides = [1, 1]} : vector<4x272xf32> to vector<4x224xf32>
    %cst_30 = arith.constant dense<0.000000e+00> : vector<4x224xf32>
    %41 = tpu.matmul %39, %40, %cst_30 {dimension_numbers = #tpu.dot_dimension_numbers<[1], [0], [0], [1], [0, 0, 1, 1], [], []>} : vector<4x4xf32>, vector<4x224xf32>, vector<4x224xf32> -> vector<4x224xf32>
    %42 = arith.addf %36, %41 : vector<4x224xf32>
    %43 = vector.extract_strided_slice %38 {offsets = [0, 4], sizes = [4, 4], strides = [1, 1]} : vector<4x8xf32> to vector<4x4xf32>
    %44 = vector.extract_strided_slice %27 {offsets = [0, 1], sizes = [4, 224], strides = [1, 1]} : vector<4x272xf32> to vector<4x224xf32>
    %cst_31 = arith.constant dense<0.000000e+00> : vector<4x224xf32>
    %45 = tpu.matmul %43, %44, %cst_31 {dimension_numbers = #tpu.dot_dimension_numbers<[1], [0], [0], [1], [0, 0, 1, 1], [], []>} : vector<4x4xf32>, vector<4x224xf32>, vector<4x224xf32> -> vector<4x224xf32>
    %46 = arith.addf %42, %45 : vector<4x224xf32>
    %c2_32 = arith.constant 2 : index
    %c0_33 = arith.constant 0 : index
    %c0_34 = arith.constant 0 : index
    %47 = vector.load %arg6[%c2_32, %c0_33, %c0_34] : memref<9x4x8xf32, #tpu.memory_space<vmem>>, vector<1x4x8xf32>
    %48 = vector.shape_cast %47 : vector<1x4x8xf32> to vector<4x8xf32>
    %49 = vector.extract_strided_slice %48 {offsets = [0, 0], sizes = [4, 4], strides = [1, 1]} : vector<4x8xf32> to vector<4x4xf32>
    %50 = vector.extract_strided_slice %25 {offsets = [0, 2], sizes = [4, 224], strides = [1, 1]} : vector<4x272xf32> to vector<4x224xf32>
    %cst_35 = arith.constant dense<0.000000e+00> : vector<4x224xf32>
    %51 = tpu.matmul %49, %50, %cst_35 {dimension_numbers = #tpu.dot_dimension_numbers<[1], [0], [0], [1], [0, 0, 1, 1], [], []>} : vector<4x4xf32>, vector<4x224xf32>, vector<4x224xf32> -> vector<4x224xf32>
    %52 = arith.addf %46, %51 : vector<4x224xf32>
    %53 = vector.extract_strided_slice %48 {offsets = [0, 4], sizes = [4, 4], strides = [1, 1]} : vector<4x8xf32> to vector<4x4xf32>
    %54 = vector.extract_strided_slice %27 {offsets = [0, 2], sizes = [4, 224], strides = [1, 1]} : vector<4x272xf32> to vector<4x224xf32>
    %cst_36 = arith.constant dense<0.000000e+00> : vector<4x224xf32>
    %55 = tpu.matmul %53, %54, %cst_36 {dimension_numbers = #tpu.dot_dimension_numbers<[1], [0], [0], [1], [0, 0, 1, 1], [], []>} : vector<4x4xf32>, vector<4x224xf32>, vector<4x224xf32> -> vector<4x224xf32>
    %56 = arith.addf %52, %55 : vector<4x224xf32>
    %c3_37 = arith.constant 3 : index
    %c0_38 = arith.constant 0 : index
    %c0_39 = arith.constant 0 : index
    %57 = vector.load %arg6[%c3_37, %c0_38, %c0_39] : memref<9x4x8xf32, #tpu.memory_space<vmem>>, vector<1x4x8xf32>
    %58 = vector.shape_cast %57 : vector<1x4x8xf32> to vector<4x8xf32>
    %59 = vector.extract_strided_slice %58 {offsets = [0, 0], sizes = [4, 4], strides = [1, 1]} : vector<4x8xf32> to vector<4x4xf32>
    %60 = vector.extract_strided_slice %25 {offsets = [0, 16], sizes = [4, 224], strides = [1, 1]} : vector<4x272xf32> to vector<4x224xf32>
    %cst_40 = arith.constant dense<0.000000e+00> : vector<4x224xf32>
    %61 = tpu.matmul %59, %60, %cst_40 {dimension_numbers = #tpu.dot_dimension_numbers<[1], [0], [0], [1], [0, 0, 1, 1], [], []>} : vector<4x4xf32>, vector<4x224xf32>, vector<4x224xf32> -> vector<4x224xf32>
    %62 = arith.addf %56, %61 : vector<4x224xf32>
    %63 = vector.extract_strided_slice %58 {offsets = [0, 4], sizes = [4, 4], strides = [1, 1]} : vector<4x8xf32> to vector<4x4xf32>
    %64 = vector.extract_strided_slice %27 {offsets = [0, 16], sizes = [4, 224], strides = [1, 1]} : vector<4x272xf32> to vector<4x224xf32>
    %cst_41 = arith.constant dense<0.000000e+00> : vector<4x224xf32>
    %65 = tpu.matmul %63, %64, %cst_41 {dimension_numbers = #tpu.dot_dimension_numbers<[1], [0], [0], [1], [0, 0, 1, 1], [], []>} : vector<4x4xf32>, vector<4x224xf32>, vector<4x224xf32> -> vector<4x224xf32>
    %66 = arith.addf %62, %65 : vector<4x224xf32>
    %c4 = arith.constant 4 : index
    %c0_42 = arith.constant 0 : index
    %c0_43 = arith.constant 0 : index
    %67 = vector.load %arg6[%c4, %c0_42, %c0_43] : memref<9x4x8xf32, #tpu.memory_space<vmem>>, vector<1x4x8xf32>
    %68 = vector.shape_cast %67 : vector<1x4x8xf32> to vector<4x8xf32>
    %69 = vector.extract_strided_slice %68 {offsets = [0, 0], sizes = [4, 4], strides = [1, 1]} : vector<4x8xf32> to vector<4x4xf32>
    %70 = vector.extract_strided_slice %25 {offsets = [0, 17], sizes = [4, 224], strides = [1, 1]} : vector<4x272xf32> to vector<4x224xf32>
    %cst_44 = arith.constant dense<0.000000e+00> : vector<4x224xf32>
    %71 = tpu.matmul %69, %70, %cst_44 {dimension_numbers = #tpu.dot_dimension_numbers<[1], [0], [0], [1], [0, 0, 1, 1], [], []>} : vector<4x4xf32>, vector<4x224xf32>, vector<4x224xf32> -> vector<4x224xf32>
    %72 = arith.addf %66, %71 : vector<4x224xf32>
    %73 = vector.extract_strided_slice %68 {offsets = [0, 4], sizes = [4, 4], strides = [1, 1]} : vector<4x8xf32> to vector<4x4xf32>
    %74 = vector.extract_strided_slice %27 {offsets = [0, 17], sizes = [4, 224], strides = [1, 1]} : vector<4x272xf32> to vector<4x224xf32>
    %cst_45 = arith.constant dense<0.000000e+00> : vector<4x224xf32>
    %75 = tpu.matmul %73, %74, %cst_45 {dimension_numbers = #tpu.dot_dimension_numbers<[1], [0], [0], [1], [0, 0, 1, 1], [], []>} : vector<4x4xf32>, vector<4x224xf32>, vector<4x224xf32> -> vector<4x224xf32>
    %76 = arith.addf %72, %75 : vector<4x224xf32>
    %c5 = arith.constant 5 : index
    %c0_46 = arith.constant 0 : index
    %c0_47 = arith.constant 0 : index
    %77 = vector.load %arg6[%c5, %c0_46, %c0_47] : memref<9x4x8xf32, #tpu.memory_space<vmem>>, vector<1x4x8xf32>
    %78 = vector.shape_cast %77 : vector<1x4x8xf32> to vector<4x8xf32>
    %79 = vector.extract_strided_slice %78 {offsets = [0, 0], sizes = [4, 4], strides = [1, 1]} : vector<4x8xf32> to vector<4x4xf32>
    %80 = vector.extract_strided_slice %25 {offsets = [0, 18], sizes = [4, 224], strides = [1, 1]} : vector<4x272xf32> to vector<4x224xf32>
    %cst_48 = arith.constant dense<0.000000e+00> : vector<4x224xf32>
    %81 = tpu.matmul %79, %80, %cst_48 {dimension_numbers = #tpu.dot_dimension_numbers<[1], [0], [0], [1], [0, 0, 1, 1], [], []>} : vector<4x4xf32>, vector<4x224xf32>, vector<4x224xf32> -> vector<4x224xf32>
    %82 = arith.addf %76, %81 : vector<4x224xf32>
    %83 = vector.extract_strided_slice %78 {offsets = [0, 4], sizes = [4, 4], strides = [1, 1]} : vector<4x8xf32> to vector<4x4xf32>
    %84 = vector.extract_strided_slice %27 {offsets = [0, 18], sizes = [4, 224], strides = [1, 1]} : vector<4x272xf32> to vector<4x224xf32>
    %cst_49 = arith.constant dense<0.000000e+00> : vector<4x224xf32>
    %85 = tpu.matmul %83, %84, %cst_49 {dimension_numbers = #tpu.dot_dimension_numbers<[1], [0], [0], [1], [0, 0, 1, 1], [], []>} : vector<4x4xf32>, vector<4x224xf32>, vector<4x224xf32> -> vector<4x224xf32>
    %86 = arith.addf %82, %85 : vector<4x224xf32>
    %c6 = arith.constant 6 : index
    %c0_50 = arith.constant 0 : index
    %c0_51 = arith.constant 0 : index
    %87 = vector.load %arg6[%c6, %c0_50, %c0_51] : memref<9x4x8xf32, #tpu.memory_space<vmem>>, vector<1x4x8xf32>
    %88 = vector.shape_cast %87 : vector<1x4x8xf32> to vector<4x8xf32>
    %89 = vector.extract_strided_slice %88 {offsets = [0, 0], sizes = [4, 4], strides = [1, 1]} : vector<4x8xf32> to vector<4x4xf32>
    %90 = vector.extract_strided_slice %25 {offsets = [0, 32], sizes = [4, 224], strides = [1, 1]} : vector<4x272xf32> to vector<4x224xf32>
    %cst_52 = arith.constant dense<0.000000e+00> : vector<4x224xf32>
    %91 = tpu.matmul %89, %90, %cst_52 {dimension_numbers = #tpu.dot_dimension_numbers<[1], [0], [0], [1], [0, 0, 1, 1], [], []>} : vector<4x4xf32>, vector<4x224xf32>, vector<4x224xf32> -> vector<4x224xf32>
    %92 = arith.addf %86, %91 : vector<4x224xf32>
    %93 = vector.extract_strided_slice %88 {offsets = [0, 4], sizes = [4, 4], strides = [1, 1]} : vector<4x8xf32> to vector<4x4xf32>
    %94 = vector.extract_strided_slice %27 {offsets = [0, 32], sizes = [4, 224], strides = [1, 1]} : vector<4x272xf32> to vector<4x224xf32>
    %cst_53 = arith.constant dense<0.000000e+00> : vector<4x224xf32>
    %95 = tpu.matmul %93, %94, %cst_53 {dimension_numbers = #tpu.dot_dimension_numbers<[1], [0], [0], [1], [0, 0, 1, 1], [], []>} : vector<4x4xf32>, vector<4x224xf32>, vector<4x224xf32> -> vector<4x224xf32>
    %96 = arith.addf %92, %95 : vector<4x224xf32>
    %c7 = arith.constant 7 : index
    %c0_54 = arith.constant 0 : index
    %c0_55 = arith.constant 0 : index
    %97 = vector.load %arg6[%c7, %c0_54, %c0_55] : memref<9x4x8xf32, #tpu.memory_space<vmem>>, vector<1x4x8xf32>
    %98 = vector.shape_cast %97 : vector<1x4x8xf32> to vector<4x8xf32>
    %99 = vector.extract_strided_slice %98 {offsets = [0, 0], sizes = [4, 4], strides = [1, 1]} : vector<4x8xf32> to vector<4x4xf32>
    %100 = vector.extract_strided_slice %25 {offsets = [0, 33], sizes = [4, 224], strides = [1, 1]} : vector<4x272xf32> to vector<4x224xf32>
    %cst_56 = arith.constant dense<0.000000e+00> : vector<4x224xf32>
    %101 = tpu.matmul %99, %100, %cst_56 {dimension_numbers = #tpu.dot_dimension_numbers<[1], [0], [0], [1], [0, 0, 1, 1], [], []>} : vector<4x4xf32>, vector<4x224xf32>, vector<4x224xf32> -> vector<4x224xf32>
    %102 = arith.addf %96, %101 : vector<4x224xf32>
    %103 = vector.extract_strided_slice %98 {offsets = [0, 4], sizes = [4, 4], strides = [1, 1]} : vector<4x8xf32> to vector<4x4xf32>
    %104 = vector.extract_strided_slice %27 {offsets = [0, 33], sizes = [4, 224], strides = [1, 1]} : vector<4x272xf32> to vector<4x224xf32>
    %cst_57 = arith.constant dense<0.000000e+00> : vector<4x224xf32>
    %105 = tpu.matmul %103, %104, %cst_57 {dimension_numbers = #tpu.dot_dimension_numbers<[1], [0], [0], [1], [0, 0, 1, 1], [], []>} : vector<4x4xf32>, vector<4x224xf32>, vector<4x224xf32> -> vector<4x224xf32>
    %106 = arith.addf %102, %105 : vector<4x224xf32>
    %c8 = arith.constant 8 : index
    %c0_58 = arith.constant 0 : index
    %c0_59 = arith.constant 0 : index
    %107 = vector.load %arg6[%c8, %c0_58, %c0_59] : memref<9x4x8xf32, #tpu.memory_space<vmem>>, vector<1x4x8xf32>
    %108 = vector.shape_cast %107 : vector<1x4x8xf32> to vector<4x8xf32>
    %109 = vector.extract_strided_slice %108 {offsets = [0, 0], sizes = [4, 4], strides = [1, 1]} : vector<4x8xf32> to vector<4x4xf32>
    %110 = vector.extract_strided_slice %25 {offsets = [0, 34], sizes = [4, 224], strides = [1, 1]} : vector<4x272xf32> to vector<4x224xf32>
    %cst_60 = arith.constant dense<0.000000e+00> : vector<4x224xf32>
    %111 = tpu.matmul %109, %110, %cst_60 {dimension_numbers = #tpu.dot_dimension_numbers<[1], [0], [0], [1], [0, 0, 1, 1], [], []>} : vector<4x4xf32>, vector<4x224xf32>, vector<4x224xf32> -> vector<4x224xf32>
    %112 = arith.addf %106, %111 : vector<4x224xf32>
    %113 = vector.extract_strided_slice %108 {offsets = [0, 4], sizes = [4, 4], strides = [1, 1]} : vector<4x8xf32> to vector<4x4xf32>
    %114 = vector.extract_strided_slice %27 {offsets = [0, 34], sizes = [4, 224], strides = [1, 1]} : vector<4x272xf32> to vector<4x224xf32>
    %cst_61 = arith.constant dense<0.000000e+00> : vector<4x224xf32>
    %115 = tpu.matmul %113, %114, %cst_61 {dimension_numbers = #tpu.dot_dimension_numbers<[1], [0], [0], [1], [0, 0, 1, 1], [], []>} : vector<4x4xf32>, vector<4x224xf32>, vector<4x224xf32> -> vector<4x224xf32>
    %116 = arith.addf %112, %115 : vector<4x224xf32>
    %c0_62 = arith.constant 0 : index
    %c0_63 = arith.constant 0 : index
    %117 = vector.load %arg7[%c0_62, %c0_63] : memref<4x1xf32, #tpu.memory_space<vmem>>, vector<4x1xf32>
    %118 = vector.broadcast %117 : vector<4x1xf32> to vector<4x224xf32>
    %119 = arith.addf %116, %118 : vector<4x224xf32>
    %cst_64 = arith.constant 0.000000e+00 : f32
    %120 = vector.broadcast %cst_64 : f32 to vector<4x224xf32>
    %121 = arith.maximumf %119, %120 : vector<4x224xf32>
    %c0_65 = arith.constant 0 : index
    %c0_66 = arith.constant 0 : index
    %c0_67 = arith.constant 0 : index
    %122 = vector.load %arg8[%c0_65, %c0_66, %c0_67] : memref<9x4x4xf32, #tpu.memory_space<vmem>>, vector<1x4x4xf32>
    %123 = vector.shape_cast %122 : vector<1x4x4xf32> to vector<4x4xf32>
    %124 = vector.extract_strided_slice %121 {offsets = [0, 0], sizes = [4, 176], strides = [1, 1]} : vector<4x224xf32> to vector<4x176xf32>
    %cst_68 = arith.constant dense<0.000000e+00> : vector<4x176xf32>
    %125 = tpu.matmul %123, %124, %cst_68 {dimension_numbers = #tpu.dot_dimension_numbers<[1], [0], [0], [1], [0, 0, 1, 1], [], []>} : vector<4x4xf32>, vector<4x176xf32>, vector<4x176xf32> -> vector<4x176xf32>
    %c1_69 = arith.constant 1 : index
    %c0_70 = arith.constant 0 : index
    %c0_71 = arith.constant 0 : index
    %126 = vector.load %arg8[%c1_69, %c0_70, %c0_71] : memref<9x4x4xf32, #tpu.memory_space<vmem>>, vector<1x4x4xf32>
    %127 = vector.shape_cast %126 : vector<1x4x4xf32> to vector<4x4xf32>
    %128 = vector.extract_strided_slice %121 {offsets = [0, 1], sizes = [4, 176], strides = [1, 1]} : vector<4x224xf32> to vector<4x176xf32>
    %cst_72 = arith.constant dense<0.000000e+00> : vector<4x176xf32>
    %129 = tpu.matmul %127, %128, %cst_72 {dimension_numbers = #tpu.dot_dimension_numbers<[1], [0], [0], [1], [0, 0, 1, 1], [], []>} : vector<4x4xf32>, vector<4x176xf32>, vector<4x176xf32> -> vector<4x176xf32>
    %130 = arith.addf %125, %129 : vector<4x176xf32>
    %c2_73 = arith.constant 2 : index
    %c0_74 = arith.constant 0 : index
    %c0_75 = arith.constant 0 : index
    %131 = vector.load %arg8[%c2_73, %c0_74, %c0_75] : memref<9x4x4xf32, #tpu.memory_space<vmem>>, vector<1x4x4xf32>
    %132 = vector.shape_cast %131 : vector<1x4x4xf32> to vector<4x4xf32>
    %133 = vector.extract_strided_slice %121 {offsets = [0, 2], sizes = [4, 176], strides = [1, 1]} : vector<4x224xf32> to vector<4x176xf32>
    %cst_76 = arith.constant dense<0.000000e+00> : vector<4x176xf32>
    %134 = tpu.matmul %132, %133, %cst_76 {dimension_numbers = #tpu.dot_dimension_numbers<[1], [0], [0], [1], [0, 0, 1, 1], [], []>} : vector<4x4xf32>, vector<4x176xf32>, vector<4x176xf32> -> vector<4x176xf32>
    %135 = arith.addf %130, %134 : vector<4x176xf32>
    %c3_77 = arith.constant 3 : index
    %c0_78 = arith.constant 0 : index
    %c0_79 = arith.constant 0 : index
    %136 = vector.load %arg8[%c3_77, %c0_78, %c0_79] : memref<9x4x4xf32, #tpu.memory_space<vmem>>, vector<1x4x4xf32>
    %137 = vector.shape_cast %136 : vector<1x4x4xf32> to vector<4x4xf32>
    %138 = vector.extract_strided_slice %121 {offsets = [0, 16], sizes = [4, 176], strides = [1, 1]} : vector<4x224xf32> to vector<4x176xf32>
    %cst_80 = arith.constant dense<0.000000e+00> : vector<4x176xf32>
    %139 = tpu.matmul %137, %138, %cst_80 {dimension_numbers = #tpu.dot_dimension_numbers<[1], [0], [0], [1], [0, 0, 1, 1], [], []>} : vector<4x4xf32>, vector<4x176xf32>, vector<4x176xf32> -> vector<4x176xf32>
    %140 = arith.addf %135, %139 : vector<4x176xf32>
    %c4_81 = arith.constant 4 : index
    %c0_82 = arith.constant 0 : index
    %c0_83 = arith.constant 0 : index
    %141 = vector.load %arg8[%c4_81, %c0_82, %c0_83] : memref<9x4x4xf32, #tpu.memory_space<vmem>>, vector<1x4x4xf32>
    %142 = vector.shape_cast %141 : vector<1x4x4xf32> to vector<4x4xf32>
    %143 = vector.extract_strided_slice %121 {offsets = [0, 17], sizes = [4, 176], strides = [1, 1]} : vector<4x224xf32> to vector<4x176xf32>
    %cst_84 = arith.constant dense<0.000000e+00> : vector<4x176xf32>
    %144 = tpu.matmul %142, %143, %cst_84 {dimension_numbers = #tpu.dot_dimension_numbers<[1], [0], [0], [1], [0, 0, 1, 1], [], []>} : vector<4x4xf32>, vector<4x176xf32>, vector<4x176xf32> -> vector<4x176xf32>
    %145 = arith.addf %140, %144 : vector<4x176xf32>
    %c5_85 = arith.constant 5 : index
    %c0_86 = arith.constant 0 : index
    %c0_87 = arith.constant 0 : index
    %146 = vector.load %arg8[%c5_85, %c0_86, %c0_87] : memref<9x4x4xf32, #tpu.memory_space<vmem>>, vector<1x4x4xf32>
    %147 = vector.shape_cast %146 : vector<1x4x4xf32> to vector<4x4xf32>
    %148 = vector.extract_strided_slice %121 {offsets = [0, 18], sizes = [4, 176], strides = [1, 1]} : vector<4x224xf32> to vector<4x176xf32>
    %cst_88 = arith.constant dense<0.000000e+00> : vector<4x176xf32>
    %149 = tpu.matmul %147, %148, %cst_88 {dimension_numbers = #tpu.dot_dimension_numbers<[1], [0], [0], [1], [0, 0, 1, 1], [], []>} : vector<4x4xf32>, vector<4x176xf32>, vector<4x176xf32> -> vector<4x176xf32>
    %150 = arith.addf %145, %149 : vector<4x176xf32>
    %c6_89 = arith.constant 6 : index
    %c0_90 = arith.constant 0 : index
    %c0_91 = arith.constant 0 : index
    %151 = vector.load %arg8[%c6_89, %c0_90, %c0_91] : memref<9x4x4xf32, #tpu.memory_space<vmem>>, vector<1x4x4xf32>
    %152 = vector.shape_cast %151 : vector<1x4x4xf32> to vector<4x4xf32>
    %153 = vector.extract_strided_slice %121 {offsets = [0, 32], sizes = [4, 176], strides = [1, 1]} : vector<4x224xf32> to vector<4x176xf32>
    %cst_92 = arith.constant dense<0.000000e+00> : vector<4x176xf32>
    %154 = tpu.matmul %152, %153, %cst_92 {dimension_numbers = #tpu.dot_dimension_numbers<[1], [0], [0], [1], [0, 0, 1, 1], [], []>} : vector<4x4xf32>, vector<4x176xf32>, vector<4x176xf32> -> vector<4x176xf32>
    %155 = arith.addf %150, %154 : vector<4x176xf32>
    %c7_93 = arith.constant 7 : index
    %c0_94 = arith.constant 0 : index
    %c0_95 = arith.constant 0 : index
    %156 = vector.load %arg8[%c7_93, %c0_94, %c0_95] : memref<9x4x4xf32, #tpu.memory_space<vmem>>, vector<1x4x4xf32>
    %157 = vector.shape_cast %156 : vector<1x4x4xf32> to vector<4x4xf32>
    %158 = vector.extract_strided_slice %121 {offsets = [0, 33], sizes = [4, 176], strides = [1, 1]} : vector<4x224xf32> to vector<4x176xf32>
    %cst_96 = arith.constant dense<0.000000e+00> : vector<4x176xf32>
    %159 = tpu.matmul %157, %158, %cst_96 {dimension_numbers = #tpu.dot_dimension_numbers<[1], [0], [0], [1], [0, 0, 1, 1], [], []>} : vector<4x4xf32>, vector<4x176xf32>, vector<4x176xf32> -> vector<4x176xf32>
    %160 = arith.addf %155, %159 : vector<4x176xf32>
    %c8_97 = arith.constant 8 : index
    %c0_98 = arith.constant 0 : index
    %c0_99 = arith.constant 0 : index
    %161 = vector.load %arg8[%c8_97, %c0_98, %c0_99] : memref<9x4x4xf32, #tpu.memory_space<vmem>>, vector<1x4x4xf32>
    %162 = vector.shape_cast %161 : vector<1x4x4xf32> to vector<4x4xf32>
    %163 = vector.extract_strided_slice %121 {offsets = [0, 34], sizes = [4, 176], strides = [1, 1]} : vector<4x224xf32> to vector<4x176xf32>
    %cst_100 = arith.constant dense<0.000000e+00> : vector<4x176xf32>
    %164 = tpu.matmul %162, %163, %cst_100 {dimension_numbers = #tpu.dot_dimension_numbers<[1], [0], [0], [1], [0, 0, 1, 1], [], []>} : vector<4x4xf32>, vector<4x176xf32>, vector<4x176xf32> -> vector<4x176xf32>
    %165 = arith.addf %160, %164 : vector<4x176xf32>
    %c0_101 = arith.constant 0 : index
    %c0_102 = arith.constant 0 : index
    %166 = vector.load %arg9[%c0_101, %c0_102] : memref<4x1xf32, #tpu.memory_space<vmem>>, vector<4x1xf32>
    %167 = vector.broadcast %166 : vector<4x1xf32> to vector<4x176xf32>
    %168 = arith.addf %165, %167 : vector<4x176xf32>
    %cst_103 = arith.constant 0.000000e+00 : f32
    %169 = vector.broadcast %cst_103 : f32 to vector<4x176xf32>
    %170 = arith.maximumf %168, %169 : vector<4x176xf32>
    %c0_104 = arith.constant 0 : index
    %c0_105 = arith.constant 0 : index
    %c0_106 = arith.constant 0 : index
    %171 = vector.load %arg10[%c0_104, %c0_105, %c0_106] : memref<1x4x176xf32, #tpu.memory_space<vmem>>, vector<1x4x176xf32>
    %172 = vector.shape_cast %171 : vector<1x4x176xf32> to vector<4x176xf32>
    %173 = vector.shape_cast %170 : vector<4x176xf32> to vector<1x4x176xf32>
    tpu.vector_store %arg10[%c0_104, %c0_105, %c0_106], %173 {strides = array<i32>} : memref<1x4x176xf32, #tpu.memory_space<vmem>>, vector<1x4x176xf32>,
    return
  }
  func.func @transform_0(%arg0: i32) -> (i32, i32, i32) {
    %c0_i32 = arith.constant 0 : i32
    %c0_i32_0 = arith.constant 0 : i32
    %c0_i32_1 = arith.constant 0 : i32
    return %arg0, %c0_i32, %c0_i32_0 : i32, i32, i32
  }
  func.func @transform_1(%arg0: i32) -> (i32, i32, i32) {
    %c0_i32 = arith.constant 0 : i32
    %c0_i32_0 = arith.constant 0 : i32
    %c0_i32_1 = arith.constant 0 : i32
    return %arg0, %c0_i32, %c0_i32_0 : i32, i32, i32
  }
  func.func @transform_2(%arg0: i32) -> (i32, i32) {
    %c0_i32 = arith.constant 0 : i32
    %c0_i32_0 = arith.constant 0 : i32
    %c0_i32_1 = arith.constant 0 : i32
    return %c0_i32, %c0_i32_0 : i32, i32
  }
  func.func @transform_3(%arg0: i32) -> (i32, i32, i32) {
    %c0_i32 = arith.constant 0 : i32
    %c0_i32_0 = arith.constant 0 : i32
    %c0_i32_1 = arith.constant 0 : i32
    %c0_i32_2 = arith.constant 0 : i32
    return %c0_i32, %c0_i32_0, %c0_i32_1 : i32, i32, i32
  }
  func.func @transform_4(%arg0: i32) -> (i32, i32) {
    %c0_i32 = arith.constant 0 : i32
    %c0_i32_0 = arith.constant 0 : i32
    %c0_i32_1 = arith.constant 0 : i32
    return %c0_i32, %c0_i32_0 : i32, i32
  }
  func.func @transform_5(%arg0: i32) -> (i32, i32, i32) {
    %c0_i32 = arith.constant 0 : i32
    %c0_i32_0 = arith.constant 0 : i32
    %c0_i32_1 = arith.constant 0 : i32
    %c0_i32_2 = arith.constant 0 : i32
    return %c0_i32, %c0_i32_0, %c0_i32_1 : i32, i32, i32
  }
  func.func @transform_6(%arg0: i32) -> (i32, i32) {
    %c0_i32 = arith.constant 0 : i32
    %c0_i32_0 = arith.constant 0 : i32
    %c0_i32_1 = arith.constant 0 : i32
    return %c0_i32, %c0_i32_0 : i32, i32
  }
  func.func @transform_7(%arg0: i32) -> (i32, i32, i32) {
    %c0_i32 = arith.constant 0 : i32
    %c0_i32_0 = arith.constant 0 : i32
    %c0_i32_1 = arith.constant 0 : i32
    %c0_i32_2 = arith.constant 0 : i32
    return %c0_i32, %c0_i32_0, %c0_i32_1 : i32, i32, i32
  }
  func.func @transform_8(%arg0: i32) -> (i32, i32) {
    %c0_i32 = arith.constant 0 : i32
    %c0_i32_0 = arith.constant 0 : i32
    %c0_i32_1 = arith.constant 0 : i32
    return %c0_i32, %c0_i32_0 : i32, i32
  }
  func.func @transform_9(%arg0: i32) -> (i32, i32, i32) {
    %c0_i32 = arith.constant 0 : i32
    %c0_i32_0 = arith.constant 0 : i32
    %c0_i32_1 = arith.constant 0 : i32
    return %arg0, %c0_i32, %c0_i32_0 : i32, i32, i32
  }
}

</mosaic_0001>

<llo_original>
// kernel: tpu_custom_call.1
$region0: #{tpu_custom_call.1}
  #allocation0 [shape = 'u32[]', space=smem, size = 0x4, offset = 0x4, fixed_abs, tag = 'smem constant byte address 0x4 - core index']
  #allocation1 [shape = 'u32[144,128]{1,0:T(1,128)}', space=vmem, size = 0x12000, scoped, tag = 'internal scratch']
  %s0 = inlined_call_operand.vmem [shape: f32[2,8,64], index: 0, kind: input, shape index: {}]
  %s1 = inlined_call_operand.vmem [shape: f32[2,4,272], index: 1, kind: input, shape index: {}]
  %s2 = inlined_call_operand.hbm [shape: f32[64,304], index: 2, kind: input, shape index: {}]
  %s3 = inlined_call_operand.vmem [shape: f32[4,4,8], index: 3, kind: input, shape index: {}]
  %s4 = inlined_call_operand.vmem [shape: f32[4,1], index: 4, kind: input, shape index: {}]
  %s5 = inlined_call_operand.vmem [shape: f32[9,4,8], index: 5, kind: input, shape index: {}]
  %s6 = inlined_call_operand.vmem [shape: f32[4,1], index: 6, kind: input, shape index: {}]
  %s7 = inlined_call_operand.vmem [shape: f32[9,4,4], index: 7, kind: input, shape index: {}]
  %s8 = inlined_call_operand.vmem [shape: f32[4,1], index: 8, kind: input, shape index: {}]
  %s9 = inlined_call_operand.hbm [shape: f32[2,4,176], index: 9, kind: output, shape index: {}]
  %s10 = sld [smem:[#allocation0]]
  $region73: #{tpu_custom_call.1} parent=0
    _
  %s12 = ssub.s32 1, %s10
  %s13 = scalar_select 0, %s12, %s10
  $region1: #{tpu_custom_call.1} parent=0
    #allocation2 [shape = 'u8[98304]{0}', space=vmem, size = 0x18000, scoped, tag = 'input window, operand 2, single buffered']
    #allocation3 [shape = 's32[2]{0}', space=sflag, size = 0x8, scoped, tag = 'scoped memory for tpu_custom_call.1']
    #allocation4 [shape = 's32[2]{0}', space=sflag, size = 0x8, scoped, tag = 'scoped memory for tpu_custom_call.1']
    #allocation5 [shape = 'u8[8192]{0}', space=vmem, size = 0x2000, scoped, tag = 'output window, operand 0']
    %14 = vsyncpa [#allocation3], 0
    %15 = vsyncpa [#allocation4], 0
    %s16 = scalar_lea.sflag [#allocation4], 1
    %17 = vsyncpa %s16, 0
    loop: start=0, step=1, limit=4
    $region2: #{tpu_custom_call.1} parent=1 // loop_pre_header
      _
    $region3: #{tpu_custom_call.1} parent=1 // loop_header
      %s19 = sphi 0, %s23
      %p20 = scmp.ge.s32.totalorder %s19, 4
      %s29 = sphi 0, %s31
      %s32 = sphi 0, %s29
      %s33 = sphi 0, %s32
      %s49 = sphi 0, %s33
      %s55 = sphi 0, %s57
      %s58 = sphi 0, %s55
      %s59 = sphi 0, %s58
      %s75 = sphi 0, %s59
      %s79 = sphi 0, %s79
      %s81 = sphi 0, %s79
      %s82 = sphi 0, %s81
      %s96 = sphi 0, %s82
      %s100 = sphi 0, %s100
      %s102 = sphi 0, %s100
      %s103 = sphi 0, %s102
      %s117 = sphi 0, %s103
      %s121 = sphi 0, %s121
      %s123 = sphi 0, %s121
      %s124 = sphi 0, %s123
      %s138 = sphi 0, %s124
      %s142 = sphi 0, %s142
      %s144 = sphi 0, %s142
      %s145 = sphi 0, %s144
      %s159 = sphi 0, %s145
      %s163 = sphi 0, %s163
      %s165 = sphi 0, %s163
      %s166 = sphi 0, %s165
      %s180 = sphi 0, %s166
      %s184 = sphi 0, %s184
      %s186 = sphi 0, %s184
      %s187 = sphi 0, %s186
      %s201 = sphi 0, %s187
      %s205 = sphi 0, %s205
      %s207 = sphi 0, %s205
      %s208 = sphi 0, %s207
      %s222 = sphi 0, %s208
      %s228 = sphi 0, %s230
      %s231 = sphi 0, %s228
      %s232 = sphi 0, %s231
      %s248 = sphi 0, %s232
    $region4: #{tpu_custom_call.1} parent=1 // loop_header_branch
      %22 = sbr.rel (%p20) target = $region8
    $region5: #{tpu_custom_call.1} parent=1 // loop_body
      %s24 = ssub.s32 %s19, 1
      %s25 = ssub.s32 %s19, 2
      %s26 = sadd.s32 %s19, 1
      %s27 = ssub.s32 %s19, %s26
      %p28 = scmp.eq.s32.totalorder %s27, 0
      %s30 = sadd.s32 %s29, 1
      %s31 = scalar_select %p28, %s29, %s30
      %p34 = pneg %p28
      %p35 = scmp.eq.s32.totalorder %s19, 1
      %p36 = por %p34, %p35
      %p37 = scmp.ne.s32.totalorder %s29, %s32
      %p38 = scmp.eq.s32.totalorder %s19, 0
      %p39 = por %p37, %p38
      %p40 = scmp.ne.s32.totalorder %s29, %s32
      %p41 = scmp.eq.s32.totalorder %s24, 1
      %p42 = por %p40, %p41
      %p43 = scmp.ne.s32.totalorder %s32, %s33
      %p44 = scmp.eq.s32.totalorder %s24, 0
      %p45 = por %p43, %p44
      %p46 = scmp.ne.s32.totalorder %s32, %s33
      %p47 = scmp.eq.s32.totalorder %s25, 1
      %p48 = por %p46, %p47
      %p50 = scmp.ne.s32.totalorder %s33, %s49
      %p51 = scmp.eq.s32.totalorder %s25, 0
      %p52 = por %p50, %p51
      %s53 = ssub.s32 %s19, %s26
      %p54 = scmp.eq.s32.totalorder %s53, 0
      %s56 = sadd.s32 %s55, 1
      %s57 = scalar_select %p54, %s55, %s56
      %p60 = pneg %p54
      %p61 = scmp.eq.s32.totalorder %s19, 1
      %p62 = por %p60, %p61
      %p63 = scmp.ne.s32.totalorder %s55, %s58
      %p64 = scmp.eq.s32.totalorder %s19, 0
      %p65 = por %p63, %p64
      %p66 = scmp.ne.s32.totalorder %s55, %s58
      %p67 = scmp.eq.s32.totalorder %s24, 1
      %p68 = por %p66, %p67
      %p69 = scmp.ne.s32.totalorder %s58, %s59
      %p70 = scmp.eq.s32.totalorder %s24, 0
      %p71 = por %p69, %p70
      %p72 = scmp.ne.s32.totalorder %s58, %s59
      %p73 = scmp.eq.s32.totalorder %s25, 1
      %p74 = por %p72, %p73
      %p76 = scmp.ne.s32.totalorder %s59, %s75
      %p77 = scmp.eq.s32.totalorder %s25, 0
      %p78 = por %p76, %p77
      %s80 = sadd.s32 %s79, 1
      %p83 = scmp.eq.s32.totalorder %s19, 1
      %p84 = scmp.ne.s32.totalorder %s79, %s81
      %p85 = scmp.eq.s32.totalorder %s19, 0
      %p86 = por %p84, %p85
      %p87 = scmp.ne.s32.totalorder %s79, %s81
      %p88 = scmp.eq.s32.totalorder %s24, 1
      %p89 = por %p87, %p88
      %p90 = scmp.ne.s32.totalorder %s81, %s82
      %p91 = scmp.eq.s32.totalorder %s24, 0
      %p92 = por %p90, %p91
      %p93 = scmp.ne.s32.totalorder %s81, %s82
      %p94 = scmp.eq.s32.totalorder %s25, 1
      %p95 = por %p93, %p94
      %p97 = scmp.ne.s32.totalorder %s82, %s96
      %p98 = scmp.eq.s32.totalorder %s25, 0
      %p99 = por %p97, %p98
      %s101 = sadd.s32 %s100, 1
      %p104 = scmp.eq.s32.totalorder %s19, 1
      %p105 = scmp.ne.s32.totalorder %s100, %s102
      %p106 = scmp.eq.s32.totalorder %s19, 0
      %p107 = por %p105, %p106
      %p108 = scmp.ne.s32.totalorder %s100, %s102
      %p109 = scmp.eq.s32.totalorder %s24, 1
      %p110 = por %p108, %p109
      %p111 = scmp.ne.s32.totalorder %s102, %s103
      %p112 = scmp.eq.s32.totalorder %s24, 0
      %p113 = por %p111, %p112
      %p114 = scmp.ne.s32.totalorder %s102, %s103
      %p115 = scmp.eq.s32.totalorder %s25, 1
      %p116 = por %p114, %p115
      %p118 = scmp.ne.s32.totalorder %s103, %s117
      %p119 = scmp.eq.s32.totalorder %s25, 0
      %p120 = por %p118, %p119
      %s122 = sadd.s32 %s121, 1
      %p125 = scmp.eq.s32.totalorder %s19, 1
      %p126 = scmp.ne.s32.totalorder %s121, %s123
      %p127 = scmp.eq.s32.totalorder %s19, 0
      %p128 = por %p126, %p127
      %p129 = scmp.ne.s32.totalorder %s121, %s123
      %p130 = scmp.eq.s32.totalorder %s24, 1
      %p131 = por %p129, %p130
      %p132 = scmp.ne.s32.totalorder %s123, %s124
      %p133 = scmp.eq.s32.totalorder %s24, 0
      %p134 = por %p132, %p133
      %p135 = scmp.ne.s32.totalorder %s123, %s124
      %p136 = scmp.eq.s32.totalorder %s25, 1
      %p137 = por %p135, %p136
      %p139 = scmp.ne.s32.totalorder %s124, %s138
      %p140 = scmp.eq.s32.totalorder %s25, 0
      %p141 = por %p139, %p140
      %s143 = sadd.s32 %s142, 1
      %p146 = scmp.eq.s32.totalorder %s19, 1
      %p147 = scmp.ne.s32.totalorder %s142, %s144
      %p148 = scmp.eq.s32.totalorder %s19, 0
      %p149 = por %p147, %p148
      %p150 = scmp.ne.s32.totalorder %s142, %s144
      %p151 = scmp.eq.s32.totalorder %s24, 1
      %p152 = por %p150, %p151
      %p153 = scmp.ne.s32.totalorder %s144, %s145
      %p154 = scmp.eq.s32.totalorder %s24, 0
      %p155 = por %p153, %p154
      %p156 = scmp.ne.s32.totalorder %s144, %s145
      %p157 = scmp.eq.s32.totalorder %s25, 1
      %p158 = por %p156, %p157
      %p160 = scmp.ne.s32.totalorder %s145, %s159
      %p161 = scmp.eq.s32.totalorder %s25, 0
      %p162 = por %p160, %p161
      %s164 = sadd.s32 %s163, 1
      %p167 = scmp.eq.s32.totalorder %s19, 1
      %p168 = scmp.ne.s32.totalorder %s163, %s165
      %p169 = scmp.eq.s32.totalorder %s19, 0
      %p170 = por %p168, %p169
      %p171 = scmp.ne.s32.totalorder %s163, %s165
      %p172 = scmp.eq.s32.totalorder %s24, 1
      %p173 = por %p171, %p172
      %p174 = scmp.ne.s32.totalorder %s165, %s166
      %p175 = scmp.eq.s32.totalorder %s24, 0
      %p176 = por %p174, %p175
      %p177 = scmp.ne.s32.totalorder %s165, %s166
      %p178 = scmp.eq.s32.totalorder %s25, 1
      %p179 = por %p177, %p178
      %p181 = scmp.ne.s32.totalorder %s166, %s180
      %p182 = scmp.eq.s32.totalorder %s25, 0
      %p183 = por %p181, %p182
      %s185 = sadd.s32 %s184, 1
      %p188 = scmp.eq.s32.totalorder %s19, 1
      %p189 = scmp.ne.s32.totalorder %s184, %s186
      %p190 = scmp.eq.s32.totalorder %s19, 0
      %p191 = por %p189, %p190
      %p192 = scmp.ne.s32.totalorder %s184, %s186
      %p193 = scmp.eq.s32.totalorder %s24, 1
      %p194 = por %p192, %p193
      %p195 = scmp.ne.s32.totalorder %s186, %s187
      %p196 = scmp.eq.s32.totalorder %s24, 0
      %p197 = por %p195, %p196
      %p198 = scmp.ne.s32.totalorder %s186, %s187
      %p199 = scmp.eq.s32.totalorder %s25, 1
      %p200 = por %p198, %p199
      %p202 = scmp.ne.s32.totalorder %s187, %s201
      %p203 = scmp.eq.s32.totalorder %s25, 0
      %p204 = por %p202, %p203
      %s206 = sadd.s32 %s205, 1
      %p209 = scmp.eq.s32.totalorder %s19, 1
      %p210 = scmp.ne.s32.totalorder %s205, %s207
      %p211 = scmp.eq.s32.totalorder %s19, 0
      %p212 = por %p210, %p211
      %p213 = scmp.ne.s32.totalorder %s205, %s207
      %p214 = scmp.eq.s32.totalorder %s24, 1
      %p215 = por %p213, %p214
      %p216 = scmp.ne.s32.totalorder %s207, %s208
      %p217 = scmp.eq.s32.totalorder %s24, 0
      %p218 = por %p216, %p217
      %p219 = scmp.ne.s32.totalorder %s207, %s208
      %p220 = scmp.eq.s32.totalorder %s25, 1
      %p221 = por %p219, %p220
      %p223 = scmp.ne.s32.totalorder %s208, %s222
      %p224 = scmp.eq.s32.totalorder %s25, 0
      %p225 = por %p223, %p224
      %s226 = ssub.s32 %s19, %s26
      %p227 = scmp.eq.s32.totalorder %s226, 0
      %s229 = sadd.s32 %s228, 1
      %s230 = scalar_select %p227, %s228, %s229
      %p233 = pneg %p227
      %p234 = scmp.eq.s32.totalorder %s19, 1
      %p235 = por %p233, %p234
      %p236 = scmp.ne.s32.totalorder %s228, %s231
      %p237 = scmp.eq.s32.totalorder %s19, 0
      %p238 = por %p236, %p237
      %p239 = scmp.ne.s32.totalorder %s228, %s231
      %p240 = scmp.eq.s32.totalorder %s24, 1
      %p241 = por %p239, %p240
      %p242 = scmp.ne.s32.totalorder %s231, %s232
      %p243 = scmp.eq.s32.totalorder %s24, 0
      %p244 = por %p242, %p243
      %p245 = scmp.ne.s32.totalorder %s231, %s232
      %p246 = scmp.eq.s32.totalorder %s25, 1
      %p247 = por %p245, %p246
      %p249 = scmp.ne.s32.totalorder %s232, %s248
      %p250 = scmp.eq.s32.totalorder %s25, 0
      %p251 = por %p249, %p250
      %p252 = scmp.le.s32.totalorder 1, %s19
      %p253 = scmp.lt.s32.totalorder %s19, 3
      %p254 = pnand %p252, %p253
      %p255 = pneg %p254
      // Predicated region
      $region9: #{tpu_custom_call.1} parent=5 // pred_check
        _
      $region10: #{tpu_custom_call.1} parent=5 // pred_check_branch
        %257 = sbr.rel (%p254) target = $region12
      $region11: #{tpu_custom_call.1} parent=5 // pred_region
        %s258 = ssub.s32 %s19, 1
        // Predicated region
        $region13: #{tpu_custom_call.1} parent=11 // pred_check
          %p259 = pneg %p92
        $region14: #{tpu_custom_call.1} parent=11 // pred_check_branch
          %261 = sbr.rel (%p259) target = $region16
        $region15: #{tpu_custom_call.1} parent=11 // pred_region
          %s263 = ssub.s32 3072, 3072
          %264 = vsyncadd [#allocation3], %s263
          %s265 = sshll.u32 [#allocation2], 4
          %s266 = int_to_ptr.vmem [resolvable:$true] %s265
          %271 = dma.hbm_to_vmem [thread:$0]  %s2, 3072, %s266, [#allocation3], 384, 384, 24
        $region16: #{tpu_custom_call.1} parent=11 // pred_fallthru
          _
        // Predicated region
        $region17: #{tpu_custom_call.1} parent=11 // pred_check
          %p272 = pneg %p113
        $region18: #{tpu_custom_call.1} parent=11 // pred_check_branch
          %274 = sbr.rel (%p272) target = $region20
        $region19: #{tpu_custom_call.1} parent=11 // pred_region
          _
        $region20: #{tpu_custom_call.1} parent=11 // pred_fallthru
          _
        // Predicated region
        $region21: #{tpu_custom_call.1} parent=11 // pred_check
          %p275 = pneg %p134
        $region22: #{tpu_custom_call.1} parent=11 // pred_check_branch
          %277 = sbr.rel (%p275) target = $region24
        $region23: #{tpu_custom_call.1} parent=11 // pred_region
          _
        $region24: #{tpu_custom_call.1} parent=11 // pred_fallthru
          _
        // Predicated region
        $region25: #{tpu_custom_call.1} parent=11 // pred_check
          %p278 = pneg %p155
        $region26: #{tpu_custom_call.1} parent=11 // pred_check_branch
          %280 = sbr.rel (%p278) target = $region28
        $region27: #{tpu_custom_call.1} parent=11 // pred_region
          _
        $region28: #{tpu_custom_call.1} parent=11 // pred_fallthru
          _
        // Predicated region
        $region29: #{tpu_custom_call.1} parent=11 // pred_check
          %p281 = pneg %p176
        $region30: #{tpu_custom_call.1} parent=11 // pred_check_branch
          %283 = sbr.rel (%p281) target = $region32
        $region31: #{tpu_custom_call.1} parent=11 // pred_region
          _
        $region32: #{tpu_custom_call.1} parent=11 // pred_fallthru
          _
        // Predicated region
        $region33: #{tpu_custom_call.1} parent=11 // pred_check
          %p284 = pneg %p197
        $region34: #{tpu_custom_call.1} parent=11 // pred_check_branch
          %286 = sbr.rel (%p284) target = $region36
        $region35: #{tpu_custom_call.1} parent=11 // pred_region
          _
        $region36: #{tpu_custom_call.1} parent=11 // pred_fallthru
          _
        // Predicated region
        $region37: #{tpu_custom_call.1} parent=11 // pred_check
          %p287 = pneg %p218
        $region38: #{tpu_custom_call.1} parent=11 // pred_check_branch
          %289 = sbr.rel (%p287) target = $region40
        $region39: #{tpu_custom_call.1} parent=11 // pred_region
          _
        $region40: #{tpu_custom_call.1} parent=11 // pred_fallthru
          _
      $region12: #{tpu_custom_call.1} parent=5 // pred_fallthru
        _
      %p290 = scmp.lt.s32.totalorder %s19, 2
      // Predicated region
      $region41: #{tpu_custom_call.1} parent=5 // pred_check
        %p291 = pneg %p290
      $region42: #{tpu_custom_call.1} parent=5 // pred_check_branch
        %293 = sbr.rel (%p291) target = $region44
      $region43: #{tpu_custom_call.1} parent=5 // pred_region
        // Predicated region
        $region45: #{tpu_custom_call.1} parent=43 // pred_check
          %p294 = pneg %p39
        $region46: #{tpu_custom_call.1} parent=43 // pred_check_branch
          %296 = sbr.rel (%p294) target = $region48
        $region47: #{tpu_custom_call.1} parent=43 // pred_region
          %p297 = scmp.lt.s32.totalorder %s19, 1
          %s298 = scalar_select %p297, %s19, 1
          %s299 = smul.addr %s298, 8
          %s300 = scalar_lea.vmem %s0, %s299
        $region48: #{tpu_custom_call.1} parent=43 // pred_fallthru
          _
        // Predicated region
        $region49: #{tpu_custom_call.1} parent=43 // pred_check
          %p301 = pneg %p65
        $region50: #{tpu_custom_call.1} parent=43 // pred_check_branch
          %303 = sbr.rel (%p301) target = $region52
        $region51: #{tpu_custom_call.1} parent=43 // pred_region
          %p304 = scmp.lt.s32.totalorder %s19, 1
          %s305 = scalar_select %p304, %s19, 1
          %s306 = smul.addr %s305, 3
          %s307 = smul.addr %s306, 4
          %s308 = scalar_lea.vmem %s1, %s307
        $region52: #{tpu_custom_call.1} parent=43 // pred_fallthru
          _
      $region44: #{tpu_custom_call.1} parent=5 // pred_fallthru
        _
      %p309 = scmp.le.s32.totalorder 1, %s19
      %p310 = scmp.lt.s32.totalorder %s19, 3
      %p311 = pnand %p309, %p310
      %p312 = pneg %p311
      // Predicated region
      $region53: #{tpu_custom_call.1} parent=5 // pred_check
        _
      $region54: #{tpu_custom_call.1} parent=5 // pred_check_branch
        %314 = sbr.rel (%p311) target = $region56
      $region55: #{tpu_custom_call.1} parent=5 // pred_region
        %s315 = ssub.s32 %s19, 1
        // Predicated region
        $region57: #{tpu_custom_call.1} parent=55 // pred_check
          %p316 = pneg %p92
        $region58: #{tpu_custom_call.1} parent=55 // pred_check_branch
          %318 = sbr.rel (%p316) target = $region60
        $region59: #{tpu_custom_call.1} parent=55 // pred_region
          %319 = dma.done [#allocation3], 3072
        $region60: #{tpu_custom_call.1} parent=55 // pred_fallthru
          _
        %p320 = scmp.lt.s32.totalorder %s24, 1
        %s321 = scalar_select %p320, %s24, 1
        %s322 = smul.addr %s321, 8
        %s323 = scalar_lea.vmem %s0, %s322
        %p324 = pneg %p45
        %p325 = pneg %p42
        %p326 = scmp.lt.s32.totalorder %s24, 1
        %s327 = scalar_select %p326, %s24, 1
        %s328 = smul.addr %s327, 3
        %s329 = smul.addr %s328, 4
        %s330 = scalar_lea.vmem %s1, %s329
        %p331 = pneg %p71
        %p332 = pneg %p68
        %p333 = pneg %p92
        %p334 = pneg %p89
        %p335 = pneg %p113
        %p336 = pneg %p110
        %p337 = pneg %p134
        %p338 = pneg %p131
        %p339 = pneg %p155
        %p340 = pneg %p152
        %p341 = pneg %p176
        %p342 = pneg %p173
        %p343 = pneg %p197
        %p344 = pneg %p194
        %p345 = pneg %p218
        %p346 = pneg %p215
        %p347 = pneg %p244
        %p348 = pneg %p241
        %s349 = sand.u32 %s231, 1
        %s350 = scalar_lea.sflag [#allocation4], %s349
        %s351 = sand.u32 %s231, 1
        %s352 = smul.addr %s351, 8
        %s353 = scalar_lea.vmem [#allocation5], %s352
        %p354 = scmp.lt.s32.totalorder %s24, 1
        %s355 = scalar_select %p354, %s24, 1
        %s356 = smul.addr %s355, 8
        %s357 = scalar_lea.vmem %s0, %s356
        %p358 = scmp.lt.s32.totalorder %s24, 1
        %s359 = scalar_select %p358, %s24, 1
        %s360 = smul.addr %s359, 3
        %s361 = smul.addr %s360, 4
        %s362 = scalar_lea.vmem %s1, %s361
        %v363 = vld [vmem:[%s357] sm:$0xff]
        %v364 = vld [vmem:[#allocation2] sm:$0xff]
        %v365 = vld [vmem:[#allocation2 + $0x8] sm:$0xff]
        %v366 = vld [vmem:[#allocation2 + $0x10] sm:$0xff]
        %v367 = vld [vmem:[#allocation2 + $0x18] sm:$0xff]
        %v368 = vld [vmem:[#allocation2 + $0x20] sm:$0xff]
        %v369 = vld [vmem:[#allocation2 + $0x28] sm:$0xff]
        %v370 = vld [vmem:[#allocation2 + $0x30] sm:$0xff]
        %v371 = vld [vmem:[#allocation2 + $0x38] sm:$0xff]
        %v372 = vld [vmem:[#allocation2 + $0x40] sm:$0xff]
        %v373 = vld [vmem:[#allocation2 + $0x48] sm:$0xff]
        %v374 = vld [vmem:[#allocation2 + $0x50] sm:$0xff]
        %v375 = vld [vmem:[#allocation2 + $0x58] sm:$0xff]
        %v376 = vld [vmem:[#allocation2 + $0x60] sm:$0xff]
        %v377 = vld [vmem:[#allocation2 + $0x68] sm:$0xff]
        %v378 = vld [vmem:[#allocation2 + $0x70] sm:$0xff]
        %v379 = vld [vmem:[#allocation2 + $0x78] sm:$0xff]
        %v380 = vld [vmem:[#allocation2 + $0x80] sm:$0xff]
        %v381 = vld [vmem:[#allocation2 + $0x88] sm:$0xff]
        %v382 = vld [vmem:[#allocation2 + $0x90] sm:$0xff]
        %v383 = vld [vmem:[#allocation2 + $0x98] sm:$0xff]
        %v384 = vld [vmem:[#allocation2 + $0xa0] sm:$0xff]
        %v385 = vld [vmem:[#allocation2 + $0xa8] sm:$0xff]
        %v386 = vld [vmem:[#allocation2 + $0xb0] sm:$0xff]
        %v387 = vld [vmem:[#allocation2 + $0xb8] sm:$0xff]
        %vm388 = vcmask 523264
        %v390 = vsel %vm388, %v363, 0
        %392 = vmatprep.subr.mxu0 0.0
        %393 = vmatpush1.msra.mxu0 0.0
        %394 = vmatprep.subr.mxu0 0.0
        %395 = vmatpush1.msra.mxu0 0.0
        %396 = vmatprep.subr.mxu0 0.0
        %397 = vmatpush1.msra.mxu0 0.0
        %398 = vmatprep.subr.mxu0 0.0
        %399 = vmatpush1.msra.mxu0 0.0
        %400 = vmatprep.subr.mxu0 0.0
        %401 = vmatpush1.msra.mxu0 0.0
        %402 = vmatprep.subr.mxu0 0.0
        %403 = vmatpush1.msra.mxu0 0.0
        %404 = vmatprep.subr.mxu0 0.0
        %405 = vmatpush1.msra.mxu0 0.0
        %406 = vmatprep.subr.mxu0 0.0
        %407 = vmatpush1.msra.mxu0 0.0
        %408 = vmatprep.subr.mxu0 %v386
        %409 = vmatpush1.msra.mxu0 %v385
        %410 = vmatprep.subr.mxu0 %v383
        %411 = vmatpush1.msra.mxu0 %v382
        %412 = vmatprep.subr.mxu0 %v380
        %413 = vmatpush1.msra.mxu0 %v379
        %414 = vmatprep.subr.mxu0 %v377
        %415 = vmatpush1.msra.mxu0 %v376
        %416 = vmatprep.subr.mxu0 %v374
        %417 = vmatpush1.msra.mxu0 %v373
        %418 = vmatprep.subr.mxu0 %v371
        %419 = vmatpush1.msra.mxu0 %v370
        %420 = vmatprep.subr.mxu0 %v368
        %421 = vmatpush1.msra.mxu0 %v367
        %422 = vmatprep.subr.mxu0 %v365
        %423 = vmatpush1.msra.mxu0 %v364
        %424 = vmatprep.subr.mxu0 0.0
        %425 = vmatpush2.msra.mxu0 0.0
        %426 = vmatprep.subr.mxu0 0.0
        %427 = vmatpush2.msra.mxu0 0.0
        %428 = vmatprep.subr.mxu0 0.0
        %429 = vmatpush2.msra.mxu0 0.0
        %430 = vmatprep.subr.mxu0 0.0
        %431 = vmatpush2.msra.mxu0 0.0
        %432 = vmatprep.subr.mxu0 0.0
        %433 = vmatpush2.msra.mxu0 0.0
        %434 = vmatprep.subr.mxu0 0.0
        %435 = vmatpush2.msra.mxu0 0.0
        %436 = vmatprep.subr.mxu0 0.0
        %437 = vmatpush2.msra.mxu0 0.0
        %438 = vmatprep.subr.mxu0 0.0
        %439 = vmatpush2.msra.mxu0 0.0
        %440 = vmatprep.subr.mxu0 0.0
        %441 = vmatpush2.msra.mxu0 0.0
        %442 = vmatprep.subr.mxu0 0.0
        %443 = vmatpush2.msra.mxu0 0.0
        %444 = vmatprep.subr.mxu0 0.0
        %445 = vmatpush2.msra.mxu0 0.0
        %446 = vmatprep.subr.mxu0 0.0
        %447 = vmatpush2.msra.mxu0 0.0
        %448 = vmatprep.subr.mxu0 0.0
        %449 = vmatpush2.msra.mxu0 0.0
        %450 = vmatprep.subr.mxu0 0.0
        %451 = vmatpush2.msra.mxu0 0.0
        %452 = vmatprep.subr.mxu0 0.0
        %453 = vmatpush2.msra.mxu0 0.0
        %454 = vmatprep.subr.mxu0 0.0
        %455 = vmatpush2.msra.mxu0 0.0
        %456 = vmatprep.mubr.f32.mxu0 0.0
        %457 = vmatmul.mubr.f32.gmra.mxu0 %v390
        %v458 = vpop.f32.mrf.mxu0
        %v459 = vadd.f32 0.0, %v458
        %v460 = vpop.f32.mrf.mxu0
        %v461 = vadd.f32 0.0, %v460
        %462 = vdwg.mxu0
        %463 = vmatprep.subr.mxu0 0.0
        %464 = vmatpush1.msra.mxu0 0.0
        %465 = vmatprep.subr.mxu0 0.0
        %466 = vmatpush1.msra.mxu0 0.0
        %467 = vmatprep.subr.mxu0 0.0
        %468 = vmatpush1.msra.mxu0 0.0
        %469 = vmatprep.subr.mxu0 0.0
        %470 = vmatpush1.msra.mxu0 0.0
        %471 = vmatprep.subr.mxu0 0.0
        %472 = vmatpush1.msra.mxu0 0.0
        %473 = vmatprep.subr.mxu0 0.0
        %474 = vmatpush1.msra.mxu0 0.0
        %475 = vmatprep.subr.mxu0 0.0
        %476 = vmatpush1.msra.mxu0 0.0
        %477 = vmatprep.subr.mxu0 0.0
        %478 = vmatpush1.msra.mxu0 0.0
        %479 = vmatprep.subr.mxu0 0.0
        %480 = vmatpush1.msra.mxu0 %v387
        %481 = vmatprep.subr.mxu0 0.0
        %482 = vmatpush1.msra.mxu0 %v384
        %483 = vmatprep.subr.mxu0 0.0
        %484 = vmatpush1.msra.mxu0 %v381
        %485 = vmatprep.subr.mxu0 0.0
        %486 = vmatpush1.msra.mxu0 %v378
        %487 = vmatprep.subr.mxu0 0.0
        %488 = vmatpush1.msra.mxu0 %v375
        %489 = vmatprep.subr.mxu0 0.0
        %490 = vmatpush1.msra.mxu0 %v372
        %491 = vmatprep.subr.mxu0 0.0
        %492 = vmatpush1.msra.mxu0 %v369
        %493 = vmatprep.subr.mxu0 0.0
        %494 = vmatpush1.msra.mxu0 %v366
        %495 = vmatprep.subr.mxu0 0.0
        %496 = vmatpush2.msra.mxu0 0.0
        %497 = vmatprep.subr.mxu0 0.0
        %498 = vmatpush2.msra.mxu0 0.0
        %499 = vmatprep.subr.mxu0 0.0
        %500 = vmatpush2.msra.mxu0 0.0
        %501 = vmatprep.subr.mxu0 0.0
        %502 = vmatpush2.msra.mxu0 0.0
        %503 = vmatprep.subr.mxu0 0.0
        %504 = vmatpush2.msra.mxu0 0.0
        %505 = vmatprep.subr.mxu0 0.0
        %506 = vmatpush2.msra.mxu0 0.0
        %507 = vmatprep.subr.mxu0 0.0
        %508 = vmatpush2.msra.mxu0 0.0
        %509 = vmatprep.subr.mxu0 0.0
        %510 = vmatpush2.msra.mxu0 0.0
        %511 = vmatprep.subr.mxu0 0.0
        %512 = vmatpush2.msra.mxu0 0.0
        %513 = vmatprep.subr.mxu0 0.0
        %514 = vmatpush2.msra.mxu0 0.0
        %515 = vmatprep.subr.mxu0 0.0
        %516 = vmatpush2.msra.mxu0 0.0
        %517 = vmatprep.subr.mxu0 0.0
        %518 = vmatpush2.msra.mxu0 0.0
        %519 = vmatprep.subr.mxu0 0.0
        %520 = vmatpush2.msra.mxu0 0.0
        %521 = vmatprep.subr.mxu0 0.0
        %522 = vmatpush2.msra.mxu0 0.0
        %523 = vmatprep.subr.mxu0 0.0
        %524 = vmatpush2.msra.mxu0 0.0
        %525 = vmatprep.subr.mxu0 0.0
        %526 = vmatpush2.msra.mxu0 0.0
        %527 = vmatprep.mubr.f32.mxu0 0.0
        %528 = vmatmul.mubr.f32.gmra.mxu0 %v390
        %v529 = vpop.f32.mrf.mxu0
        %v530 = vadd.f32 0.0, %v529
        %v531 = vpop.f32.mrf.mxu0
        %532 = vdwg.mxu0
        %v533 = vld [vmem:[%s3] sm:$0xf]
        %s534 = scalar_lea.vmem %s3, 4
        %v535 = vld [vmem:[%s534] sm:$0xf]
        %539 = vrot.lane.b32.xlu0 %v459, 127
        %v540 = vpop.permute.xlu0 %539
        %541 = vrot.lane.b32.xlu0 %v461, 127
        %v542 = vpop.permute.xlu0 %541
        %543 = vrot.lane.b32.xlu0 %v530, 127
        %v544 = vpop.permute.xlu0 %543
        %vm545 = vcmask 1039360
        %v546 = vsel %vm545, %v540, %v542
        %v547 = vsel %vm545, %v542, %v544
        %vm551 = vcmask 64512
        %v553 = vsel %vm551, %v535, 0
        %555 = vmatprep.subr.mxu0 0.0
        %556 = vmatpush1.msra.mxu0 0.0
        %557 = vmatprep.subr.mxu0 0.0
        %558 = vmatpush1.msra.mxu0 0.0
        %559 = vmatprep.subr.mxu0 0.0
        %560 = vmatpush1.msra.mxu0 0.0
        %561 = vmatprep.subr.mxu0 0.0
        %562 = vmatpush1.msra.mxu0 0.0
        %563 = vmatprep.subr.mxu0 0.0
        %564 = vmatpush1.msra.mxu0 0.0
        %565 = vmatprep.subr.mxu0 0.0
        %566 = vmatpush1.msra.mxu0 0.0
        %567 = vmatprep.subr.mxu0 0.0
        %568 = vmatpush1.msra.mxu0 0.0
        %569 = vmatprep.subr.mxu0 0.0
        %570 = vmatpush1.msra.mxu0 0.0
        %571 = vmatprep.subr.mxu0 0.0
        %572 = vmatpush1.msra.mxu0 0.0
        %573 = vmatprep.subr.mxu0 0.0
        %574 = vmatpush1.msra.mxu0 0.0
        %575 = vmatprep.subr.mxu0 0.0
        %576 = vmatpush1.msra.mxu0 0.0
        %577 = vmatprep.subr.mxu0 0.0
        %578 = vmatpush1.msra.mxu0 0.0
        %579 = vmatprep.subr.mxu0 0.0
        %580 = vmatpush1.msra.mxu0 0.0
        %581 = vmatprep.subr.mxu0 0.0
        %582 = vmatpush1.msra.mxu0 0.0
        %583 = vmatprep.subr.mxu0 0.0
        %584 = vmatpush1.msra.mxu0 0.0
        %585 = vmatprep.subr.mxu0 %v547
        %586 = vmatpush1.msra.mxu0 %v546
        %587 = vmatprep.subr.mxu0 0.0
        %588 = vmatpush2.msra.mxu0 0.0
        %589 = vmatprep.subr.mxu0 0.0
        %590 = vmatpush2.msra.mxu0 0.0
        %591 = vmatprep.subr.mxu0 0.0
        %592 = vmatpush2.msra.mxu0 0.0
        %593 = vmatprep.subr.mxu0 0.0
        %594 = vmatpush2.msra.mxu0 0.0
        %595 = vmatprep.subr.mxu0 0.0
        %596 = vmatpush2.msra.mxu0 0.0
        %597 = vmatprep.subr.mxu0 0.0
        %598 = vmatpush2.msra.mxu0 0.0
        %599 = vmatprep.subr.mxu0 0.0
        %600 = vmatpush2.msra.mxu0 0.0
        %601 = vmatprep.subr.mxu0 0.0
        %602 = vmatpush2.msra.mxu0 0.0
        %603 = vmatprep.subr.mxu0 0.0
        %604 = vmatpush2.msra.mxu0 0.0
        %605 = vmatprep.subr.mxu0 0.0
        %606 = vmatpush2.msra.mxu0 0.0
        %607 = vmatprep.subr.mxu0 0.0
        %608 = vmatpush2.msra.mxu0 0.0
        %609 = vmatprep.subr.mxu0 0.0
        %610 = vmatpush2.msra.mxu0 0.0
        %611 = vmatprep.subr.mxu0 0.0
        %612 = vmatpush2.msra.mxu0 0.0
        %613 = vmatprep.subr.mxu0 0.0
        %614 = vmatpush2.msra.mxu0 0.0
        %615 = vmatprep.subr.mxu0 0.0
        %616 = vmatpush2.msra.mxu0 0.0
        %617 = vmatprep.subr.mxu0 0.0
        %618 = vmatpush2.msra.mxu0 0.0
        %619 = vmatprep.mubr.f32.mxu0 0.0
        %620 = vmatmul.mubr.f32.gmra.mxu0 %v553
        %v621 = vpop.f32.mrf.mxu0
        %v622 = vadd.f32 0.0, %v621
        %v623 = vpop.f32.mrf.mxu0
        %v624 = vadd.f32 0.0, %v623
        %625 = vdwg.mxu0
        %626 = vmatprep.subr.mxu0 0.0
        %627 = vmatpush1.msra.mxu0 0.0
        %628 = vmatprep.subr.mxu0 0.0
        %629 = vmatpush1.msra.mxu0 0.0
        %630 = vmatprep.subr.mxu0 0.0
        %631 = vmatpush1.msra.mxu0 0.0
        %632 = vmatprep.subr.mxu0 0.0
        %633 = vmatpush1.msra.mxu0 0.0
        %634 = vmatprep.subr.mxu0 0.0
        %635 = vmatpush1.msra.mxu0 0.0
        %636 = vmatprep.subr.mxu0 0.0
        %637 = vmatpush1.msra.mxu0 0.0
        %638 = vmatprep.subr.mxu0 0.0
        %639 = vmatpush1.msra.mxu0 0.0
        %640 = vmatprep.subr.mxu0 0.0
        %641 = vmatpush1.msra.mxu0 0.0
        %642 = vmatprep.subr.mxu0 0.0
        %643 = vmatpush1.msra.mxu0 0.0
        %644 = vmatprep.subr.mxu0 0.0
        %645 = vmatpush1.msra.mxu0 0.0
        %646 = vmatprep.subr.mxu0 0.0
        %647 = vmatpush1.msra.mxu0 0.0
        %648 = vmatprep.subr.mxu0 0.0
        %649 = vmatpush1.msra.mxu0 0.0
        %650 = vmatprep.subr.mxu0 0.0
        %651 = vmatpush1.msra.mxu0 0.0
        %652 = vmatprep.subr.mxu0 0.0
        %653 = vmatpush1.msra.mxu0 0.0
        %654 = vmatprep.subr.mxu0 0.0
        %655 = vmatpush1.msra.mxu0 0.0
        %656 = vmatprep.subr.mxu0 0.0
        %657 = vmatpush1.msra.mxu0 %v544
        %658 = vmatprep.subr.mxu0 0.0
        %659 = vmatpush2.msra.mxu0 0.0
        %660 = vmatprep.subr.mxu0 0.0
        %661 = vmatpush2.msra.mxu0 0.0
        %662 = vmatprep.subr.mxu0 0.0
        %663 = vmatpush2.msra.mxu0 0.0
        %664 = vmatprep.subr.mxu0 0.0
        %665 = vmatpush2.msra.mxu0 0.0
        %666 = vmatprep.subr.mxu0 0.0
        %667 = vmatpush2.msra.mxu0 0.0
        %668 = vmatprep.subr.mxu0 0.0
        %669 = vmatpush2.msra.mxu0 0.0
        %670 = vmatprep.subr.mxu0 0.0
        %671 = vmatpush2.msra.mxu0 0.0
        %672 = vmatprep.subr.mxu0 0.0
        %673 = vmatpush2.msra.mxu0 0.0
        %674 = vmatprep.subr.mxu0 0.0
        %675 = vmatpush2.msra.mxu0 0.0
        %676 = vmatprep.subr.mxu0 0.0
        %677 = vmatpush2.msra.mxu0 0.0
        %678 = vmatprep.subr.mxu0 0.0
        %679 = vmatpush2.msra.mxu0 0.0
        %680 = vmatprep.subr.mxu0 0.0
        %681 = vmatpush2.msra.mxu0 0.0
        %682 = vmatprep.subr.mxu0 0.0
        %683 = vmatpush2.msra.mxu0 0.0
        %684 = vmatprep.subr.mxu0 0.0
        %685 = vmatpush2.msra.mxu0 0.0
        %686 = vmatprep.subr.mxu0 0.0
        %687 = vmatpush2.msra.mxu0 0.0
        %688 = vmatprep.subr.mxu0 0.0
        %689 = vmatpush2.msra.mxu0 0.0
        %690 = vmatprep.mubr.f32.mxu0 0.0
        %691 = vmatmul.mubr.f32.gmra.mxu0 %v553
        %v692 = vpop.f32.mrf.mxu0
        %v693 = vadd.f32 0.0, %v692
        %v694 = vpop.f32.mrf.mxu0
        %695 = vdwg.mxu0
        %v697 = vsel %vm551, %v533, 0
        %699 = vmatprep.subr.mxu0 0.0
        %700 = vmatpush1.msra.mxu0 0.0
        %701 = vmatprep.subr.mxu0 0.0
        %702 = vmatpush1.msra.mxu0 0.0
        %703 = vmatprep.subr.mxu0 0.0
        %704 = vmatpush1.msra.mxu0 0.0
        %705 = vmatprep.subr.mxu0 0.0
        %706 = vmatpush1.msra.mxu0 0.0
        %707 = vmatprep.subr.mxu0 0.0
        %708 = vmatpush1.msra.mxu0 0.0
        %709 = vmatprep.subr.mxu0 0.0
        %710 = vmatpush1.msra.mxu0 0.0
        %711 = vmatprep.subr.mxu0 0.0
        %712 = vmatpush1.msra.mxu0 0.0
        %713 = vmatprep.subr.mxu0 0.0
        %714 = vmatpush1.msra.mxu0 0.0
        %715 = vmatprep.subr.mxu0 0.0
        %716 = vmatpush1.msra.mxu0 0.0
        %717 = vmatprep.subr.mxu0 0.0
        %718 = vmatpush1.msra.mxu0 0.0
        %719 = vmatprep.subr.mxu0 0.0
        %720 = vmatpush1.msra.mxu0 0.0
        %721 = vmatprep.subr.mxu0 0.0
        %722 = vmatpush1.msra.mxu0 0.0
        %723 = vmatprep.subr.mxu0 0.0
        %724 = vmatpush1.msra.mxu0 0.0
        %725 = vmatprep.subr.mxu0 0.0
        %726 = vmatpush1.msra.mxu0 0.0
        %727 = vmatprep.subr.mxu0 0.0
        %728 = vmatpush1.msra.mxu0 0.0
        %729 = vmatprep.subr.mxu0 %v461
        %730 = vmatpush1.msra.mxu0 %v459
        %731 = vmatprep.subr.mxu0 0.0
        %732 = vmatpush2.msra.mxu0 0.0
        %733 = vmatprep.subr.mxu0 0.0
        %734 = vmatpush2.msra.mxu0 0.0
        %735 = vmatprep.subr.mxu0 0.0
        %736 = vmatpush2.msra.mxu0 0.0
        %737 = vmatprep.subr.mxu0 0.0
        %738 = vmatpush2.msra.mxu0 0.0
        %739 = vmatprep.subr.mxu0 0.0
        %740 = vmatpush2.msra.mxu0 0.0
        %741 = vmatprep.subr.mxu0 0.0
        %742 = vmatpush2.msra.mxu0 0.0
        %743 = vmatprep.subr.mxu0 0.0
        %744 = vmatpush2.msra.mxu0 0.0
        %745 = vmatprep.subr.mxu0 0.0
        %746 = vmatpush2.msra.mxu0 0.0
        %747 = vmatprep.subr.mxu0 0.0
        %748 = vmatpush2.msra.mxu0 0.0
        %749 = vmatprep.subr.mxu0 0.0
        %750 = vmatpush2.msra.mxu0 0.0
        %751 = vmatprep.subr.mxu0 0.0
        %752 = vmatpush2.msra.mxu0 0.0
        %753 = vmatprep.subr.mxu0 0.0
        %754 = vmatpush2.msra.mxu0 0.0
        %755 = vmatprep.subr.mxu0 0.0
        %756 = vmatpush2.msra.mxu0 0.0
        %757 = vmatprep.subr.mxu0 0.0
        %758 = vmatpush2.msra.mxu0 0.0
        %759 = vmatprep.subr.mxu0 0.0
        %760 = vmatpush2.msra.mxu0 0.0
        %761 = vmatprep.subr.mxu0 0.0
        %762 = vmatpush2.msra.mxu0 0.0
        %763 = vmatprep.mubr.f32.mxu0 0.0
        %764 = vmatmul.mubr.f32.gmra.mxu0 %v697
        %v765 = vpop.f32.mrf.mxu0
        %v766 = vadd.f32 %v622, %v765
        %v767 = vpop.f32.mrf.mxu0
        %v768 = vadd.f32 %v624, %v767
        %769 = vdwg.mxu0
        %770 = vmatprep.subr.mxu0 0.0
        %771 = vmatpush1.msra.mxu0 0.0
        %772 = vmatprep.subr.mxu0 0.0
        %773 = vmatpush1.msra.mxu0 0.0
        %774 = vmatprep.subr.mxu0 0.0
        %775 = vmatpush1.msra.mxu0 0.0
        %776 = vmatprep.subr.mxu0 0.0
        %777 = vmatpush1.msra.mxu0 0.0
        %778 = vmatprep.subr.mxu0 0.0
        %779 = vmatpush1.msra.mxu0 0.0
        %780 = vmatprep.subr.mxu0 0.0
        %781 = vmatpush1.msra.mxu0 0.0
        %782 = vmatprep.subr.mxu0 0.0
        %783 = vmatpush1.msra.mxu0 0.0
        %784 = vmatprep.subr.mxu0 0.0
        %785 = vmatpush1.msra.mxu0 0.0
        %786 = vmatprep.subr.mxu0 0.0
        %787 = vmatpush1.msra.mxu0 0.0
        %788 = vmatprep.subr.mxu0 0.0
        %789 = vmatpush1.msra.mxu0 0.0
        %790 = vmatprep.subr.mxu0 0.0
        %791 = vmatpush1.msra.mxu0 0.0
        %792 = vmatprep.subr.mxu0 0.0
        %793 = vmatpush1.msra.mxu0 0.0
        %794 = vmatprep.subr.mxu0 0.0
        %795 = vmatpush1.msra.mxu0 0.0
        %796 = vmatprep.subr.mxu0 0.0
        %797 = vmatpush1.msra.mxu0 0.0
        %798 = vmatprep.subr.mxu0 0.0
        %799 = vmatpush1.msra.mxu0 0.0
        %800 = vmatprep.subr.mxu0 0.0
        %801 = vmatpush1.msra.mxu0 %v530
        %802 = vmatprep.subr.mxu0 0.0
        %803 = vmatpush2.msra.mxu0 0.0
        %804 = vmatprep.subr.mxu0 0.0
        %805 = vmatpush2.msra.mxu0 0.0
        %806 = vmatprep.subr.mxu0 0.0
        %807 = vmatpush2.msra.mxu0 0.0
        %808 = vmatprep.subr.mxu0 0.0
        %809 = vmatpush2.msra.mxu0 0.0
        %810 = vmatprep.subr.mxu0 0.0
        %811 = vmatpush2.msra.mxu0 0.0
        %812 = vmatprep.subr.mxu0 0.0
        %813 = vmatpush2.msra.mxu0 0.0
        %814 = vmatprep.subr.mxu0 0.0
        %815 = vmatpush2.msra.mxu0 0.0
        %816 = vmatprep.subr.mxu0 0.0
        %817 = vmatpush2.msra.mxu0 0.0
        %818 = vmatprep.subr.mxu0 0.0
        %819 = vmatpush2.msra.mxu0 0.0
        %820 = vmatprep.subr.mxu0 0.0
        %821 = vmatpush2.msra.mxu0 0.0
        %822 = vmatprep.subr.mxu0 0.0
        %823 = vmatpush2.msra.mxu0 0.0
        %824 = vmatprep.subr.mxu0 0.0
        %825 = vmatpush2.msra.mxu0 0.0
        %826 = vmatprep.subr.mxu0 0.0
        %827 = vmatpush2.msra.mxu0 0.0
        %828 = vmatprep.subr.mxu0 0.0
        %829 = vmatpush2.msra.mxu0 0.0
        %830 = vmatprep.subr.mxu0 0.0
        %831 = vmatpush2.msra.mxu0 0.0
        %832 = vmatprep.subr.mxu0 0.0
        %833 = vmatpush2.msra.mxu0 0.0
        %834 = vmatprep.mubr.f32.mxu0 0.0
        %835 = vmatmul.mubr.f32.gmra.mxu0 %v697
        %v836 = vpop.f32.mrf.mxu0
        %v837 = vadd.f32 %v693, %v836
        %v838 = vpop.f32.mrf.mxu0
        %839 = vdwg.mxu0
        %s840 = scalar_lea.vmem %s3, 8
        %v841 = vld [vmem:[%s840] sm:$0xf]
        %842 = vrot.lane.b32.xlu0 %v459, 112
        %v843 = vpop.permute.xlu0 %842
        %844 = vrot.lane.b32.xlu0 %v461, 112
        %v845 = vpop.permute.xlu0 %844
        %846 = vrot.lane.b32.xlu0 %v530, 112
        %v847 = vpop.permute.xlu0 %846
        %vm848 = vcmask 916480
        %v849 = vsel %vm848, %v843, %v845
        %v850 = vsel %vm848, %v845, %v847
        %v855 = vsel %vm551, %v841, 0
        %857 = vmatprep.subr.mxu0 0.0
        %858 = vmatpush1.msra.mxu0 0.0
        %859 = vmatprep.subr.mxu0 0.0
        %860 = vmatpush1.msra.mxu0 0.0
        %861 = vmatprep.subr.mxu0 0.0
        %862 = vmatpush1.msra.mxu0 0.0
        %863 = vmatprep.subr.mxu0 0.0
        %864 = vmatpush1.msra.mxu0 0.0
        %865 = vmatprep.subr.mxu0 0.0
        %866 = vmatpush1.msra.mxu0 0.0
        %867 = vmatprep.subr.mxu0 0.0
        %868 = vmatpush1.msra.mxu0 0.0
        %869 = vmatprep.subr.mxu0 0.0
        %870 = vmatpush1.msra.mxu0 0.0
        %871 = vmatprep.subr.mxu0 0.0
        %872 = vmatpush1.msra.mxu0 0.0
        %873 = vmatprep.subr.mxu0 0.0
        %874 = vmatpush1.msra.mxu0 0.0
        %875 = vmatprep.subr.mxu0 0.0
        %876 = vmatpush1.msra.mxu0 0.0
        %877 = vmatprep.subr.mxu0 0.0
        %878 = vmatpush1.msra.mxu0 0.0
        %879 = vmatprep.subr.mxu0 0.0
        %880 = vmatpush1.msra.mxu0 0.0
        %881 = vmatprep.subr.mxu0 0.0
        %882 = vmatpush1.msra.mxu0 0.0
        %883 = vmatprep.subr.mxu0 0.0
        %884 = vmatpush1.msra.mxu0 0.0
        %885 = vmatprep.subr.mxu0 0.0
        %886 = vmatpush1.msra.mxu0 0.0
        %887 = vmatprep.subr.mxu0 %v850
        %888 = vmatpush1.msra.mxu0 %v849
        %889 = vmatprep.subr.mxu0 0.0
        %890 = vmatpush2.msra.mxu0 0.0
        %891 = vmatprep.subr.mxu0 0.0
        %892 = vmatpush2.msra.mxu0 0.0
        %893 = vmatprep.subr.mxu0 0.0
        %894 = vmatpush2.msra.mxu0 0.0
        %895 = vmatprep.subr.mxu0 0.0
        %896 = vmatpush2.msra.mxu0 0.0
        %897 = vmatprep.subr.mxu0 0.0
        %898 = vmatpush2.msra.mxu0 0.0
        %899 = vmatprep.subr.mxu0 0.0
        %900 = vmatpush2.msra.mxu0 0.0
        %901 = vmatprep.subr.mxu0 0.0
        %902 = vmatpush2.msra.mxu0 0.0
        %903 = vmatprep.subr.mxu0 0.0
        %904 = vmatpush2.msra.mxu0 0.0
        %905 = vmatprep.subr.mxu0 0.0
        %906 = vmatpush2.msra.mxu0 0.0
        %907 = vmatprep.subr.mxu0 0.0
        %908 = vmatpush2.msra.mxu0 0.0
        %909 = vmatprep.subr.mxu0 0.0
        %910 = vmatpush2.msra.mxu0 0.0
        %911 = vmatprep.subr.mxu0 0.0
        %912 = vmatpush2.msra.mxu0 0.0
        %913 = vmatprep.subr.mxu0 0.0
        %914 = vmatpush2.msra.mxu0 0.0
        %915 = vmatprep.subr.mxu0 0.0
        %916 = vmatpush2.msra.mxu0 0.0
        %917 = vmatprep.subr.mxu0 0.0
        %918 = vmatpush2.msra.mxu0 0.0
        %919 = vmatprep.subr.mxu0 0.0
        %920 = vmatpush2.msra.mxu0 0.0
        %921 = vmatprep.mubr.f32.mxu0 0.0
        %922 = vmatmul.mubr.f32.gmra.mxu0 %v855
        %v923 = vpop.f32.mrf.mxu0
        %v924 = vadd.f32 0.0, %v923
        %v925 = vpop.f32.mrf.mxu0
        %v926 = vadd.f32 0.0, %v925
        %927 = vdwg.mxu0
        %928 = vmatprep.subr.mxu0 0.0
        %929 = vmatpush1.msra.mxu0 0.0
        %930 = vmatprep.subr.mxu0 0.0
        %931 = vmatpush1.msra.mxu0 0.0
        %932 = vmatprep.subr.mxu0 0.0
        %933 = vmatpush1.msra.mxu0 0.0
        %934 = vmatprep.subr.mxu0 0.0
        %935 = vmatpush1.msra.mxu0 0.0
        %936 = vmatprep.subr.mxu0 0.0
        %937 = vmatpush1.msra.mxu0 0.0
        %938 = vmatprep.subr.mxu0 0.0
        %939 = vmatpush1.msra.mxu0 0.0
        %940 = vmatprep.subr.mxu0 0.0
        %941 = vmatpush1.msra.mxu0 0.0
        %942 = vmatprep.subr.mxu0 0.0
        %943 = vmatpush1.msra.mxu0 0.0
        %944 = vmatprep.subr.mxu0 0.0
        %945 = vmatpush1.msra.mxu0 0.0
        %946 = vmatprep.subr.mxu0 0.0
        %947 = vmatpush1.msra.mxu0 0.0
        %948 = vmatprep.subr.mxu0 0.0
        %949 = vmatpush1.msra.mxu0 0.0
        %950 = vmatprep.subr.mxu0 0.0
        %951 = vmatpush1.msra.mxu0 0.0
        %952 = vmatprep.subr.mxu0 0.0
        %953 = vmatpush1.msra.mxu0 0.0
        %954 = vmatprep.subr.mxu0 0.0
        %955 = vmatpush1.msra.mxu0 0.0
        %956 = vmatprep.subr.mxu0 0.0
        %957 = vmatpush1.msra.mxu0 0.0
        %958 = vmatprep.subr.mxu0 0.0
        %959 = vmatpush1.msra.mxu0 %v847
        %960 = vmatprep.subr.mxu0 0.0
        %961 = vmatpush2.msra.mxu0 0.0
        %962 = vmatprep.subr.mxu0 0.0
        %963 = vmatpush2.msra.mxu0 0.0
        %964 = vmatprep.subr.mxu0 0.0
        %965 = vmatpush2.msra.mxu0 0.0
        %966 = vmatprep.subr.mxu0 0.0
        %967 = vmatpush2.msra.mxu0 0.0
        %968 = vmatprep.subr.mxu0 0.0
        %969 = vmatpush2.msra.mxu0 0.0
        %970 = vmatprep.subr.mxu0 0.0
        %971 = vmatpush2.msra.mxu0 0.0
        %972 = vmatprep.subr.mxu0 0.0
        %973 = vmatpush2.msra.mxu0 0.0
        %974 = vmatprep.subr.mxu0 0.0
        %975 = vmatpush2.msra.mxu0 0.0
        %976 = vmatprep.subr.mxu0 0.0
        %977 = vmatpush2.msra.mxu0 0.0
        %978 = vmatprep.subr.mxu0 0.0
        %979 = vmatpush2.msra.mxu0 0.0
        %980 = vmatprep.subr.mxu0 0.0
        %981 = vmatpush2.msra.mxu0 0.0
        %982 = vmatprep.subr.mxu0 0.0
        %983 = vmatpush2.msra.mxu0 0.0
        %984 = vmatprep.subr.mxu0 0.0
        %985 = vmatpush2.msra.mxu0 0.0
        %986 = vmatprep.subr.mxu0 0.0
        %987 = vmatpush2.msra.mxu0 0.0
        %988 = vmatprep.subr.mxu0 0.0
        %989 = vmatpush2.msra.mxu0 0.0
        %990 = vmatprep.subr.mxu0 0.0
        %991 = vmatpush2.msra.mxu0 0.0
        %992 = vmatprep.mubr.f32.mxu0 0.0
        %993 = vmatmul.mubr.f32.gmra.mxu0 %v855
        %v994 = vpop.f32.mrf.mxu0
        %v995 = vadd.f32 0.0, %v994
        %v996 = vpop.f32.mrf.mxu0
        %997 = vdwg.mxu0
        %v998 = vadd.f32 %v766, %v924
        %v999 = vadd.f32 %v768, %v926
        %v1000 = vadd.f32 %v837, %v995
        %s1001 = scalar_lea.vmem %s3, 12
        %v1002 = vld [vmem:[%s1001] sm:$0xf]
        %1003 = vrot.lane.b32.xlu0 %v459, 111
        %v1004 = vpop.permute.xlu0 %1003
        %1005 = vrot.lane.b32.xlu0 %v461, 111
        %v1006 = vpop.permute.xlu0 %1005
        %1007 = vrot.lane.b32.xlu0 %v530, 111
        %v1008 = vpop.permute.xlu0 %1007
        %vm1009 = vcmask 908288
        %v1010 = vsel %vm1009, %v1004, %v1006
        %v1011 = vsel %vm1009, %v1006, %v1008
        %v1016 = vsel %vm551, %v1002, 0
        %1018 = vmatprep.subr.mxu0 0.0
        %1019 = vmatpush1.msra.mxu0 0.0
        %1020 = vmatprep.subr.mxu0 0.0
        %1021 = vmatpush1.msra.mxu0 0.0
        %1022 = vmatprep.subr.mxu0 0.0
        %1023 = vmatpush1.msra.mxu0 0.0
        %1024 = vmatprep.subr.mxu0 0.0
        %1025 = vmatpush1.msra.mxu0 0.0
        %1026 = vmatprep.subr.mxu0 0.0
        %1027 = vmatpush1.msra.mxu0 0.0
        %1028 = vmatprep.subr.mxu0 0.0
        %1029 = vmatpush1.msra.mxu0 0.0
        %1030 = vmatprep.subr.mxu0 0.0
        %1031 = vmatpush1.msra.mxu0 0.0
        %1032 = vmatprep.subr.mxu0 0.0
        %1033 = vmatpush1.msra.mxu0 0.0
        %1034 = vmatprep.subr.mxu0 0.0
        %1035 = vmatpush1.msra.mxu0 0.0
        %1036 = vmatprep.subr.mxu0 0.0
        %1037 = vmatpush1.msra.mxu0 0.0
        %1038 = vmatprep.subr.mxu0 0.0
        %1039 = vmatpush1.msra.mxu0 0.0
        %1040 = vmatprep.subr.mxu0 0.0
        %1041 = vmatpush1.msra.mxu0 0.0
        %1042 = vmatprep.subr.mxu0 0.0
        %1043 = vmatpush1.msra.mxu0 0.0
        %1044 = vmatprep.subr.mxu0 0.0
        %1045 = vmatpush1.msra.mxu0 0.0
        %1046 = vmatprep.subr.mxu0 0.0
        %1047 = vmatpush1.msra.mxu0 0.0
        %1048 = vmatprep.subr.mxu0 %v1011
        %1049 = vmatpush1.msra.mxu0 %v1010
        %1050 = vmatprep.subr.mxu0 0.0
        %1051 = vmatpush2.msra.mxu0 0.0
        %1052 = vmatprep.subr.mxu0 0.0
        %1053 = vmatpush2.msra.mxu0 0.0
        %1054 = vmatprep.subr.mxu0 0.0
        %1055 = vmatpush2.msra.mxu0 0.0
        %1056 = vmatprep.subr.mxu0 0.0
        %1057 = vmatpush2.msra.mxu0 0.0
        %1058 = vmatprep.subr.mxu0 0.0
        %1059 = vmatpush2.msra.mxu0 0.0
        %1060 = vmatprep.subr.mxu0 0.0
        %1061 = vmatpush2.msra.mxu0 0.0
        %1062 = vmatprep.subr.mxu0 0.0
        %1063 = vmatpush2.msra.mxu0 0.0
        %1064 = vmatprep.subr.mxu0 0.0
        %1065 = vmatpush2.msra.mxu0 0.0
        %1066 = vmatprep.subr.mxu0 0.0
        %1067 = vmatpush2.msra.mxu0 0.0
        %1068 = vmatprep.subr.mxu0 0.0
        %1069 = vmatpush2.msra.mxu0 0.0
        %1070 = vmatprep.subr.mxu0 0.0
        %1071 = vmatpush2.msra.mxu0 0.0
        %1072 = vmatprep.subr.mxu0 0.0
        %1073 = vmatpush2.msra.mxu0 0.0
        %1074 = vmatprep.subr.mxu0 0.0
        %1075 = vmatpush2.msra.mxu0 0.0
        %1076 = vmatprep.subr.mxu0 0.0
        %1077 = vmatpush2.msra.mxu0 0.0
        %1078 = vmatprep.subr.mxu0 0.0
        %1079 = vmatpush2.msra.mxu0 0.0
        %1080 = vmatprep.subr.mxu0 0.0
        %1081 = vmatpush2.msra.mxu0 0.0
        %1082 = vmatprep.mubr.f32.mxu0 0.0
        %1083 = vmatmul.mubr.f32.gmra.mxu0 %v1016
        %v1084 = vpop.f32.mrf.mxu0
        %v1085 = vadd.f32 0.0, %v1084
        %v1086 = vpop.f32.mrf.mxu0
        %v1087 = vadd.f32 0.0, %v1086
        %1088 = vdwg.mxu0
        %1089 = vmatprep.subr.mxu0 0.0
        %1090 = vmatpush1.msra.mxu0 0.0
        %1091 = vmatprep.subr.mxu0 0.0
        %1092 = vmatpush1.msra.mxu0 0.0
        %1093 = vmatprep.subr.mxu0 0.0
        %1094 = vmatpush1.msra.mxu0 0.0
        %1095 = vmatprep.subr.mxu0 0.0
        %1096 = vmatpush1.msra.mxu0 0.0
        %1097 = vmatprep.subr.mxu0 0.0
        %1098 = vmatpush1.msra.mxu0 0.0
        %1099 = vmatprep.subr.mxu0 0.0
        %1100 = vmatpush1.msra.mxu0 0.0
        %1101 = vmatprep.subr.mxu0 0.0
        %1102 = vmatpush1.msra.mxu0 0.0
        %1103 = vmatprep.subr.mxu0 0.0
        %1104 = vmatpush1.msra.mxu0 0.0
        %1105 = vmatprep.subr.mxu0 0.0
        %1106 = vmatpush1.msra.mxu0 0.0
        %1107 = vmatprep.subr.mxu0 0.0
        %1108 = vmatpush1.msra.mxu0 0.0
        %1109 = vmatprep.subr.mxu0 0.0
        %1110 = vmatpush1.msra.mxu0 0.0
        %1111 = vmatprep.subr.mxu0 0.0
        %1112 = vmatpush1.msra.mxu0 0.0
        %1113 = vmatprep.subr.mxu0 0.0
        %1114 = vmatpush1.msra.mxu0 0.0
        %1115 = vmatprep.subr.mxu0 0.0
        %1116 = vmatpush1.msra.mxu0 0.0
        %1117 = vmatprep.subr.mxu0 0.0
        %1118 = vmatpush1.msra.mxu0 0.0
        %1119 = vmatprep.subr.mxu0 0.0
        %1120 = vmatpush1.msra.mxu0 %v1008
        %1121 = vmatprep.subr.mxu0 0.0
        %1122 = vmatpush2.msra.mxu0 0.0
        %1123 = vmatprep.subr.mxu0 0.0
        %1124 = vmatpush2.msra.mxu0 0.0
        %1125 = vmatprep.subr.mxu0 0.0
        %1126 = vmatpush2.msra.mxu0 0.0
        %1127 = vmatprep.subr.mxu0 0.0
        %1128 = vmatpush2.msra.mxu0 0.0
        %1129 = vmatprep.subr.mxu0 0.0
        %1130 = vmatpush2.msra.mxu0 0.0
        %1131 = vmatprep.subr.mxu0 0.0
        %1132 = vmatpush2.msra.mxu0 0.0
        %1133 = vmatprep.subr.mxu0 0.0
        %1134 = vmatpush2.msra.mxu0 0.0
        %1135 = vmatprep.subr.mxu0 0.0
        %1136 = vmatpush2.msra.mxu0 0.0
        %1137 = vmatprep.subr.mxu0 0.0
        %1138 = vmatpush2.msra.mxu0 0.0
        %1139 = vmatprep.subr.mxu0 0.0
        %1140 = vmatpush2.msra.mxu0 0.0
        %1141 = vmatprep.subr.mxu0 0.0
        %1142 = vmatpush2.msra.mxu0 0.0
        %1143 = vmatprep.subr.mxu0 0.0
        %1144 = vmatpush2.msra.mxu0 0.0
        %1145 = vmatprep.subr.mxu0 0.0
        %1146 = vmatpush2.msra.mxu0 0.0
        %1147 = vmatprep.subr.mxu0 0.0
        %1148 = vmatpush2.msra.mxu0 0.0
        %1149 = vmatprep.subr.mxu0 0.0
        %1150 = vmatpush2.msra.mxu0 0.0
        %1151 = vmatprep.subr.mxu0 0.0
        %1152 = vmatpush2.msra.mxu0 0.0
        %1153 = vmatprep.mubr.f32.mxu0 0.0
        %1154 = vmatmul.mubr.f32.gmra.mxu0 %v1016
        %v1155 = vpop.f32.mrf.mxu0
        %v1156 = vadd.f32 0.0, %v1155
        %v1157 = vpop.f32.mrf.mxu0
        %1158 = vdwg.mxu0
        %v1159 = vadd.f32 %v998, %v1085
        %v1160 = vadd.f32 %v999, %v1087
        %v1161 = vadd.f32 %v1000, %v1156
        %v1162 = vld [vmem:[%s4] sm:$0xf]
        %1164 = vset.pattern.permute.xlu0 0
        %1165 = vperm.xlu0 %1164, %v1162
        %v1166 = vpop.permute.xlu0 %1165
        %v1168 = vadd.f32 %v1159, %v1166
        %v1169 = vadd.f32 %v1160, %v1166
        %v1170 = vadd.f32 %v1161, %v1166
        %v1171 = vld [vmem:[%s362] sm:$0xff]
        %v1172 = vld [vmem:[%s362 + $0x8] sm:$0xf]
        %v1173 = vld [vmem:[%s5] sm:$0xf]
        %1175 = vrot.lane.b32.xlu0 %v1173, 124
        %v1176 = vpop.permute.xlu0 %1175
        %v1178 = vcombine.high %v1171, %v1171
        %vm1179 = vcmask 31744
        %v1180 = vsel %vm1179, %v1176, 0
        %vm1182 = vcmask 1043456
        %v1183 = vsel %vm1182, %v1171, 0
        %v1185 = vsel %vm1182, %v1178, 0
        %1187 = vmatprep.subr.mxu0 0.0
        %1188 = vmatpush1.msra.mxu0 0.0
        %1189 = vmatprep.subr.mxu0 0.0
        %1190 = vmatpush1.msra.mxu0 0.0
        %1191 = vmatprep.subr.mxu0 0.0
        %1192 = vmatpush1.msra.mxu0 0.0
        %1193 = vmatprep.subr.mxu0 0.0
        %1194 = vmatpush1.msra.mxu0 0.0
        %1195 = vmatprep.subr.mxu0 0.0
        %1196 = vmatpush1.msra.mxu0 0.0
        %1197 = vmatprep.subr.mxu0 0.0
        %1198 = vmatpush1.msra.mxu0 0.0
        %1199 = vmatprep.subr.mxu0 0.0
        %1200 = vmatpush1.msra.mxu0 0.0
        %1201 = vmatprep.subr.mxu0 0.0
        %1202 = vmatpush1.msra.mxu0 0.0
        %1203 = vmatprep.subr.mxu0 0.0
        %1204 = vmatpush1.msra.mxu0 0.0
        %1205 = vmatprep.subr.mxu0 0.0
        %1206 = vmatpush1.msra.mxu0 0.0
        %1207 = vmatprep.subr.mxu0 0.0
        %1208 = vmatpush1.msra.mxu0 0.0
        %1209 = vmatprep.subr.mxu0 0.0
        %1210 = vmatpush1.msra.mxu0 0.0
        %1211 = vmatprep.subr.mxu0 0.0
        %1212 = vmatpush1.msra.mxu0 0.0
        %1213 = vmatprep.subr.mxu0 0.0
        %1214 = vmatpush1.msra.mxu0 0.0
        %1215 = vmatprep.subr.mxu0 0.0
        %1216 = vmatpush1.msra.mxu0 0.0
        %1217 = vmatprep.subr.mxu0 %v1185
        %1218 = vmatpush1.msra.mxu0 %v1183
        %1219 = vmatprep.subr.mxu0 0.0
        %1220 = vmatpush2.msra.mxu0 0.0
        %1221 = vmatprep.subr.mxu0 0.0
        %1222 = vmatpush2.msra.mxu0 0.0
        %1223 = vmatprep.subr.mxu0 0.0
        %1224 = vmatpush2.msra.mxu0 0.0
        %1225 = vmatprep.subr.mxu0 0.0
        %1226 = vmatpush2.msra.mxu0 0.0
        %1227 = vmatprep.subr.mxu0 0.0
        %1228 = vmatpush2.msra.mxu0 0.0
        %1229 = vmatprep.subr.mxu0 0.0
        %1230 = vmatpush2.msra.mxu0 0.0
        %1231 = vmatprep.subr.mxu0 0.0
        %1232 = vmatpush2.msra.mxu0 0.0
        %1233 = vmatprep.subr.mxu0 0.0
        %1234 = vmatpush2.msra.mxu0 0.0
        %1235 = vmatprep.subr.mxu0 0.0
        %1236 = vmatpush2.msra.mxu0 0.0
        %1237 = vmatprep.subr.mxu0 0.0
        %1238 = vmatpush2.msra.mxu0 0.0
        %1239 = vmatprep.subr.mxu0 0.0
        %1240 = vmatpush2.msra.mxu0 0.0
        %1241 = vmatprep.subr.mxu0 0.0
        %1242 = vmatpush2.msra.mxu0 0.0
        %1243 = vmatprep.subr.mxu0 0.0
        %1244 = vmatpush2.msra.mxu0 0.0
        %1245 = vmatprep.subr.mxu0 0.0
        %1246 = vmatpush2.msra.mxu0 0.0
        %1247 = vmatprep.subr.mxu0 0.0
        %1248 = vmatpush2.msra.mxu0 0.0
        %1249 = vmatprep.subr.mxu0 0.0
        %1250 = vmatpush2.msra.mxu0 0.0
        %1251 = vmatprep.mubr.f32.mxu0 0.0
        %1252 = vmatmul.mubr.f32.gmra.mxu0 %v1180
        %v1253 = vpop.f32.mrf.mxu0
        %v1254 = vadd.f32 0.0, %v1253
        %v1255 = vpop.f32.mrf.mxu0
        %v1256 = vadd.f32 0.0, %v1255
        %1257 = vdwg.mxu0
        %v1258 = vsel %vm1179, %v1173, 0
        %v1261 = vsel %vm1182, %v1168, 0
        %v1264 = vsel %vm1182, %v1169, 0
        %1266 = vmatprep.subr.mxu0 0.0
        %1267 = vmatpush1.msra.mxu0 0.0
        %1268 = vmatprep.subr.mxu0 0.0
        %1269 = vmatpush1.msra.mxu0 0.0
        %1270 = vmatprep.subr.mxu0 0.0
        %1271 = vmatpush1.msra.mxu0 0.0
        %1272 = vmatprep.subr.mxu0 0.0
        %1273 = vmatpush1.msra.mxu0 0.0
        %1274 = vmatprep.subr.mxu0 0.0
        %1275 = vmatpush1.msra.mxu0 0.0
        %1276 = vmatprep.subr.mxu0 0.0
        %1277 = vmatpush1.msra.mxu0 0.0
        %1278 = vmatprep.subr.mxu0 0.0
        %1279 = vmatpush1.msra.mxu0 0.0
        %1280 = vmatprep.subr.mxu0 0.0
        %1281 = vmatpush1.msra.mxu0 0.0
        %1282 = vmatprep.subr.mxu0 0.0
        %1283 = vmatpush1.msra.mxu0 0.0
        %1284 = vmatprep.subr.mxu0 0.0
        %1285 = vmatpush1.msra.mxu0 0.0
        %1286 = vmatprep.subr.mxu0 0.0
        %1287 = vmatpush1.msra.mxu0 0.0
        %1288 = vmatprep.subr.mxu0 0.0
        %1289 = vmatpush1.msra.mxu0 0.0
        %1290 = vmatprep.subr.mxu0 0.0
        %1291 = vmatpush1.msra.mxu0 0.0
        %1292 = vmatprep.subr.mxu0 0.0
        %1293 = vmatpush1.msra.mxu0 0.0
        %1294 = vmatprep.subr.mxu0 0.0
        %1295 = vmatpush1.msra.mxu0 0.0
        %1296 = vmatprep.subr.mxu0 %v1264
        %1297 = vmatpush1.msra.mxu0 %v1261
        %1298 = vmatprep.subr.mxu0 0.0
        %1299 = vmatpush2.msra.mxu0 0.0
        %1300 = vmatprep.subr.mxu0 0.0
        %1301 = vmatpush2.msra.mxu0 0.0
        %1302 = vmatprep.subr.mxu0 0.0
        %1303 = vmatpush2.msra.mxu0 0.0
        %1304 = vmatprep.subr.mxu0 0.0
        %1305 = vmatpush2.msra.mxu0 0.0
        %1306 = vmatprep.subr.mxu0 0.0
        %1307 = vmatpush2.msra.mxu0 0.0
        %1308 = vmatprep.subr.mxu0 0.0
        %1309 = vmatpush2.msra.mxu0 0.0
        %1310 = vmatprep.subr.mxu0 0.0
        %1311 = vmatpush2.msra.mxu0 0.0
        %1312 = vmatprep.subr.mxu0 0.0
        %1313 = vmatpush2.msra.mxu0 0.0
        %1314 = vmatprep.subr.mxu0 0.0
        %1315 = vmatpush2.msra.mxu0 0.0
        %1316 = vmatprep.subr.mxu0 0.0
        %1317 = vmatpush2.msra.mxu0 0.0
        %1318 = vmatprep.subr.mxu0 0.0
        %1319 = vmatpush2.msra.mxu0 0.0
        %1320 = vmatprep.subr.mxu0 0.0
        %1321 = vmatpush2.msra.mxu0 0.0
        %1322 = vmatprep.subr.mxu0 0.0
        %1323 = vmatpush2.msra.mxu0 0.0
        %1324 = vmatprep.subr.mxu0 0.0
        %1325 = vmatpush2.msra.mxu0 0.0
        %1326 = vmatprep.subr.mxu0 0.0
        %1327 = vmatpush2.msra.mxu0 0.0
        %1328 = vmatprep.subr.mxu0 0.0
        %1329 = vmatpush2.msra.mxu0 0.0
        %1330 = vmatprep.mubr.f32.mxu0 0.0
        %1331 = vmatmul.mubr.f32.gmra.mxu0 %v1258
        %v1332 = vpop.f32.mrf.mxu0
        %v1333 = vadd.f32 %v1254, %v1332
        %v1334 = vpop.f32.mrf.mxu0
        %v1335 = vadd.f32 %v1256, %v1334
        %1336 = vdwg.mxu0
        %s1337 = scalar_lea.vmem %s5, 4
        %v1338 = vld [vmem:[%s1337] sm:$0xf]
        %1339 = vrot.lane.b32.xlu0 %v1168, 127
        %v1340 = vpop.permute.xlu0 %1339
        %1341 = vrot.lane.b32.xlu0 %v1169, 127
        %v1342 = vpop.permute.xlu0 %1341
        %v1343 = vsel %vm545, %v1340, %v1342
        %v1345 = vsel %vm1179, %v1338, 0
        %v1347 = vsel %vm1182, %v1343, 0
        %v1349 = vsel %vm1182, %v1342, 0
        %1351 = vmatprep.subr.mxu0 0.0
        %1352 = vmatpush1.msra.mxu0 0.0
        %1353 = vmatprep.subr.mxu0 0.0
        %1354 = vmatpush1.msra.mxu0 0.0
        %1355 = vmatprep.subr.mxu0 0.0
        %1356 = vmatpush1.msra.mxu0 0.0
        %1357 = vmatprep.subr.mxu0 0.0
        %1358 = vmatpush1.msra.mxu0 0.0
        %1359 = vmatprep.subr.mxu0 0.0
        %1360 = vmatpush1.msra.mxu0 0.0
        %1361 = vmatprep.subr.mxu0 0.0
        %1362 = vmatpush1.msra.mxu0 0.0
        %1363 = vmatprep.subr.mxu0 0.0
        %1364 = vmatpush1.msra.mxu0 0.0
        %1365 = vmatprep.subr.mxu0 0.0
        %1366 = vmatpush1.msra.mxu0 0.0
        %1367 = vmatprep.subr.mxu0 0.0
        %1368 = vmatpush1.msra.mxu0 0.0
        %1369 = vmatprep.subr.mxu0 0.0
        %1370 = vmatpush1.msra.mxu0 0.0
        %1371 = vmatprep.subr.mxu0 0.0
        %1372 = vmatpush1.msra.mxu0 0.0
        %1373 = vmatprep.subr.mxu0 0.0
        %1374 = vmatpush1.msra.mxu0 0.0
        %1375 = vmatprep.subr.mxu0 0.0
        %1376 = vmatpush1.msra.mxu0 0.0
        %1377 = vmatprep.subr.mxu0 0.0
        %1378 = vmatpush1.msra.mxu0 0.0
        %1379 = vmatprep.subr.mxu0 0.0
        %1380 = vmatpush1.msra.mxu0 0.0
        %1381 = vmatprep.subr.mxu0 %v1349
        %1382 = vmatpush1.msra.mxu0 %v1347
        %1383 = vmatprep.subr.mxu0 0.0
        %1384 = vmatpush2.msra.mxu0 0.0
        %1385 = vmatprep.subr.mxu0 0.0
        %1386 = vmatpush2.msra.mxu0 0.0
        %1387 = vmatprep.subr.mxu0 0.0
        %1388 = vmatpush2.msra.mxu0 0.0
        %1389 = vmatprep.subr.mxu0 0.0
        %1390 = vmatpush2.msra.mxu0 0.0
        %1391 = vmatprep.subr.mxu0 0.0
        %1392 = vmatpush2.msra.mxu0 0.0
        %1393 = vmatprep.subr.mxu0 0.0
        %1394 = vmatpush2.msra.mxu0 0.0
        %1395 = vmatprep.subr.mxu0 0.0
        %1396 = vmatpush2.msra.mxu0 0.0
        %1397 = vmatprep.subr.mxu0 0.0
        %1398 = vmatpush2.msra.mxu0 0.0
        %1399 = vmatprep.subr.mxu0 0.0
        %1400 = vmatpush2.msra.mxu0 0.0
        %1401 = vmatprep.subr.mxu0 0.0
        %1402 = vmatpush2.msra.mxu0 0.0
        %1403 = vmatprep.subr.mxu0 0.0
        %1404 = vmatpush2.msra.mxu0 0.0
        %1405 = vmatprep.subr.mxu0 0.0
        %1406 = vmatpush2.msra.mxu0 0.0
        %1407 = vmatprep.subr.mxu0 0.0
        %1408 = vmatpush2.msra.mxu0 0.0
        %1409 = vmatprep.subr.mxu0 0.0
        %1410 = vmatpush2.msra.mxu0 0.0
        %1411 = vmatprep.subr.mxu0 0.0
        %1412 = vmatpush2.msra.mxu0 0.0
        %1413 = vmatprep.subr.mxu0 0.0
        %1414 = vmatpush2.msra.mxu0 0.0
        %1415 = vmatprep.mubr.f32.mxu0 0.0
        %1416 = vmatmul.mubr.f32.gmra.mxu0 %v1345
        %v1417 = vpop.f32.mrf.mxu0
        %v1418 = vadd.f32 0.0, %v1417
        %v1419 = vpop.f32.mrf.mxu0
        %v1420 = vadd.f32 0.0, %v1419
        %1421 = vdwg.mxu0
        %v1422 = vadd.f32 %v1333, %v1418
        %v1423 = vadd.f32 %v1335, %v1420
        %1424 = vrot.lane.b32.xlu0 %v1338, 124
        %v1425 = vpop.permute.xlu0 %1424
        %1426 = vrot.lane.b32.xlu0 %v1171, 127
        %v1427 = vpop.permute.xlu0 %1426
        %1428 = vrot.lane.b32.xlu0 %v1178, 127
        %v1429 = vpop.permute.xlu0 %1428
        %v1430 = vsel %vm545, %v1427, %v1429
        %v1431 = vsel %vm1179, %v1425, 0
        %v1433 = vsel %vm1182, %v1430, 0
        %v1435 = vsel %vm1182, %v1429, 0
        %1437 = vmatprep.subr.mxu0 0.0
        %1438 = vmatpush1.msra.mxu0 0.0
        %1439 = vmatprep.subr.mxu0 0.0
        %1440 = vmatpush1.msra.mxu0 0.0
        %1441 = vmatprep.subr.mxu0 0.0
        %1442 = vmatpush1.msra.mxu0 0.0
        %1443 = vmatprep.subr.mxu0 0.0
        %1444 = vmatpush1.msra.mxu0 0.0
        %1445 = vmatprep.subr.mxu0 0.0
        %1446 = vmatpush1.msra.mxu0 0.0
        %1447 = vmatprep.subr.mxu0 0.0
        %1448 = vmatpush1.msra.mxu0 0.0
        %1449 = vmatprep.subr.mxu0 0.0
        %1450 = vmatpush1.msra.mxu0 0.0
        %1451 = vmatprep.subr.mxu0 0.0
        %1452 = vmatpush1.msra.mxu0 0.0
        %1453 = vmatprep.subr.mxu0 0.0
        %1454 = vmatpush1.msra.mxu0 0.0
        %1455 = vmatprep.subr.mxu0 0.0
        %1456 = vmatpush1.msra.mxu0 0.0
        %1457 = vmatprep.subr.mxu0 0.0
        %1458 = vmatpush1.msra.mxu0 0.0
        %1459 = vmatprep.subr.mxu0 0.0
        %1460 = vmatpush1.msra.mxu0 0.0
        %1461 = vmatprep.subr.mxu0 0.0
        %1462 = vmatpush1.msra.mxu0 0.0
        %1463 = vmatprep.subr.mxu0 0.0
        %1464 = vmatpush1.msra.mxu0 0.0
        %1465 = vmatprep.subr.mxu0 0.0
        %1466 = vmatpush1.msra.mxu0 0.0
        %1467 = vmatprep.subr.mxu0 %v1435
        %1468 = vmatpush1.msra.mxu0 %v1433
        %1469 = vmatprep.subr.mxu0 0.0
        %1470 = vmatpush2.msra.mxu0 0.0
        %1471 = vmatprep.subr.mxu0 0.0
        %1472 = vmatpush2.msra.mxu0 0.0
        %1473 = vmatprep.subr.mxu0 0.0
        %1474 = vmatpush2.msra.mxu0 0.0
        %1475 = vmatprep.subr.mxu0 0.0
        %1476 = vmatpush2.msra.mxu0 0.0
        %1477 = vmatprep.subr.mxu0 0.0
        %1478 = vmatpush2.msra.mxu0 0.0
        %1479 = vmatprep.subr.mxu0 0.0
        %1480 = vmatpush2.msra.mxu0 0.0
        %1481 = vmatprep.subr.mxu0 0.0
        %1482 = vmatpush2.msra.mxu0 0.0
        %1483 = vmatprep.subr.mxu0 0.0
        %1484 = vmatpush2.msra.mxu0 0.0
        %1485 = vmatprep.subr.mxu0 0.0
        %1486 = vmatpush2.msra.mxu0 0.0
        %1487 = vmatprep.subr.mxu0 0.0
        %1488 = vmatpush2.msra.mxu0 0.0
        %1489 = vmatprep.subr.mxu0 0.0
        %1490 = vmatpush2.msra.mxu0 0.0
        %1491 = vmatprep.subr.mxu0 0.0
        %1492 = vmatpush2.msra.mxu0 0.0
        %1493 = vmatprep.subr.mxu0 0.0
        %1494 = vmatpush2.msra.mxu0 0.0
        %1495 = vmatprep.subr.mxu0 0.0
        %1496 = vmatpush2.msra.mxu0 0.0
        %1497 = vmatprep.subr.mxu0 0.0
        %1498 = vmatpush2.msra.mxu0 0.0
        %1499 = vmatprep.subr.mxu0 0.0
        %1500 = vmatpush2.msra.mxu0 0.0
        %1501 = vmatprep.mubr.f32.mxu0 0.0
        %1502 = vmatmul.mubr.f32.gmra.mxu0 %v1431
        %v1503 = vpop.f32.mrf.mxu0
        %v1504 = vadd.f32 0.0, %v1503
        %v1505 = vpop.f32.mrf.mxu0
        %v1506 = vadd.f32 0.0, %v1505
        %1507 = vdwg.mxu0
        %v1508 = vadd.f32 %v1422, %v1504
        %v1509 = vadd.f32 %v1423, %v1506
        %s1510 = scalar_lea.vmem %s5, 8
        %v1511 = vld [vmem:[%s1510] sm:$0xf]
        %1512 = vrot.lane.b32.xlu0 %v1168, 126
        %v1513 = vpop.permute.xlu0 %1512
        %1514 = vrot.lane.b32.xlu0 %v1169, 126
        %v1515 = vpop.permute.xlu0 %1514
        %vm1516 = vcmask 1031168
        %v1517 = vsel %vm1516, %v1513, %v1515
        %v1519 = vsel %vm1179, %v1511, 0
        %v1521 = vsel %vm1182, %v1517, 0
        %v1523 = vsel %vm1182, %v1515, 0
        %1525 = vmatprep.subr.mxu0 0.0
        %1526 = vmatpush1.msra.mxu0 0.0
        %1527 = vmatprep.subr.mxu0 0.0
        %1528 = vmatpush1.msra.mxu0 0.0
        %1529 = vmatprep.subr.mxu0 0.0
        %1530 = vmatpush1.msra.mxu0 0.0
        %1531 = vmatprep.subr.mxu0 0.0
        %1532 = vmatpush1.msra.mxu0 0.0
        %1533 = vmatprep.subr.mxu0 0.0
        %1534 = vmatpush1.msra.mxu0 0.0
        %1535 = vmatprep.subr.mxu0 0.0
        %1536 = vmatpush1.msra.mxu0 0.0
        %1537 = vmatprep.subr.mxu0 0.0
        %1538 = vmatpush1.msra.mxu0 0.0
        %1539 = vmatprep.subr.mxu0 0.0
        %1540 = vmatpush1.msra.mxu0 0.0
        %1541 = vmatprep.subr.mxu0 0.0
        %1542 = vmatpush1.msra.mxu0 0.0
        %1543 = vmatprep.subr.mxu0 0.0
        %1544 = vmatpush1.msra.mxu0 0.0
        %1545 = vmatprep.subr.mxu0 0.0
        %1546 = vmatpush1.msra.mxu0 0.0
        %1547 = vmatprep.subr.mxu0 0.0
        %1548 = vmatpush1.msra.mxu0 0.0
        %1549 = vmatprep.subr.mxu0 0.0
        %1550 = vmatpush1.msra.mxu0 0.0
        %1551 = vmatprep.subr.mxu0 0.0
        %1552 = vmatpush1.msra.mxu0 0.0
        %1553 = vmatprep.subr.mxu0 0.0
        %1554 = vmatpush1.msra.mxu0 0.0
        %1555 = vmatprep.subr.mxu0 %v1523
        %1556 = vmatpush1.msra.mxu0 %v1521
        %1557 = vmatprep.subr.mxu0 0.0
        %1558 = vmatpush2.msra.mxu0 0.0
        %1559 = vmatprep.subr.mxu0 0.0
        %1560 = vmatpush2.msra.mxu0 0.0
        %1561 = vmatprep.subr.mxu0 0.0
        %1562 = vmatpush2.msra.mxu0 0.0
        %1563 = vmatprep.subr.mxu0 0.0
        %1564 = vmatpush2.msra.mxu0 0.0
        %1565 = vmatprep.subr.mxu0 0.0
        %1566 = vmatpush2.msra.mxu0 0.0
        %1567 = vmatprep.subr.mxu0 0.0
        %1568 = vmatpush2.msra.mxu0 0.0
        %1569 = vmatprep.subr.mxu0 0.0
        %1570 = vmatpush2.msra.mxu0 0.0
        %1571 = vmatprep.subr.mxu0 0.0
        %1572 = vmatpush2.msra.mxu0 0.0
        %1573 = vmatprep.subr.mxu0 0.0
        %1574 = vmatpush2.msra.mxu0 0.0
        %1575 = vmatprep.subr.mxu0 0.0
        %1576 = vmatpush2.msra.mxu0 0.0
        %1577 = vmatprep.subr.mxu0 0.0
        %1578 = vmatpush2.msra.mxu0 0.0
        %1579 = vmatprep.subr.mxu0 0.0
        %1580 = vmatpush2.msra.mxu0 0.0
        %1581 = vmatprep.subr.mxu0 0.0
        %1582 = vmatpush2.msra.mxu0 0.0
        %1583 = vmatprep.subr.mxu0 0.0
        %1584 = vmatpush2.msra.mxu0 0.0
        %1585 = vmatprep.subr.mxu0 0.0
        %1586 = vmatpush2.msra.mxu0 0.0
        %1587 = vmatprep.subr.mxu0 0.0
        %1588 = vmatpush2.msra.mxu0 0.0
        %1589 = vmatprep.mubr.f32.mxu0 0.0
        %1590 = vmatmul.mubr.f32.gmra.mxu0 %v1519
        %v1591 = vpop.f32.mrf.mxu0
        %v1592 = vadd.f32 0.0, %v1591
        %v1593 = vpop.f32.mrf.mxu0
        %v1594 = vadd.f32 0.0, %v1593
        %1595 = vdwg.mxu0
        %v1596 = vadd.f32 %v1508, %v1592
        %v1597 = vadd.f32 %v1509, %v1594
        %1598 = vrot.lane.b32.xlu0 %v1511, 124
        %v1599 = vpop.permute.xlu0 %1598
        %1600 = vrot.lane.b32.xlu0 %v1171, 126
        %v1601 = vpop.permute.xlu0 %1600
        %1602 = vrot.lane.b32.xlu0 %v1178, 126
        %v1603 = vpop.permute.xlu0 %1602
        %v1604 = vsel %vm1516, %v1601, %v1603
        %v1605 = vsel %vm1179, %v1599, 0
        %v1607 = vsel %vm1182, %v1604, 0
        %v1609 = vsel %vm1182, %v1603, 0
        %1611 = vmatprep.subr.mxu0 0.0
        %1612 = vmatpush1.msra.mxu0 0.0
        %1613 = vmatprep.subr.mxu0 0.0
        %1614 = vmatpush1.msra.mxu0 0.0
        %1615 = vmatprep.subr.mxu0 0.0
        %1616 = vmatpush1.msra.mxu0 0.0
        %1617 = vmatprep.subr.mxu0 0.0
        %1618 = vmatpush1.msra.mxu0 0.0
        %1619 = vmatprep.subr.mxu0 0.0
        %1620 = vmatpush1.msra.mxu0 0.0
        %1621 = vmatprep.subr.mxu0 0.0
        %1622 = vmatpush1.msra.mxu0 0.0
        %1623 = vmatprep.subr.mxu0 0.0
        %1624 = vmatpush1.msra.mxu0 0.0
        %1625 = vmatprep.subr.mxu0 0.0
        %1626 = vmatpush1.msra.mxu0 0.0
        %1627 = vmatprep.subr.mxu0 0.0
        %1628 = vmatpush1.msra.mxu0 0.0
        %1629 = vmatprep.subr.mxu0 0.0
        %1630 = vmatpush1.msra.mxu0 0.0
        %1631 = vmatprep.subr.mxu0 0.0
        %1632 = vmatpush1.msra.mxu0 0.0
        %1633 = vmatprep.subr.mxu0 0.0
        %1634 = vmatpush1.msra.mxu0 0.0
        %1635 = vmatprep.subr.mxu0 0.0
        %1636 = vmatpush1.msra.mxu0 0.0
        %1637 = vmatprep.subr.mxu0 0.0
        %1638 = vmatpush1.msra.mxu0 0.0
        %1639 = vmatprep.subr.mxu0 0.0
        %1640 = vmatpush1.msra.mxu0 0.0
        %1641 = vmatprep.subr.mxu0 %v1609
        %1642 = vmatpush1.msra.mxu0 %v1607
        %1643 = vmatprep.subr.mxu0 0.0
        %1644 = vmatpush2.msra.mxu0 0.0
        %1645 = vmatprep.subr.mxu0 0.0
        %1646 = vmatpush2.msra.mxu0 0.0
        %1647 = vmatprep.subr.mxu0 0.0
        %1648 = vmatpush2.msra.mxu0 0.0
        %1649 = vmatprep.subr.mxu0 0.0
        %1650 = vmatpush2.msra.mxu0 0.0
        %1651 = vmatprep.subr.mxu0 0.0
        %1652 = vmatpush2.msra.mxu0 0.0
        %1653 = vmatprep.subr.mxu0 0.0
        %1654 = vmatpush2.msra.mxu0 0.0
        %1655 = vmatprep.subr.mxu0 0.0
        %1656 = vmatpush2.msra.mxu0 0.0
        %1657 = vmatprep.subr.mxu0 0.0
        %1658 = vmatpush2.msra.mxu0 0.0
        %1659 = vmatprep.subr.mxu0 0.0
        %1660 = vmatpush2.msra.mxu0 0.0
        %1661 = vmatprep.subr.mxu0 0.0
        %1662 = vmatpush2.msra.mxu0 0.0
        %1663 = vmatprep.subr.mxu0 0.0
        %1664 = vmatpush2.msra.mxu0 0.0
        %1665 = vmatprep.subr.mxu0 0.0
        %1666 = vmatpush2.msra.mxu0 0.0
        %1667 = vmatprep.subr.mxu0 0.0
        %1668 = vmatpush2.msra.mxu0 0.0
        %1669 = vmatprep.subr.mxu0 0.0
        %1670 = vmatpush2.msra.mxu0 0.0
        %1671 = vmatprep.subr.mxu0 0.0
        %1672 = vmatpush2.msra.mxu0 0.0
        %1673 = vmatprep.subr.mxu0 0.0
        %1674 = vmatpush2.msra.mxu0 0.0
        %1675 = vmatprep.mubr.f32.mxu0 0.0
        %1676 = vmatmul.mubr.f32.gmra.mxu0 %v1605
        %v1677 = vpop.f32.mrf.mxu0
        %v1678 = vadd.f32 0.0, %v1677
        %v1679 = vpop.f32.mrf.mxu0
        %v1680 = vadd.f32 0.0, %v1679
        %1681 = vdwg.mxu0
        %v1682 = vadd.f32 %v1596, %v1678
        %v1683 = vadd.f32 %v1597, %v1680
        %s1684 = scalar_lea.vmem %s5, 12
        %v1685 = vld [vmem:[%s1684] sm:$0xf]
        %1686 = vrot.lane.b32.xlu0 %v1168, 112
        %v1687 = vpop.permute.xlu0 %1686
        %1688 = vrot.lane.b32.xlu0 %v1169, 112
        %v1689 = vpop.permute.xlu0 %1688
        %v1690 = vsel %vm848, %v1687, %v1689
        %v1692 = vsel %vm1179, %v1685, 0
        %v1694 = vsel %vm1182, %v1690, 0
        %v1696 = vsel %vm1182, %v1689, 0
        %1698 = vmatprep.subr.mxu0 0.0
        %1699 = vmatpush1.msra.mxu0 0.0
        %1700 = vmatprep.subr.mxu0 0.0
        %1701 = vmatpush1.msra.mxu0 0.0
        %1702 = vmatprep.subr.mxu0 0.0
        %1703 = vmatpush1.msra.mxu0 0.0
        %1704 = vmatprep.subr.mxu0 0.0
        %1705 = vmatpush1.msra.mxu0 0.0
        %1706 = vmatprep.subr.mxu0 0.0
        %1707 = vmatpush1.msra.mxu0 0.0
        %1708 = vmatprep.subr.mxu0 0.0
        %1709 = vmatpush1.msra.mxu0 0.0
        %1710 = vmatprep.subr.mxu0 0.0
        %1711 = vmatpush1.msra.mxu0 0.0
        %1712 = vmatprep.subr.mxu0 0.0
        %1713 = vmatpush1.msra.mxu0 0.0
        %1714 = vmatprep.subr.mxu0 0.0
        %1715 = vmatpush1.msra.mxu0 0.0
        %1716 = vmatprep.subr.mxu0 0.0
        %1717 = vmatpush1.msra.mxu0 0.0
        %1718 = vmatprep.subr.mxu0 0.0
        %1719 = vmatpush1.msra.mxu0 0.0
        %1720 = vmatprep.subr.mxu0 0.0
        %1721 = vmatpush1.msra.mxu0 0.0
        %1722 = vmatprep.subr.mxu0 0.0
        %1723 = vmatpush1.msra.mxu0 0.0
        %1724 = vmatprep.subr.mxu0 0.0
        %1725 = vmatpush1.msra.mxu0 0.0
        %1726 = vmatprep.subr.mxu0 0.0
        %1727 = vmatpush1.msra.mxu0 0.0
        %1728 = vmatprep.subr.mxu0 %v1696
        %1729 = vmatpush1.msra.mxu0 %v1694
        %1730 = vmatprep.subr.mxu0 0.0
        %1731 = vmatpush2.msra.mxu0 0.0
        %1732 = vmatprep.subr.mxu0 0.0
        %1733 = vmatpush2.msra.mxu0 0.0
        %1734 = vmatprep.subr.mxu0 0.0
        %1735 = vmatpush2.msra.mxu0 0.0
        %1736 = vmatprep.subr.mxu0 0.0
        %1737 = vmatpush2.msra.mxu0 0.0
        %1738 = vmatprep.subr.mxu0 0.0
        %1739 = vmatpush2.msra.mxu0 0.0
        %1740 = vmatprep.subr.mxu0 0.0
        %1741 = vmatpush2.msra.mxu0 0.0
        %1742 = vmatprep.subr.mxu0 0.0
        %1743 = vmatpush2.msra.mxu0 0.0
        %1744 = vmatprep.subr.mxu0 0.0
        %1745 = vmatpush2.msra.mxu0 0.0
        %1746 = vmatprep.subr.mxu0 0.0
        %1747 = vmatpush2.msra.mxu0 0.0
        %1748 = vmatprep.subr.mxu0 0.0
        %1749 = vmatpush2.msra.mxu0 0.0
        %1750 = vmatprep.subr.mxu0 0.0
        %1751 = vmatpush2.msra.mxu0 0.0
        %1752 = vmatprep.subr.mxu0 0.0
        %1753 = vmatpush2.msra.mxu0 0.0
        %1754 = vmatprep.subr.mxu0 0.0
        %1755 = vmatpush2.msra.mxu0 0.0
        %1756 = vmatprep.subr.mxu0 0.0
        %1757 = vmatpush2.msra.mxu0 0.0
        %1758 = vmatprep.subr.mxu0 0.0
        %1759 = vmatpush2.msra.mxu0 0.0
        %1760 = vmatprep.subr.mxu0 0.0
        %1761 = vmatpush2.msra.mxu0 0.0
        %1762 = vmatprep.mubr.f32.mxu0 0.0
        %1763 = vmatmul.mubr.f32.gmra.mxu0 %v1692
        %v1764 = vpop.f32.mrf.mxu0
        %v1765 = vadd.f32 0.0, %v1764
        %v1766 = vpop.f32.mrf.mxu0
        %v1767 = vadd.f32 0.0, %v1766
        %1768 = vdwg.mxu0
        %v1769 = vadd.f32 %v1682, %v1765
        %v1770 = vadd.f32 %v1683, %v1767
        %1771 = vrot.lane.b32.xlu0 %v1685, 124
        %v1772 = vpop.permute.xlu0 %1771
        %1773 = vrot.lane.b32.xlu0 %v1171, 112
        %v1774 = vpop.permute.xlu0 %1773
        %1775 = vrot.lane.b32.xlu0 %v1178, 112
        %v1776 = vpop.permute.xlu0 %1775
        %v1777 = vsel %vm848, %v1774, %v1776
        %v1778 = vsel %vm1179, %v1772, 0
        %v1780 = vsel %vm1182, %v1777, 0
        %v1782 = vsel %vm1182, %v1776, 0
        %1784 = vmatprep.subr.mxu0 0.0
        %1785 = vmatpush1.msra.mxu0 0.0
        %1786 = vmatprep.subr.mxu0 0.0
        %1787 = vmatpush1.msra.mxu0 0.0
        %1788 = vmatprep.subr.mxu0 0.0
        %1789 = vmatpush1.msra.mxu0 0.0
        %1790 = vmatprep.subr.mxu0 0.0
        %1791 = vmatpush1.msra.mxu0 0.0
        %1792 = vmatprep.subr.mxu0 0.0
        %1793 = vmatpush1.msra.mxu0 0.0
        %1794 = vmatprep.subr.mxu0 0.0
        %1795 = vmatpush1.msra.mxu0 0.0
        %1796 = vmatprep.subr.mxu0 0.0
        %1797 = vmatpush1.msra.mxu0 0.0
        %1798 = vmatprep.subr.mxu0 0.0
        %1799 = vmatpush1.msra.mxu0 0.0
        %1800 = vmatprep.subr.mxu0 0.0
        %1801 = vmatpush1.msra.mxu0 0.0
        %1802 = vmatprep.subr.mxu0 0.0
        %1803 = vmatpush1.msra.mxu0 0.0
        %1804 = vmatprep.subr.mxu0 0.0
        %1805 = vmatpush1.msra.mxu0 0.0
        %1806 = vmatprep.subr.mxu0 0.0
        %1807 = vmatpush1.msra.mxu0 0.0
        %1808 = vmatprep.subr.mxu0 0.0
        %1809 = vmatpush1.msra.mxu0 0.0
        %1810 = vmatprep.subr.mxu0 0.0
        %1811 = vmatpush1.msra.mxu0 0.0
        %1812 = vmatprep.subr.mxu0 0.0
        %1813 = vmatpush1.msra.mxu0 0.0
        %1814 = vmatprep.subr.mxu0 %v1782
        %1815 = vmatpush1.msra.mxu0 %v1780
        %1816 = vmatprep.subr.mxu0 0.0
        %1817 = vmatpush2.msra.mxu0 0.0
        %1818 = vmatprep.subr.mxu0 0.0
        %1819 = vmatpush2.msra.mxu0 0.0
        %1820 = vmatprep.subr.mxu0 0.0
        %1821 = vmatpush2.msra.mxu0 0.0
        %1822 = vmatprep.subr.mxu0 0.0
        %1823 = vmatpush2.msra.mxu0 0.0
        %1824 = vmatprep.subr.mxu0 0.0
        %1825 = vmatpush2.msra.mxu0 0.0
        %1826 = vmatprep.subr.mxu0 0.0
        %1827 = vmatpush2.msra.mxu0 0.0
        %1828 = vmatprep.subr.mxu0 0.0
        %1829 = vmatpush2.msra.mxu0 0.0
        %1830 = vmatprep.subr.mxu0 0.0
        %1831 = vmatpush2.msra.mxu0 0.0
        %1832 = vmatprep.subr.mxu0 0.0
        %1833 = vmatpush2.msra.mxu0 0.0
        %1834 = vmatprep.subr.mxu0 0.0
        %1835 = vmatpush2.msra.mxu0 0.0
        %1836 = vmatprep.subr.mxu0 0.0
        %1837 = vmatpush2.msra.mxu0 0.0
        %1838 = vmatprep.subr.mxu0 0.0
        %1839 = vmatpush2.msra.mxu0 0.0
        %1840 = vmatprep.subr.mxu0 0.0
        %1841 = vmatpush2.msra.mxu0 0.0
        %1842 = vmatprep.subr.mxu0 0.0
        %1843 = vmatpush2.msra.mxu0 0.0
        %1844 = vmatprep.subr.mxu0 0.0
        %1845 = vmatpush2.msra.mxu0 0.0
        %1846 = vmatprep.subr.mxu0 0.0
        %1847 = vmatpush2.msra.mxu0 0.0
        %1848 = vmatprep.mubr.f32.mxu0 0.0
        %1849 = vmatmul.mubr.f32.gmra.mxu0 %v1778
        %v1850 = vpop.f32.mrf.mxu0
        %v1851 = vadd.f32 0.0, %v1850
        %v1852 = vpop.f32.mrf.mxu0
        %v1853 = vadd.f32 0.0, %v1852
        %1854 = vdwg.mxu0
        %v1855 = vadd.f32 %v1769, %v1851
        %v1856 = vadd.f32 %v1770, %v1853
        %s1857 = scalar_lea.vmem %s5, 16
        %v1858 = vld [vmem:[%s1857] sm:$0xf]
        %1859 = vrot.lane.b32.xlu0 %v1168, 111
        %v1860 = vpop.permute.xlu0 %1859
        %1861 = vrot.lane.b32.xlu0 %v1169, 111
        %v1862 = vpop.permute.xlu0 %1861
        %v1863 = vsel %vm1009, %v1860, %v1862
        %v1865 = vsel %vm1179, %v1858, 0
        %v1867 = vsel %vm1182, %v1863, 0
        %v1869 = vsel %vm1182, %v1862, 0
        %1871 = vmatprep.subr.mxu0 0.0
        %1872 = vmatpush1.msra.mxu0 0.0
        %1873 = vmatprep.subr.mxu0 0.0
        %1874 = vmatpush1.msra.mxu0 0.0
        %1875 = vmatprep.subr.mxu0 0.0
        %1876 = vmatpush1.msra.mxu0 0.0
        %1877 = vmatprep.subr.mxu0 0.0
        %1878 = vmatpush1.msra.mxu0 0.0
        %1879 = vmatprep.subr.mxu0 0.0
        %1880 = vmatpush1.msra.mxu0 0.0
        %1881 = vmatprep.subr.mxu0 0.0
        %1882 = vmatpush1.msra.mxu0 0.0
        %1883 = vmatprep.subr.mxu0 0.0
        %1884 = vmatpush1.msra.mxu0 0.0
        %1885 = vmatprep.subr.mxu0 0.0
        %1886 = vmatpush1.msra.mxu0 0.0
        %1887 = vmatprep.subr.mxu0 0.0
        %1888 = vmatpush1.msra.mxu0 0.0
        %1889 = vmatprep.subr.mxu0 0.0
        %1890 = vmatpush1.msra.mxu0 0.0
        %1891 = vmatprep.subr.mxu0 0.0
        %1892 = vmatpush1.msra.mxu0 0.0
        %1893 = vmatprep.subr.mxu0 0.0
        %1894 = vmatpush1.msra.mxu0 0.0
        %1895 = vmatprep.subr.mxu0 0.0
        %1896 = vmatpush1.msra.mxu0 0.0
        %1897 = vmatprep.subr.mxu0 0.0
        %1898 = vmatpush1.msra.mxu0 0.0
        %1899 = vmatprep.subr.mxu0 0.0
        %1900 = vmatpush1.msra.mxu0 0.0
        %1901 = vmatprep.subr.mxu0 %v1869
        %1902 = vmatpush1.msra.mxu0 %v1867
        %1903 = vmatprep.subr.mxu0 0.0
        %1904 = vmatpush2.msra.mxu0 0.0
        %1905 = vmatprep.subr.mxu0 0.0
        %1906 = vmatpush2.msra.mxu0 0.0
        %1907 = vmatprep.subr.mxu0 0.0
        %1908 = vmatpush2.msra.mxu0 0.0
        %1909 = vmatprep.subr.mxu0 0.0
        %1910 = vmatpush2.msra.mxu0 0.0
        %1911 = vmatprep.subr.mxu0 0.0
        %1912 = vmatpush2.msra.mxu0 0.0
        %1913 = vmatprep.subr.mxu0 0.0
        %1914 = vmatpush2.msra.mxu0 0.0
        %1915 = vmatprep.subr.mxu0 0.0
        %1916 = vmatpush2.msra.mxu0 0.0
        %1917 = vmatprep.subr.mxu0 0.0
        %1918 = vmatpush2.msra.mxu0 0.0
        %1919 = vmatprep.subr.mxu0 0.0
        %1920 = vmatpush2.msra.mxu0 0.0
        %1921 = vmatprep.subr.mxu0 0.0
        %1922 = vmatpush2.msra.mxu0 0.0
        %1923 = vmatprep.subr.mxu0 0.0
        %1924 = vmatpush2.msra.mxu0 0.0
        %1925 = vmatprep.subr.mxu0 0.0
        %1926 = vmatpush2.msra.mxu0 0.0
        %1927 = vmatprep.subr.mxu0 0.0
        %1928 = vmatpush2.msra.mxu0 0.0
        %1929 = vmatprep.subr.mxu0 0.0
        %1930 = vmatpush2.msra.mxu0 0.0
        %1931 = vmatprep.subr.mxu0 0.0
        %1932 = vmatpush2.msra.mxu0 0.0
        %1933 = vmatprep.subr.mxu0 0.0
        %1934 = vmatpush2.msra.mxu0 0.0
        %1935 = vmatprep.mubr.f32.mxu0 0.0
        %1936 = vmatmul.mubr.f32.gmra.mxu0 %v1865
        %v1937 = vpop.f32.mrf.mxu0
        %v1938 = vadd.f32 0.0, %v1937
        %v1939 = vpop.f32.mrf.mxu0
        %v1940 = vadd.f32 0.0, %v1939
        %1941 = vdwg.mxu0
        %v1942 = vadd.f32 %v1855, %v1938
        %v1943 = vadd.f32 %v1856, %v1940
        %1944 = vrot.lane.b32.xlu0 %v1858, 124
        %v1945 = vpop.permute.xlu0 %1944
        %1946 = vrot.lane.b32.xlu0 %v1171, 111
        %v1947 = vpop.permute.xlu0 %1946
        %1948 = vrot.lane.b32.xlu0 %v1178, 111
        %v1949 = vpop.permute.xlu0 %1948
        %v1950 = vsel %vm1009, %v1947, %v1949
        %v1951 = vsel %vm1179, %v1945, 0
        %v1953 = vsel %vm1182, %v1950, 0
        %v1955 = vsel %vm1182, %v1949, 0
        %1957 = vmatprep.subr.mxu0 0.0
        %1958 = vmatpush1.msra.mxu0 0.0
        %1959 = vmatprep.subr.mxu0 0.0
        %1960 = vmatpush1.msra.mxu0 0.0
        %1961 = vmatprep.subr.mxu0 0.0
        %1962 = vmatpush1.msra.mxu0 0.0
        %1963 = vmatprep.subr.mxu0 0.0
        %1964 = vmatpush1.msra.mxu0 0.0
        %1965 = vmatprep.subr.mxu0 0.0
        %1966 = vmatpush1.msra.mxu0 0.0
        %1967 = vmatprep.subr.mxu0 0.0
        %1968 = vmatpush1.msra.mxu0 0.0
        %1969 = vmatprep.subr.mxu0 0.0
        %1970 = vmatpush1.msra.mxu0 0.0
        %1971 = vmatprep.subr.mxu0 0.0
        %1972 = vmatpush1.msra.mxu0 0.0
        %1973 = vmatprep.subr.mxu0 0.0
        %1974 = vmatpush1.msra.mxu0 0.0
        %1975 = vmatprep.subr.mxu0 0.0
        %1976 = vmatpush1.msra.mxu0 0.0
        %1977 = vmatprep.subr.mxu0 0.0
        %1978 = vmatpush1.msra.mxu0 0.0
        %1979 = vmatprep.subr.mxu0 0.0
        %1980 = vmatpush1.msra.mxu0 0.0
        %1981 = vmatprep.subr.mxu0 0.0
        %1982 = vmatpush1.msra.mxu0 0.0
        %1983 = vmatprep.subr.mxu0 0.0
        %1984 = vmatpush1.msra.mxu0 0.0
        %1985 = vmatprep.subr.mxu0 0.0
        %1986 = vmatpush1.msra.mxu0 0.0
        %1987 = vmatprep.subr.mxu0 %v1955
        %1988 = vmatpush1.msra.mxu0 %v1953
        %1989 = vmatprep.subr.mxu0 0.0
        %1990 = vmatpush2.msra.mxu0 0.0
        %1991 = vmatprep.subr.mxu0 0.0
        %1992 = vmatpush2.msra.mxu0 0.0
        %1993 = vmatprep.subr.mxu0 0.0
        %1994 = vmatpush2.msra.mxu0 0.0
        %1995 = vmatprep.subr.mxu0 0.0
        %1996 = vmatpush2.msra.mxu0 0.0
        %1997 = vmatprep.subr.mxu0 0.0
        %1998 = vmatpush2.msra.mxu0 0.0
        %1999 = vmatprep.subr.mxu0 0.0
        %2000 = vmatpush2.msra.mxu0 0.0
        %2001 = vmatprep.subr.mxu0 0.0
        %2002 = vmatpush2.msra.mxu0 0.0
        %2003 = vmatprep.subr.mxu0 0.0
        %2004 = vmatpush2.msra.mxu0 0.0
        %2005 = vmatprep.subr.mxu0 0.0
        %2006 = vmatpush2.msra.mxu0 0.0
        %2007 = vmatprep.subr.mxu0 0.0
        %2008 = vmatpush2.msra.mxu0 0.0
        %2009 = vmatprep.subr.mxu0 0.0
        %2010 = vmatpush2.msra.mxu0 0.0
        %2011 = vmatprep.subr.mxu0 0.0
        %2012 = vmatpush2.msra.mxu0 0.0
        %2013 = vmatprep.subr.mxu0 0.0
        %2014 = vmatpush2.msra.mxu0 0.0
        %2015 = vmatprep.subr.mxu0 0.0
        %2016 = vmatpush2.msra.mxu0 0.0
        %2017 = vmatprep.subr.mxu0 0.0
        %2018 = vmatpush2.msra.mxu0 0.0
        %2019 = vmatprep.subr.mxu0 0.0
        %2020 = vmatpush2.msra.mxu0 0.0
        %2021 = vmatprep.mubr.f32.mxu0 0.0
        %2022 = vmatmul.mubr.f32.gmra.mxu0 %v1951
        %v2023 = vpop.f32.mrf.mxu0
        %v2024 = vadd.f32 0.0, %v2023
        %v2025 = vpop.f32.mrf.mxu0
        %v2026 = vadd.f32 0.0, %v2025
        %2027 = vdwg.mxu0
        %v2028 = vadd.f32 %v1942, %v2024
        %v2029 = vadd.f32 %v1943, %v2026
        %s2030 = scalar_lea.vmem %s5, 20
        %v2031 = vld [vmem:[%s2030] sm:$0xf]
        %2032 = vrot.lane.b32.xlu0 %v1168, 110
        %v2033 = vpop.permute.xlu0 %2032
        %2034 = vrot.lane.b32.xlu0 %v1169, 110
        %v2035 = vpop.permute.xlu0 %2034
        %vm2036 = vcmask 900096
        %v2037 = vsel %vm2036, %v2033, %v2035
        %v2039 = vsel %vm1179, %v2031, 0
        %v2041 = vsel %vm1182, %v2037, 0
        %v2043 = vsel %vm1182, %v2035, 0
        %2045 = vmatprep.subr.mxu0 0.0
        %2046 = vmatpush1.msra.mxu0 0.0
        %2047 = vmatprep.subr.mxu0 0.0
        %2048 = vmatpush1.msra.mxu0 0.0
        %2049 = vmatprep.subr.mxu0 0.0
        %2050 = vmatpush1.msra.mxu0 0.0
        %2051 = vmatprep.subr.mxu0 0.0
        %2052 = vmatpush1.msra.mxu0 0.0
        %2053 = vmatprep.subr.mxu0 0.0
        %2054 = vmatpush1.msra.mxu0 0.0
        %2055 = vmatprep.subr.mxu0 0.0
        %2056 = vmatpush1.msra.mxu0 0.0
        %2057 = vmatprep.subr.mxu0 0.0
        %2058 = vmatpush1.msra.mxu0 0.0
        %2059 = vmatprep.subr.mxu0 0.0
        %2060 = vmatpush1.msra.mxu0 0.0
        %2061 = vmatprep.subr.mxu0 0.0
        %2062 = vmatpush1.msra.mxu0 0.0
        %2063 = vmatprep.subr.mxu0 0.0
        %2064 = vmatpush1.msra.mxu0 0.0
        %2065 = vmatprep.subr.mxu0 0.0
        %2066 = vmatpush1.msra.mxu0 0.0
        %2067 = vmatprep.subr.mxu0 0.0
        %2068 = vmatpush1.msra.mxu0 0.0
        %2069 = vmatprep.subr.mxu0 0.0
        %2070 = vmatpush1.msra.mxu0 0.0
        %2071 = vmatprep.subr.mxu0 0.0
        %2072 = vmatpush1.msra.mxu0 0.0
        %2073 = vmatprep.subr.mxu0 0.0
        %2074 = vmatpush1.msra.mxu0 0.0
        %2075 = vmatprep.subr.mxu0 %v2043
        %2076 = vmatpush1.msra.mxu0 %v2041
        %2077 = vmatprep.subr.mxu0 0.0
        %2078 = vmatpush2.msra.mxu0 0.0
        %2079 = vmatprep.subr.mxu0 0.0
        %2080 = vmatpush2.msra.mxu0 0.0
        %2081 = vmatprep.subr.mxu0 0.0
        %2082 = vmatpush2.msra.mxu0 0.0
        %2083 = vmatprep.subr.mxu0 0.0
        %2084 = vmatpush2.msra.mxu0 0.0
        %2085 = vmatprep.subr.mxu0 0.0
        %2086 = vmatpush2.msra.mxu0 0.0
        %2087 = vmatprep.subr.mxu0 0.0
        %2088 = vmatpush2.msra.mxu0 0.0
        %2089 = vmatprep.subr.mxu0 0.0
        %2090 = vmatpush2.msra.mxu0 0.0
        %2091 = vmatprep.subr.mxu0 0.0
        %2092 = vmatpush2.msra.mxu0 0.0
        %2093 = vmatprep.subr.mxu0 0.0
        %2094 = vmatpush2.msra.mxu0 0.0
        %2095 = vmatprep.subr.mxu0 0.0
        %2096 = vmatpush2.msra.mxu0 0.0
        %2097 = vmatprep.subr.mxu0 0.0
        %2098 = vmatpush2.msra.mxu0 0.0
        %2099 = vmatprep.subr.mxu0 0.0
        %2100 = vmatpush2.msra.mxu0 0.0
        %2101 = vmatprep.subr.mxu0 0.0
        %2102 = vmatpush2.msra.mxu0 0.0
        %2103 = vmatprep.subr.mxu0 0.0
        %2104 = vmatpush2.msra.mxu0 0.0
        %2105 = vmatprep.subr.mxu0 0.0
        %2106 = vmatpush2.msra.mxu0 0.0
        %2107 = vmatprep.subr.mxu0 0.0
        %2108 = vmatpush2.msra.mxu0 0.0
        %2109 = vmatprep.mubr.f32.mxu0 0.0
        %2110 = vmatmul.mubr.f32.gmra.mxu0 %v2039
        %v2111 = vpop.f32.mrf.mxu0
        %v2112 = vadd.f32 0.0, %v2111
        %v2113 = vpop.f32.mrf.mxu0
        %v2114 = vadd.f32 0.0, %v2113
        %2115 = vdwg.mxu0
        %v2116 = vadd.f32 %v2028, %v2112
        %v2117 = vadd.f32 %v2029, %v2114
        %2118 = vrot.lane.b32.xlu0 %v2031, 124
        %v2119 = vpop.permute.xlu0 %2118
        %2120 = vrot.lane.b32.xlu0 %v1171, 110
        %v2121 = vpop.permute.xlu0 %2120
        %2122 = vrot.lane.b32.xlu0 %v1178, 110
        %v2123 = vpop.permute.xlu0 %2122
        %v2124 = vsel %vm2036, %v2121, %v2123
        %v2125 = vsel %vm1179, %v2119, 0
        %v2127 = vsel %vm1182, %v2124, 0
        %v2129 = vsel %vm1182, %v2123, 0
        %2131 = vmatprep.subr.mxu0 0.0
        %2132 = vmatpush1.msra.mxu0 0.0
        %2133 = vmatprep.subr.mxu0 0.0
        %2134 = vmatpush1.msra.mxu0 0.0
        %2135 = vmatprep.subr.mxu0 0.0
        %2136 = vmatpush1.msra.mxu0 0.0
        %2137 = vmatprep.subr.mxu0 0.0
        %2138 = vmatpush1.msra.mxu0 0.0
        %2139 = vmatprep.subr.mxu0 0.0
        %2140 = vmatpush1.msra.mxu0 0.0
        %2141 = vmatprep.subr.mxu0 0.0
        %2142 = vmatpush1.msra.mxu0 0.0
        %2143 = vmatprep.subr.mxu0 0.0
        %2144 = vmatpush1.msra.mxu0 0.0
        %2145 = vmatprep.subr.mxu0 0.0
        %2146 = vmatpush1.msra.mxu0 0.0
        %2147 = vmatprep.subr.mxu0 0.0
        %2148 = vmatpush1.msra.mxu0 0.0
        %2149 = vmatprep.subr.mxu0 0.0
        %2150 = vmatpush1.msra.mxu0 0.0
        %2151 = vmatprep.subr.mxu0 0.0
        %2152 = vmatpush1.msra.mxu0 0.0
        %2153 = vmatprep.subr.mxu0 0.0
        %2154 = vmatpush1.msra.mxu0 0.0
        %2155 = vmatprep.subr.mxu0 0.0
        %2156 = vmatpush1.msra.mxu0 0.0
        %2157 = vmatprep.subr.mxu0 0.0
        %2158 = vmatpush1.msra.mxu0 0.0
        %2159 = vmatprep.subr.mxu0 0.0
        %2160 = vmatpush1.msra.mxu0 0.0
        %2161 = vmatprep.subr.mxu0 %v2129
        %2162 = vmatpush1.msra.mxu0 %v2127
        %2163 = vmatprep.subr.mxu0 0.0
        %2164 = vmatpush2.msra.mxu0 0.0
        %2165 = vmatprep.subr.mxu0 0.0
        %2166 = vmatpush2.msra.mxu0 0.0
        %2167 = vmatprep.subr.mxu0 0.0
        %2168 = vmatpush2.msra.mxu0 0.0
        %2169 = vmatprep.subr.mxu0 0.0
        %2170 = vmatpush2.msra.mxu0 0.0
        %2171 = vmatprep.subr.mxu0 0.0
        %2172 = vmatpush2.msra.mxu0 0.0
        %2173 = vmatprep.subr.mxu0 0.0
        %2174 = vmatpush2.msra.mxu0 0.0
        %2175 = vmatprep.subr.mxu0 0.0
        %2176 = vmatpush2.msra.mxu0 0.0
        %2177 = vmatprep.subr.mxu0 0.0
        %2178 = vmatpush2.msra.mxu0 0.0
        %2179 = vmatprep.subr.mxu0 0.0
        %2180 = vmatpush2.msra.mxu0 0.0
        %2181 = vmatprep.subr.mxu0 0.0
        %2182 = vmatpush2.msra.mxu0 0.0
        %2183 = vmatprep.subr.mxu0 0.0
        %2184 = vmatpush2.msra.mxu0 0.0
        %2185 = vmatprep.subr.mxu0 0.0
        %2186 = vmatpush2.msra.mxu0 0.0
        %2187 = vmatprep.subr.mxu0 0.0
        %2188 = vmatpush2.msra.mxu0 0.0
        %2189 = vmatprep.subr.mxu0 0.0
        %2190 = vmatpush2.msra.mxu0 0.0
        %2191 = vmatprep.subr.mxu0 0.0
        %2192 = vmatpush2.msra.mxu0 0.0
        %2193 = vmatprep.subr.mxu0 0.0
        %2194 = vmatpush2.msra.mxu0 0.0
        %2195 = vmatprep.mubr.f32.mxu0 0.0
        %2196 = vmatmul.mubr.f32.gmra.mxu0 %v2125
        %v2197 = vpop.f32.mrf.mxu0
        %v2198 = vadd.f32 0.0, %v2197
        %v2199 = vpop.f32.mrf.mxu0
        %v2200 = vadd.f32 0.0, %v2199
        %2201 = vdwg.mxu0
        %v2202 = vadd.f32 %v2116, %v2198
        %v2203 = vadd.f32 %v2117, %v2200
        %s2204 = scalar_lea.vmem %s5, 24
        %v2205 = vld [vmem:[%s2204] sm:$0xf]
        %2206 = vrot.lane.b32.xlu0 %v1168, 96
        %v2207 = vpop.permute.xlu0 %2206
        %2208 = vrot.lane.b32.xlu0 %v1169, 96
        %v2209 = vpop.permute.xlu0 %2208
        %vm2210 = vcmask 785408
        %v2211 = vsel %vm2210, %v2207, %v2209
        %v2213 = vsel %vm1179, %v2205, 0
        %v2215 = vsel %vm1182, %v2211, 0
        %v2217 = vsel %vm1182, %v2209, 0
        %2219 = vmatprep.subr.mxu0 0.0
        %2220 = vmatpush1.msra.mxu0 0.0
        %2221 = vmatprep.subr.mxu0 0.0
        %2222 = vmatpush1.msra.mxu0 0.0
        %2223 = vmatprep.subr.mxu0 0.0
        %2224 = vmatpush1.msra.mxu0 0.0
        %2225 = vmatprep.subr.mxu0 0.0
        %2226 = vmatpush1.msra.mxu0 0.0
        %2227 = vmatprep.subr.mxu0 0.0
        %2228 = vmatpush1.msra.mxu0 0.0
        %2229 = vmatprep.subr.mxu0 0.0
        %2230 = vmatpush1.msra.mxu0 0.0
        %2231 = vmatprep.subr.mxu0 0.0
        %2232 = vmatpush1.msra.mxu0 0.0
        %2233 = vmatprep.subr.mxu0 0.0
        %2234 = vmatpush1.msra.mxu0 0.0
        %2235 = vmatprep.subr.mxu0 0.0
        %2236 = vmatpush1.msra.mxu0 0.0
        %2237 = vmatprep.subr.mxu0 0.0
        %2238 = vmatpush1.msra.mxu0 0.0
        %2239 = vmatprep.subr.mxu0 0.0
        %2240 = vmatpush1.msra.mxu0 0.0
        %2241 = vmatprep.subr.mxu0 0.0
        %2242 = vmatpush1.msra.mxu0 0.0
        %2243 = vmatprep.subr.mxu0 0.0
        %2244 = vmatpush1.msra.mxu0 0.0
        %2245 = vmatprep.subr.mxu0 0.0
        %2246 = vmatpush1.msra.mxu0 0.0
        %2247 = vmatprep.subr.mxu0 0.0
        %2248 = vmatpush1.msra.mxu0 0.0
        %2249 = vmatprep.subr.mxu0 %v2217
        %2250 = vmatpush1.msra.mxu0 %v2215
        %2251 = vmatprep.subr.mxu0 0.0
        %2252 = vmatpush2.msra.mxu0 0.0
        %2253 = vmatprep.subr.mxu0 0.0
        %2254 = vmatpush2.msra.mxu0 0.0
        %2255 = vmatprep.subr.mxu0 0.0
        %2256 = vmatpush2.msra.mxu0 0.0
        %2257 = vmatprep.subr.mxu0 0.0
        %2258 = vmatpush2.msra.mxu0 0.0
        %2259 = vmatprep.subr.mxu0 0.0
        %2260 = vmatpush2.msra.mxu0 0.0
        %2261 = vmatprep.subr.mxu0 0.0
        %2262 = vmatpush2.msra.mxu0 0.0
        %2263 = vmatprep.subr.mxu0 0.0
        %2264 = vmatpush2.msra.mxu0 0.0
        %2265 = vmatprep.subr.mxu0 0.0
        %2266 = vmatpush2.msra.mxu0 0.0
        %2267 = vmatprep.subr.mxu0 0.0
        %2268 = vmatpush2.msra.mxu0 0.0
        %2269 = vmatprep.subr.mxu0 0.0
        %2270 = vmatpush2.msra.mxu0 0.0
        %2271 = vmatprep.subr.mxu0 0.0
        %2272 = vmatpush2.msra.mxu0 0.0
        %2273 = vmatprep.subr.mxu0 0.0
        %2274 = vmatpush2.msra.mxu0 0.0
        %2275 = vmatprep.subr.mxu0 0.0
        %2276 = vmatpush2.msra.mxu0 0.0
        %2277 = vmatprep.subr.mxu0 0.0
        %2278 = vmatpush2.msra.mxu0 0.0
        %2279 = vmatprep.subr.mxu0 0.0
        %2280 = vmatpush2.msra.mxu0 0.0
        %2281 = vmatprep.subr.mxu0 0.0
        %2282 = vmatpush2.msra.mxu0 0.0
        %2283 = vmatprep.mubr.f32.mxu0 0.0
        %2284 = vmatmul.mubr.f32.gmra.mxu0 %v2213
        %v2285 = vpop.f32.mrf.mxu0
        %v2286 = vadd.f32 0.0, %v2285
        %v2287 = vpop.f32.mrf.mxu0
        %v2288 = vadd.f32 0.0, %v2287
        %2289 = vdwg.mxu0
        %v2290 = vadd.f32 %v2202, %v2286
        %v2291 = vadd.f32 %v2203, %v2288
        %2292 = vrot.lane.b32.xlu0 %v2205, 124
        %v2293 = vpop.permute.xlu0 %2292
        %2294 = vrot.lane.b32.xlu0 %v1171, 96
        %v2295 = vpop.permute.xlu0 %2294
        %2296 = vrot.lane.b32.xlu0 %v1178, 96
        %v2297 = vpop.permute.xlu0 %2296
        %v2298 = vsel %vm2210, %v2295, %v2297
        %v2299 = vsel %vm1179, %v2293, 0
        %v2301 = vsel %vm1182, %v2298, 0
        %v2303 = vsel %vm1182, %v2297, 0
        %2305 = vmatprep.subr.mxu0 0.0
        %2306 = vmatpush1.msra.mxu0 0.0
        %2307 = vmatprep.subr.mxu0 0.0
        %2308 = vmatpush1.msra.mxu0 0.0
        %2309 = vmatprep.subr.mxu0 0.0
        %2310 = vmatpush1.msra.mxu0 0.0
        %2311 = vmatprep.subr.mxu0 0.0
        %2312 = vmatpush1.msra.mxu0 0.0
        %2313 = vmatprep.subr.mxu0 0.0
        %2314 = vmatpush1.msra.mxu0 0.0
        %2315 = vmatprep.subr.mxu0 0.0
        %2316 = vmatpush1.msra.mxu0 0.0
        %2317 = vmatprep.subr.mxu0 0.0
        %2318 = vmatpush1.msra.mxu0 0.0
        %2319 = vmatprep.subr.mxu0 0.0
        %2320 = vmatpush1.msra.mxu0 0.0
        %2321 = vmatprep.subr.mxu0 0.0
        %2322 = vmatpush1.msra.mxu0 0.0
        %2323 = vmatprep.subr.mxu0 0.0
        %2324 = vmatpush1.msra.mxu0 0.0
        %2325 = vmatprep.subr.mxu0 0.0
        %2326 = vmatpush1.msra.mxu0 0.0
        %2327 = vmatprep.subr.mxu0 0.0
        %2328 = vmatpush1.msra.mxu0 0.0
        %2329 = vmatprep.subr.mxu0 0.0
        %2330 = vmatpush1.msra.mxu0 0.0
        %2331 = vmatprep.subr.mxu0 0.0
        %2332 = vmatpush1.msra.mxu0 0.0
        %2333 = vmatprep.subr.mxu0 0.0
        %2334 = vmatpush1.msra.mxu0 0.0
        %2335 = vmatprep.subr.mxu0 %v2303
        %2336 = vmatpush1.msra.mxu0 %v2301
        %2337 = vmatprep.subr.mxu0 0.0
        %2338 = vmatpush2.msra.mxu0 0.0
        %2339 = vmatprep.subr.mxu0 0.0
        %2340 = vmatpush2.msra.mxu0 0.0
        %2341 = vmatprep.subr.mxu0 0.0
        %2342 = vmatpush2.msra.mxu0 0.0
        %2343 = vmatprep.subr.mxu0 0.0
        %2344 = vmatpush2.msra.mxu0 0.0
        %2345 = vmatprep.subr.mxu0 0.0
        %2346 = vmatpush2.msra.mxu0 0.0
        %2347 = vmatprep.subr.mxu0 0.0
        %2348 = vmatpush2.msra.mxu0 0.0
        %2349 = vmatprep.subr.mxu0 0.0
        %2350 = vmatpush2.msra.mxu0 0.0
        %2351 = vmatprep.subr.mxu0 0.0
        %2352 = vmatpush2.msra.mxu0 0.0
        %2353 = vmatprep.subr.mxu0 0.0
        %2354 = vmatpush2.msra.mxu0 0.0
        %2355 = vmatprep.subr.mxu0 0.0
        %2356 = vmatpush2.msra.mxu0 0.0
        %2357 = vmatprep.subr.mxu0 0.0
        %2358 = vmatpush2.msra.mxu0 0.0
        %2359 = vmatprep.subr.mxu0 0.0
        %2360 = vmatpush2.msra.mxu0 0.0
        %2361 = vmatprep.subr.mxu0 0.0
        %2362 = vmatpush2.msra.mxu0 0.0
        %2363 = vmatprep.subr.mxu0 0.0
        %2364 = vmatpush2.msra.mxu0 0.0
        %2365 = vmatprep.subr.mxu0 0.0
        %2366 = vmatpush2.msra.mxu0 0.0
        %2367 = vmatprep.subr.mxu0 0.0
        %2368 = vmatpush2.msra.mxu0 0.0
        %2369 = vmatprep.mubr.f32.mxu0 0.0
        %2370 = vmatmul.mubr.f32.gmra.mxu0 %v2299
        %v2371 = vpop.f32.mrf.mxu0
        %v2372 = vadd.f32 0.0, %v2371
        %v2373 = vpop.f32.mrf.mxu0
        %v2374 = vadd.f32 0.0, %v2373
        %2375 = vdwg.mxu0
        %v2376 = vadd.f32 %v2290, %v2372
        %v2377 = vadd.f32 %v2291, %v2374
        %s2378 = scalar_lea.vmem %s5, 28
        %v2379 = vld [vmem:[%s2378] sm:$0xf]
        %2381 = vrot.lane.b32.xlu0 %v1168, 95
        %v2382 = vpop.permute.xlu0 %2381
        %2383 = vrot.lane.b32.xlu0 %v1169, 95
        %v2384 = vpop.permute.xlu0 %2383
        %2385 = vrot.lane.b32.xlu0 %v1170, 95
        %v2386 = vpop.permute.xlu0 %2385
        %vm2387 = vcmask 777216
        %v2388 = vsel %vm2387, %v2382, %v2384
        %v2389 = vsel %vm2387, %v2384, %v2386
        %v2391 = vsel %vm1179, %v2379, 0
        %v2393 = vsel %vm1182, %v2388, 0
        %v2395 = vsel %vm1182, %v2389, 0
        %2397 = vmatprep.subr.mxu0 0.0
        %2398 = vmatpush1.msra.mxu0 0.0
        %2399 = vmatprep.subr.mxu0 0.0
        %2400 = vmatpush1.msra.mxu0 0.0
        %2401 = vmatprep.subr.mxu0 0.0
        %2402 = vmatpush1.msra.mxu0 0.0
        %2403 = vmatprep.subr.mxu0 0.0
        %2404 = vmatpush1.msra.mxu0 0.0
        %2405 = vmatprep.subr.mxu0 0.0
        %2406 = vmatpush1.msra.mxu0 0.0
        %2407 = vmatprep.subr.mxu0 0.0
        %2408 = vmatpush1.msra.mxu0 0.0
        %2409 = vmatprep.subr.mxu0 0.0
        %2410 = vmatpush1.msra.mxu0 0.0
        %2411 = vmatprep.subr.mxu0 0.0
        %2412 = vmatpush1.msra.mxu0 0.0
        %2413 = vmatprep.subr.mxu0 0.0
        %2414 = vmatpush1.msra.mxu0 0.0
        %2415 = vmatprep.subr.mxu0 0.0
        %2416 = vmatpush1.msra.mxu0 0.0
        %2417 = vmatprep.subr.mxu0 0.0
        %2418 = vmatpush1.msra.mxu0 0.0
        %2419 = vmatprep.subr.mxu0 0.0
        %2420 = vmatpush1.msra.mxu0 0.0
        %2421 = vmatprep.subr.mxu0 0.0
        %2422 = vmatpush1.msra.mxu0 0.0
        %2423 = vmatprep.subr.mxu0 0.0
        %2424 = vmatpush1.msra.mxu0 0.0
        %2425 = vmatprep.subr.mxu0 0.0
        %2426 = vmatpush1.msra.mxu0 0.0
        %2427 = vmatprep.subr.mxu0 %v2395
        %2428 = vmatpush1.msra.mxu0 %v2393
        %2429 = vmatprep.subr.mxu0 0.0
        %2430 = vmatpush2.msra.mxu0 0.0
        %2431 = vmatprep.subr.mxu0 0.0
        %2432 = vmatpush2.msra.mxu0 0.0
        %2433 = vmatprep.subr.mxu0 0.0
        %2434 = vmatpush2.msra.mxu0 0.0
        %2435 = vmatprep.subr.mxu0 0.0
        %2436 = vmatpush2.msra.mxu0 0.0
        %2437 = vmatprep.subr.mxu0 0.0
        %2438 = vmatpush2.msra.mxu0 0.0
        %2439 = vmatprep.subr.mxu0 0.0
        %2440 = vmatpush2.msra.mxu0 0.0
        %2441 = vmatprep.subr.mxu0 0.0
        %2442 = vmatpush2.msra.mxu0 0.0
        %2443 = vmatprep.subr.mxu0 0.0
        %2444 = vmatpush2.msra.mxu0 0.0
        %2445 = vmatprep.subr.mxu0 0.0
        %2446 = vmatpush2.msra.mxu0 0.0
        %2447 = vmatprep.subr.mxu0 0.0
        %2448 = vmatpush2.msra.mxu0 0.0
        %2449 = vmatprep.subr.mxu0 0.0
        %2450 = vmatpush2.msra.mxu0 0.0
        %2451 = vmatprep.subr.mxu0 0.0
        %2452 = vmatpush2.msra.mxu0 0.0
        %2453 = vmatprep.subr.mxu0 0.0
        %2454 = vmatpush2.msra.mxu0 0.0
        %2455 = vmatprep.subr.mxu0 0.0
        %2456 = vmatpush2.msra.mxu0 0.0
        %2457 = vmatprep.subr.mxu0 0.0
        %2458 = vmatpush2.msra.mxu0 0.0
        %2459 = vmatprep.subr.mxu0 0.0
        %2460 = vmatpush2.msra.mxu0 0.0
        %2461 = vmatprep.mubr.f32.mxu0 0.0
        %2462 = vmatmul.mubr.f32.gmra.mxu0 %v2391
        %v2463 = vpop.f32.mrf.mxu0
        %v2464 = vadd.f32 0.0, %v2463
        %v2465 = vpop.f32.mrf.mxu0
        %v2466 = vadd.f32 0.0, %v2465
        %2467 = vdwg.mxu0
        %v2468 = vadd.f32 %v2376, %v2464
        %v2469 = vadd.f32 %v2377, %v2466
        %2470 = vrot.lane.b32.xlu0 %v2379, 124
        %v2471 = vpop.permute.xlu0 %2470
        %2473 = vrot.lane.b32.xlu0 %v1171, 95
        %v2474 = vpop.permute.xlu0 %2473
        %2475 = vrot.lane.b32.xlu0 %v1178, 95
        %v2476 = vpop.permute.xlu0 %2475
        %2477 = vrot.lane.b32.xlu0 %v1172, 95
        %v2478 = vpop.permute.xlu0 %2477
        %v2479 = vsel %vm2387, %v2474, %v2476
        %v2480 = vsel %vm2387, %v2476, %v2478
        %v2481 = vsel %vm1179, %v2471, 0
        %v2483 = vsel %vm1182, %v2479, 0
        %v2485 = vsel %vm1182, %v2480, 0
        %2487 = vmatprep.subr.mxu0 0.0
        %2488 = vmatpush1.msra.mxu0 0.0
        %2489 = vmatprep.subr.mxu0 0.0
        %2490 = vmatpush1.msra.mxu0 0.0
        %2491 = vmatprep.subr.mxu0 0.0
        %2492 = vmatpush1.msra.mxu0 0.0
        %2493 = vmatprep.subr.mxu0 0.0
        %2494 = vmatpush1.msra.mxu0 0.0
        %2495 = vmatprep.subr.mxu0 0.0
        %2496 = vmatpush1.msra.mxu0 0.0
        %2497 = vmatprep.subr.mxu0 0.0
        %2498 = vmatpush1.msra.mxu0 0.0
        %2499 = vmatprep.subr.mxu0 0.0
        %2500 = vmatpush1.msra.mxu0 0.0
        %2501 = vmatprep.subr.mxu0 0.0
        %2502 = vmatpush1.msra.mxu0 0.0
        %2503 = vmatprep.subr.mxu0 0.0
        %2504 = vmatpush1.msra.mxu0 0.0
        %2505 = vmatprep.subr.mxu0 0.0
        %2506 = vmatpush1.msra.mxu0 0.0
        %2507 = vmatprep.subr.mxu0 0.0
        %2508 = vmatpush1.msra.mxu0 0.0
        %2509 = vmatprep.subr.mxu0 0.0
        %2510 = vmatpush1.msra.mxu0 0.0
        %2511 = vmatprep.subr.mxu0 0.0
        %2512 = vmatpush1.msra.mxu0 0.0
        %2513 = vmatprep.subr.mxu0 0.0
        %2514 = vmatpush1.msra.mxu0 0.0
        %2515 = vmatprep.subr.mxu0 0.0
        %2516 = vmatpush1.msra.mxu0 0.0
        %2517 = vmatprep.subr.mxu0 %v2485
        %2518 = vmatpush1.msra.mxu0 %v2483
        %2519 = vmatprep.subr.mxu0 0.0
        %2520 = vmatpush2.msra.mxu0 0.0
        %2521 = vmatprep.subr.mxu0 0.0
        %2522 = vmatpush2.msra.mxu0 0.0
        %2523 = vmatprep.subr.mxu0 0.0
        %2524 = vmatpush2.msra.mxu0 0.0
        %2525 = vmatprep.subr.mxu0 0.0
        %2526 = vmatpush2.msra.mxu0 0.0
        %2527 = vmatprep.subr.mxu0 0.0
        %2528 = vmatpush2.msra.mxu0 0.0
        %2529 = vmatprep.subr.mxu0 0.0
        %2530 = vmatpush2.msra.mxu0 0.0
        %2531 = vmatprep.subr.mxu0 0.0
        %2532 = vmatpush2.msra.mxu0 0.0
        %2533 = vmatprep.subr.mxu0 0.0
        %2534 = vmatpush2.msra.mxu0 0.0
        %2535 = vmatprep.subr.mxu0 0.0
        %2536 = vmatpush2.msra.mxu0 0.0
        %2537 = vmatprep.subr.mxu0 0.0
        %2538 = vmatpush2.msra.mxu0 0.0
        %2539 = vmatprep.subr.mxu0 0.0
        %2540 = vmatpush2.msra.mxu0 0.0
        %2541 = vmatprep.subr.mxu0 0.0
        %2542 = vmatpush2.msra.mxu0 0.0
        %2543 = vmatprep.subr.mxu0 0.0
        %2544 = vmatpush2.msra.mxu0 0.0
        %2545 = vmatprep.subr.mxu0 0.0
        %2546 = vmatpush2.msra.mxu0 0.0
        %2547 = vmatprep.subr.mxu0 0.0
        %2548 = vmatpush2.msra.mxu0 0.0
        %2549 = vmatprep.subr.mxu0 0.0
        %2550 = vmatpush2.msra.mxu0 0.0
        %2551 = vmatprep.mubr.f32.mxu0 0.0
        %2552 = vmatmul.mubr.f32.gmra.mxu0 %v2481
        %v2553 = vpop.f32.mrf.mxu0
        %v2554 = vadd.f32 0.0, %v2553
        %v2555 = vpop.f32.mrf.mxu0
        %v2556 = vadd.f32 0.0, %v2555
        %2557 = vdwg.mxu0
        %v2558 = vadd.f32 %v2468, %v2554
        %v2559 = vadd.f32 %v2469, %v2556
        %s2560 = scalar_lea.vmem %s5, 32
        %v2561 = vld [vmem:[%s2560] sm:$0xf]
        %2562 = vrot.lane.b32.xlu0 %v1168, 94
        %v2563 = vpop.permute.xlu0 %2562
        %2564 = vrot.lane.b32.xlu0 %v1169, 94
        %v2565 = vpop.permute.xlu0 %2564
        %2566 = vrot.lane.b32.xlu0 %v1170, 94
        %v2567 = vpop.permute.xlu0 %2566
        %vm2568 = vcmask 769024
        %v2569 = vsel %vm2568, %v2563, %v2565
        %v2570 = vsel %vm2568, %v2565, %v2567
        %v2572 = vsel %vm1179, %v2561, 0
        %v2574 = vsel %vm1182, %v2569, 0
        %v2576 = vsel %vm1182, %v2570, 0
        %2578 = vmatprep.subr.mxu0 0.0
        %2579 = vmatpush1.msra.mxu0 0.0
        %2580 = vmatprep.subr.mxu0 0.0
        %2581 = vmatpush1.msra.mxu0 0.0
        %2582 = vmatprep.subr.mxu0 0.0
        %2583 = vmatpush1.msra.mxu0 0.0
        %2584 = vmatprep.subr.mxu0 0.0
        %2585 = vmatpush1.msra.mxu0 0.0
        %2586 = vmatprep.subr.mxu0 0.0
        %2587 = vmatpush1.msra.mxu0 0.0
        %2588 = vmatprep.subr.mxu0 0.0
        %2589 = vmatpush1.msra.mxu0 0.0
        %2590 = vmatprep.subr.mxu0 0.0
        %2591 = vmatpush1.msra.mxu0 0.0
        %2592 = vmatprep.subr.mxu0 0.0
        %2593 = vmatpush1.msra.mxu0 0.0
        %2594 = vmatprep.subr.mxu0 0.0
        %2595 = vmatpush1.msra.mxu0 0.0
        %2596 = vmatprep.subr.mxu0 0.0
        %2597 = vmatpush1.msra.mxu0 0.0
        %2598 = vmatprep.subr.mxu0 0.0
        %2599 = vmatpush1.msra.mxu0 0.0
        %2600 = vmatprep.subr.mxu0 0.0
        %2601 = vmatpush1.msra.mxu0 0.0
        %2602 = vmatprep.subr.mxu0 0.0
        %2603 = vmatpush1.msra.mxu0 0.0
        %2604 = vmatprep.subr.mxu0 0.0
        %2605 = vmatpush1.msra.mxu0 0.0
        %2606 = vmatprep.subr.mxu0 0.0
        %2607 = vmatpush1.msra.mxu0 0.0
        %2608 = vmatprep.subr.mxu0 %v2576
        %2609 = vmatpush1.msra.mxu0 %v2574
        %2610 = vmatprep.subr.mxu0 0.0
        %2611 = vmatpush2.msra.mxu0 0.0
        %2612 = vmatprep.subr.mxu0 0.0
        %2613 = vmatpush2.msra.mxu0 0.0
        %2614 = vmatprep.subr.mxu0 0.0
        %2615 = vmatpush2.msra.mxu0 0.0
        %2616 = vmatprep.subr.mxu0 0.0
        %2617 = vmatpush2.msra.mxu0 0.0
        %2618 = vmatprep.subr.mxu0 0.0
        %2619 = vmatpush2.msra.mxu0 0.0
        %2620 = vmatprep.subr.mxu0 0.0
        %2621 = vmatpush2.msra.mxu0 0.0
        %2622 = vmatprep.subr.mxu0 0.0
        %2623 = vmatpush2.msra.mxu0 0.0
        %2624 = vmatprep.subr.mxu0 0.0
        %2625 = vmatpush2.msra.mxu0 0.0
        %2626 = vmatprep.subr.mxu0 0.0
        %2627 = vmatpush2.msra.mxu0 0.0
        %2628 = vmatprep.subr.mxu0 0.0
        %2629 = vmatpush2.msra.mxu0 0.0
        %2630 = vmatprep.subr.mxu0 0.0
        %2631 = vmatpush2.msra.mxu0 0.0
        %2632 = vmatprep.subr.mxu0 0.0
        %2633 = vmatpush2.msra.mxu0 0.0
        %2634 = vmatprep.subr.mxu0 0.0
        %2635 = vmatpush2.msra.mxu0 0.0
        %2636 = vmatprep.subr.mxu0 0.0
        %2637 = vmatpush2.msra.mxu0 0.0
        %2638 = vmatprep.subr.mxu0 0.0
        %2639 = vmatpush2.msra.mxu0 0.0
        %2640 = vmatprep.subr.mxu0 0.0
        %2641 = vmatpush2.msra.mxu0 0.0
        %2642 = vmatprep.mubr.f32.mxu0 0.0
        %2643 = vmatmul.mubr.f32.gmra.mxu0 %v2572
        %v2644 = vpop.f32.mrf.mxu0
        %v2645 = vadd.f32 0.0, %v2644
        %v2646 = vpop.f32.mrf.mxu0
        %v2647 = vadd.f32 0.0, %v2646
        %2648 = vdwg.mxu0
        %v2649 = vadd.f32 %v2558, %v2645
        %v2650 = vadd.f32 %v2559, %v2647
        %2651 = vrot.lane.b32.xlu0 %v2561, 124
        %v2652 = vpop.permute.xlu0 %2651
        %2653 = vrot.lane.b32.xlu0 %v1171, 94
        %v2654 = vpop.permute.xlu0 %2653
        %2655 = vrot.lane.b32.xlu0 %v1178, 94
        %v2656 = vpop.permute.xlu0 %2655
        %2657 = vrot.lane.b32.xlu0 %v1172, 94
        %v2658 = vpop.permute.xlu0 %2657
        %v2659 = vsel %vm2568, %v2654, %v2656
        %v2660 = vsel %vm2568, %v2656, %v2658
        %v2661 = vsel %vm1179, %v2652, 0
        %v2663 = vsel %vm1182, %v2659, 0
        %v2665 = vsel %vm1182, %v2660, 0
        %2667 = vmatprep.subr.mxu0 0.0
        %2668 = vmatpush1.msra.mxu0 0.0
        %2669 = vmatprep.subr.mxu0 0.0
        %2670 = vmatpush1.msra.mxu0 0.0
        %2671 = vmatprep.subr.mxu0 0.0
        %2672 = vmatpush1.msra.mxu0 0.0
        %2673 = vmatprep.subr.mxu0 0.0
        %2674 = vmatpush1.msra.mxu0 0.0
        %2675 = vmatprep.subr.mxu0 0.0
        %2676 = vmatpush1.msra.mxu0 0.0
        %2677 = vmatprep.subr.mxu0 0.0
        %2678 = vmatpush1.msra.mxu0 0.0
        %2679 = vmatprep.subr.mxu0 0.0
        %2680 = vmatpush1.msra.mxu0 0.0
        %2681 = vmatprep.subr.mxu0 0.0
        %2682 = vmatpush1.msra.mxu0 0.0
        %2683 = vmatprep.subr.mxu0 0.0
        %2684 = vmatpush1.msra.mxu0 0.0
        %2685 = vmatprep.subr.mxu0 0.0
        %2686 = vmatpush1.msra.mxu0 0.0
        %2687 = vmatprep.subr.mxu0 0.0
        %2688 = vmatpush1.msra.mxu0 0.0
        %2689 = vmatprep.subr.mxu0 0.0
        %2690 = vmatpush1.msra.mxu0 0.0
        %2691 = vmatprep.subr.mxu0 0.0
        %2692 = vmatpush1.msra.mxu0 0.0
        %2693 = vmatprep.subr.mxu0 0.0
        %2694 = vmatpush1.msra.mxu0 0.0
        %2695 = vmatprep.subr.mxu0 0.0
        %2696 = vmatpush1.msra.mxu0 0.0
        %2697 = vmatprep.subr.mxu0 %v2665
        %2698 = vmatpush1.msra.mxu0 %v2663
        %2699 = vmatprep.subr.mxu0 0.0
        %2700 = vmatpush2.msra.mxu0 0.0
        %2701 = vmatprep.subr.mxu0 0.0
        %2702 = vmatpush2.msra.mxu0 0.0
        %2703 = vmatprep.subr.mxu0 0.0
        %2704 = vmatpush2.msra.mxu0 0.0
        %2705 = vmatprep.subr.mxu0 0.0
        %2706 = vmatpush2.msra.mxu0 0.0
        %2707 = vmatprep.subr.mxu0 0.0
        %2708 = vmatpush2.msra.mxu0 0.0
        %2709 = vmatprep.subr.mxu0 0.0
        %2710 = vmatpush2.msra.mxu0 0.0
        %2711 = vmatprep.subr.mxu0 0.0
        %2712 = vmatpush2.msra.mxu0 0.0
        %2713 = vmatprep.subr.mxu0 0.0
        %2714 = vmatpush2.msra.mxu0 0.0
        %2715 = vmatprep.subr.mxu0 0.0
        %2716 = vmatpush2.msra.mxu0 0.0
        %2717 = vmatprep.subr.mxu0 0.0
        %2718 = vmatpush2.msra.mxu0 0.0
        %2719 = vmatprep.subr.mxu0 0.0
        %2720 = vmatpush2.msra.mxu0 0.0
        %2721 = vmatprep.subr.mxu0 0.0
        %2722 = vmatpush2.msra.mxu0 0.0
        %2723 = vmatprep.subr.mxu0 0.0
        %2724 = vmatpush2.msra.mxu0 0.0
        %2725 = vmatprep.subr.mxu0 0.0
        %2726 = vmatpush2.msra.mxu0 0.0
        %2727 = vmatprep.subr.mxu0 0.0
        %2728 = vmatpush2.msra.mxu0 0.0
        %2729 = vmatprep.subr.mxu0 0.0
        %2730 = vmatpush2.msra.mxu0 0.0
        %2731 = vmatprep.mubr.f32.mxu0 0.0
        %2732 = vmatmul.mubr.f32.gmra.mxu0 %v2661
        %v2733 = vpop.f32.mrf.mxu0
        %v2734 = vadd.f32 0.0, %v2733
        %v2735 = vpop.f32.mrf.mxu0
        %v2736 = vadd.f32 0.0, %v2735
        %2737 = vdwg.mxu0
        %v2738 = vadd.f32 %v2649, %v2734
        %v2739 = vadd.f32 %v2650, %v2736
        %v2740 = vld [vmem:[%s6] sm:$0xf]
        %2742 = vset.pattern.permute.xlu0 0
        %2743 = vperm.xlu0 %2742, %v2740
        %v2744 = vpop.permute.xlu0 %2743
        %v2746 = vadd.f32 %v2738, %v2744
        %v2747 = vadd.f32 %v2739, %v2744
        %v2748 = vmax.f32 %v2746, 0.0
        %v2749 = vmax.f32 %v2747, 0.0
        %v2750 = vld [vmem:[%s7] sm:$0xf]
        %s2751 = scalar_lea.vmem %s7, 4
        %v2752 = vld [vmem:[%s2751] sm:$0xf]
        %2755 = vrot.lane.b32.xlu0 %v2748, 127
        %v2756 = vpop.permute.xlu0 %2755
        %2757 = vrot.lane.b32.xlu0 %v2749, 127
        %v2758 = vpop.permute.xlu0 %2757
        %v2759 = vsel %vm545, %v2756, %v2758
        %v2761 = vsel %vm1179, %v2752, 0
        %v2763 = vsel %vm1182, %v2759, 0
        %v2765 = vsel %vm1182, %v2758, 0
        %2767 = vmatprep.subr.mxu0 0.0
        %2768 = vmatpush1.msra.mxu0 0.0
        %2769 = vmatprep.subr.mxu0 0.0
        %2770 = vmatpush1.msra.mxu0 0.0
        %2771 = vmatprep.subr.mxu0 0.0
        %2772 = vmatpush1.msra.mxu0 0.0
        %2773 = vmatprep.subr.mxu0 0.0
        %2774 = vmatpush1.msra.mxu0 0.0
        %2775 = vmatprep.subr.mxu0 0.0
        %2776 = vmatpush1.msra.mxu0 0.0
        %2777 = vmatprep.subr.mxu0 0.0
        %2778 = vmatpush1.msra.mxu0 0.0
        %2779 = vmatprep.subr.mxu0 0.0
        %2780 = vmatpush1.msra.mxu0 0.0
        %2781 = vmatprep.subr.mxu0 0.0
        %2782 = vmatpush1.msra.mxu0 0.0
        %2783 = vmatprep.subr.mxu0 0.0
        %2784 = vmatpush1.msra.mxu0 0.0
        %2785 = vmatprep.subr.mxu0 0.0
        %2786 = vmatpush1.msra.mxu0 0.0
        %2787 = vmatprep.subr.mxu0 0.0
        %2788 = vmatpush1.msra.mxu0 0.0
        %2789 = vmatprep.subr.mxu0 0.0
        %2790 = vmatpush1.msra.mxu0 0.0
        %2791 = vmatprep.subr.mxu0 0.0
        %2792 = vmatpush1.msra.mxu0 0.0
        %2793 = vmatprep.subr.mxu0 0.0
        %2794 = vmatpush1.msra.mxu0 0.0
        %2795 = vmatprep.subr.mxu0 0.0
        %2796 = vmatpush1.msra.mxu0 0.0
        %2797 = vmatprep.subr.mxu0 %v2765
        %2798 = vmatpush1.msra.mxu0 %v2763
        %2799 = vmatprep.subr.mxu0 0.0
        %2800 = vmatpush2.msra.mxu0 0.0
        %2801 = vmatprep.subr.mxu0 0.0
        %2802 = vmatpush2.msra.mxu0 0.0
        %2803 = vmatprep.subr.mxu0 0.0
        %2804 = vmatpush2.msra.mxu0 0.0
        %2805 = vmatprep.subr.mxu0 0.0
        %2806 = vmatpush2.msra.mxu0 0.0
        %2807 = vmatprep.subr.mxu0 0.0
        %2808 = vmatpush2.msra.mxu0 0.0
        %2809 = vmatprep.subr.mxu0 0.0
        %2810 = vmatpush2.msra.mxu0 0.0
        %2811 = vmatprep.subr.mxu0 0.0
        %2812 = vmatpush2.msra.mxu0 0.0
        %2813 = vmatprep.subr.mxu0 0.0
        %2814 = vmatpush2.msra.mxu0 0.0
        %2815 = vmatprep.subr.mxu0 0.0
        %2816 = vmatpush2.msra.mxu0 0.0
        %2817 = vmatprep.subr.mxu0 0.0
        %2818 = vmatpush2.msra.mxu0 0.0
        %2819 = vmatprep.subr.mxu0 0.0
        %2820 = vmatpush2.msra.mxu0 0.0
        %2821 = vmatprep.subr.mxu0 0.0
        %2822 = vmatpush2.msra.mxu0 0.0
        %2823 = vmatprep.subr.mxu0 0.0
        %2824 = vmatpush2.msra.mxu0 0.0
        %2825 = vmatprep.subr.mxu0 0.0
        %2826 = vmatpush2.msra.mxu0 0.0
        %2827 = vmatprep.subr.mxu0 0.0
        %2828 = vmatpush2.msra.mxu0 0.0
        %2829 = vmatprep.subr.mxu0 0.0
        %2830 = vmatpush2.msra.mxu0 0.0
        %2831 = vmatprep.mubr.f32.mxu0 0.0
        %2832 = vmatmul.mubr.f32.gmra.mxu0 %v2761
        %v2833 = vpop.f32.mrf.mxu0
        %v2834 = vadd.f32 0.0, %v2833
        %v2835 = vpop.f32.mrf.mxu0
        %v2836 = vadd.f32 0.0, %v2835
        %2837 = vdwg.mxu0
        %v2839 = vsel %vm1179, %v2750, 0
        %v2841 = vsel %vm1182, %v2748, 0
        %v2843 = vsel %vm1182, %v2749, 0
        %2845 = vmatprep.subr.mxu0 0.0
        %2846 = vmatpush1.msra.mxu0 0.0
        %2847 = vmatprep.subr.mxu0 0.0
        %2848 = vmatpush1.msra.mxu0 0.0
        %2849 = vmatprep.subr.mxu0 0.0
        %2850 = vmatpush1.msra.mxu0 0.0
        %2851 = vmatprep.subr.mxu0 0.0
        %2852 = vmatpush1.msra.mxu0 0.0
        %2853 = vmatprep.subr.mxu0 0.0
        %2854 = vmatpush1.msra.mxu0 0.0
        %2855 = vmatprep.subr.mxu0 0.0
        %2856 = vmatpush1.msra.mxu0 0.0
        %2857 = vmatprep.subr.mxu0 0.0
        %2858 = vmatpush1.msra.mxu0 0.0
        %2859 = vmatprep.subr.mxu0 0.0
        %2860 = vmatpush1.msra.mxu0 0.0
        %2861 = vmatprep.subr.mxu0 0.0
        %2862 = vmatpush1.msra.mxu0 0.0
        %2863 = vmatprep.subr.mxu0 0.0
        %2864 = vmatpush1.msra.mxu0 0.0
        %2865 = vmatprep.subr.mxu0 0.0
        %2866 = vmatpush1.msra.mxu0 0.0
        %2867 = vmatprep.subr.mxu0 0.0
        %2868 = vmatpush1.msra.mxu0 0.0
        %2869 = vmatprep.subr.mxu0 0.0
        %2870 = vmatpush1.msra.mxu0 0.0
        %2871 = vmatprep.subr.mxu0 0.0
        %2872 = vmatpush1.msra.mxu0 0.0
        %2873 = vmatprep.subr.mxu0 0.0
        %2874 = vmatpush1.msra.mxu0 0.0
        %2875 = vmatprep.subr.mxu0 %v2843
        %2876 = vmatpush1.msra.mxu0 %v2841
        %2877 = vmatprep.subr.mxu0 0.0
        %2878 = vmatpush2.msra.mxu0 0.0
        %2879 = vmatprep.subr.mxu0 0.0
        %2880 = vmatpush2.msra.mxu0 0.0
        %2881 = vmatprep.subr.mxu0 0.0
        %2882 = vmatpush2.msra.mxu0 0.0
        %2883 = vmatprep.subr.mxu0 0.0
        %2884 = vmatpush2.msra.mxu0 0.0
        %2885 = vmatprep.subr.mxu0 0.0
        %2886 = vmatpush2.msra.mxu0 0.0
        %2887 = vmatprep.subr.mxu0 0.0
        %2888 = vmatpush2.msra.mxu0 0.0
        %2889 = vmatprep.subr.mxu0 0.0
        %2890 = vmatpush2.msra.mxu0 0.0
        %2891 = vmatprep.subr.mxu0 0.0
        %2892 = vmatpush2.msra.mxu0 0.0
        %2893 = vmatprep.subr.mxu0 0.0
        %2894 = vmatpush2.msra.mxu0 0.0
        %2895 = vmatprep.subr.mxu0 0.0
        %2896 = vmatpush2.msra.mxu0 0.0
        %2897 = vmatprep.subr.mxu0 0.0
        %2898 = vmatpush2.msra.mxu0 0.0
        %2899 = vmatprep.subr.mxu0 0.0
        %2900 = vmatpush2.msra.mxu0 0.0
        %2901 = vmatprep.subr.mxu0 0.0
        %2902 = vmatpush2.msra.mxu0 0.0
        %2903 = vmatprep.subr.mxu0 0.0
        %2904 = vmatpush2.msra.mxu0 0.0
        %2905 = vmatprep.subr.mxu0 0.0
        %2906 = vmatpush2.msra.mxu0 0.0
        %2907 = vmatprep.subr.mxu0 0.0
        %2908 = vmatpush2.msra.mxu0 0.0
        %2909 = vmatprep.mubr.f32.mxu0 0.0
        %2910 = vmatmul.mubr.f32.gmra.mxu0 %v2839
        %v2911 = vpop.f32.mrf.mxu0
        %v2912 = vadd.f32 %v2834, %v2911
        %v2913 = vpop.f32.mrf.mxu0
        %v2914 = vadd.f32 %v2836, %v2913
        %2915 = vdwg.mxu0
        %s2916 = scalar_lea.vmem %s7, 8
        %v2917 = vld [vmem:[%s2916] sm:$0xf]
        %2918 = vrot.lane.b32.xlu0 %v2748, 126
        %v2919 = vpop.permute.xlu0 %2918
        %2920 = vrot.lane.b32.xlu0 %v2749, 126
        %v2921 = vpop.permute.xlu0 %2920
        %v2922 = vsel %vm1516, %v2919, %v2921
        %v2924 = vsel %vm1179, %v2917, 0
        %v2926 = vsel %vm1182, %v2922, 0
        %v2928 = vsel %vm1182, %v2921, 0
        %2930 = vmatprep.subr.mxu0 0.0
        %2931 = vmatpush1.msra.mxu0 0.0
        %2932 = vmatprep.subr.mxu0 0.0
        %2933 = vmatpush1.msra.mxu0 0.0
        %2934 = vmatprep.subr.mxu0 0.0
        %2935 = vmatpush1.msra.mxu0 0.0
        %2936 = vmatprep.subr.mxu0 0.0
        %2937 = vmatpush1.msra.mxu0 0.0
        %2938 = vmatprep.subr.mxu0 0.0
        %2939 = vmatpush1.msra.mxu0 0.0
        %2940 = vmatprep.subr.mxu0 0.0
        %2941 = vmatpush1.msra.mxu0 0.0
        %2942 = vmatprep.subr.mxu0 0.0
        %2943 = vmatpush1.msra.mxu0 0.0
        %2944 = vmatprep.subr.mxu0 0.0
        %2945 = vmatpush1.msra.mxu0 0.0
        %2946 = vmatprep.subr.mxu0 0.0
        %2947 = vmatpush1.msra.mxu0 0.0
        %2948 = vmatprep.subr.mxu0 0.0
        %2949 = vmatpush1.msra.mxu0 0.0
        %2950 = vmatprep.subr.mxu0 0.0
        %2951 = vmatpush1.msra.mxu0 0.0
        %2952 = vmatprep.subr.mxu0 0.0
        %2953 = vmatpush1.msra.mxu0 0.0
        %2954 = vmatprep.subr.mxu0 0.0
        %2955 = vmatpush1.msra.mxu0 0.0
        %2956 = vmatprep.subr.mxu0 0.0
        %2957 = vmatpush1.msra.mxu0 0.0
        %2958 = vmatprep.subr.mxu0 0.0
        %2959 = vmatpush1.msra.mxu0 0.0
        %2960 = vmatprep.subr.mxu0 %v2928
        %2961 = vmatpush1.msra.mxu0 %v2926
        %2962 = vmatprep.subr.mxu0 0.0
        %2963 = vmatpush2.msra.mxu0 0.0
        %2964 = vmatprep.subr.mxu0 0.0
        %2965 = vmatpush2.msra.mxu0 0.0
        %2966 = vmatprep.subr.mxu0 0.0
        %2967 = vmatpush2.msra.mxu0 0.0
        %2968 = vmatprep.subr.mxu0 0.0
        %2969 = vmatpush2.msra.mxu0 0.0
        %2970 = vmatprep.subr.mxu0 0.0
        %2971 = vmatpush2.msra.mxu0 0.0
        %2972 = vmatprep.subr.mxu0 0.0
        %2973 = vmatpush2.msra.mxu0 0.0
        %2974 = vmatprep.subr.mxu0 0.0
        %2975 = vmatpush2.msra.mxu0 0.0
        %2976 = vmatprep.subr.mxu0 0.0
        %2977 = vmatpush2.msra.mxu0 0.0
        %2978 = vmatprep.subr.mxu0 0.0
        %2979 = vmatpush2.msra.mxu0 0.0
        %2980 = vmatprep.subr.mxu0 0.0
        %2981 = vmatpush2.msra.mxu0 0.0
        %2982 = vmatprep.subr.mxu0 0.0
        %2983 = vmatpush2.msra.mxu0 0.0
        %2984 = vmatprep.subr.mxu0 0.0
        %2985 = vmatpush2.msra.mxu0 0.0
        %2986 = vmatprep.subr.mxu0 0.0
        %2987 = vmatpush2.msra.mxu0 0.0
        %2988 = vmatprep.subr.mxu0 0.0
        %2989 = vmatpush2.msra.mxu0 0.0
        %2990 = vmatprep.subr.mxu0 0.0
        %2991 = vmatpush2.msra.mxu0 0.0
        %2992 = vmatprep.subr.mxu0 0.0
        %2993 = vmatpush2.msra.mxu0 0.0
        %2994 = vmatprep.mubr.f32.mxu0 0.0
        %2995 = vmatmul.mubr.f32.gmra.mxu0 %v2924
        %v2996 = vpop.f32.mrf.mxu0
        %v2997 = vadd.f32 0.0, %v2996
        %v2998 = vpop.f32.mrf.mxu0
        %v2999 = vadd.f32 0.0, %v2998
        %3000 = vdwg.mxu0
        %v3001 = vadd.f32 %v2912, %v2997
        %v3002 = vadd.f32 %v2914, %v2999
        %s3003 = scalar_lea.vmem %s7, 12
        %v3004 = vld [vmem:[%s3003] sm:$0xf]
        %3005 = vrot.lane.b32.xlu0 %v2748, 112
        %v3006 = vpop.permute.xlu0 %3005
        %3007 = vrot.lane.b32.xlu0 %v2749, 112
        %v3008 = vpop.permute.xlu0 %3007
        %v3009 = vsel %vm848, %v3006, %v3008
        %v3011 = vsel %vm1179, %v3004, 0
        %v3013 = vsel %vm1182, %v3009, 0
        %v3015 = vsel %vm1182, %v3008, 0
        %3017 = vmatprep.subr.mxu0 0.0
        %3018 = vmatpush1.msra.mxu0 0.0
        %3019 = vmatprep.subr.mxu0 0.0
        %3020 = vmatpush1.msra.mxu0 0.0
        %3021 = vmatprep.subr.mxu0 0.0
        %3022 = vmatpush1.msra.mxu0 0.0
        %3023 = vmatprep.subr.mxu0 0.0
        %3024 = vmatpush1.msra.mxu0 0.0
        %3025 = vmatprep.subr.mxu0 0.0
        %3026 = vmatpush1.msra.mxu0 0.0
        %3027 = vmatprep.subr.mxu0 0.0
        %3028 = vmatpush1.msra.mxu0 0.0
        %3029 = vmatprep.subr.mxu0 0.0
        %3030 = vmatpush1.msra.mxu0 0.0
        %3031 = vmatprep.subr.mxu0 0.0
        %3032 = vmatpush1.msra.mxu0 0.0
        %3033 = vmatprep.subr.mxu0 0.0
        %3034 = vmatpush1.msra.mxu0 0.0
        %3035 = vmatprep.subr.mxu0 0.0
        %3036 = vmatpush1.msra.mxu0 0.0
        %3037 = vmatprep.subr.mxu0 0.0
        %3038 = vmatpush1.msra.mxu0 0.0
        %3039 = vmatprep.subr.mxu0 0.0
        %3040 = vmatpush1.msra.mxu0 0.0
        %3041 = vmatprep.subr.mxu0 0.0
        %3042 = vmatpush1.msra.mxu0 0.0
        %3043 = vmatprep.subr.mxu0 0.0
        %3044 = vmatpush1.msra.mxu0 0.0
        %3045 = vmatprep.subr.mxu0 0.0
        %3046 = vmatpush1.msra.mxu0 0.0
        %3047 = vmatprep.subr.mxu0 %v3015
        %3048 = vmatpush1.msra.mxu0 %v3013
        %3049 = vmatprep.subr.mxu0 0.0
        %3050 = vmatpush2.msra.mxu0 0.0
        %3051 = vmatprep.subr.mxu0 0.0
        %3052 = vmatpush2.msra.mxu0 0.0
        %3053 = vmatprep.subr.mxu0 0.0
        %3054 = vmatpush2.msra.mxu0 0.0
        %3055 = vmatprep.subr.mxu0 0.0
        %3056 = vmatpush2.msra.mxu0 0.0
        %3057 = vmatprep.subr.mxu0 0.0
        %3058 = vmatpush2.msra.mxu0 0.0
        %3059 = vmatprep.subr.mxu0 0.0
        %3060 = vmatpush2.msra.mxu0 0.0
        %3061 = vmatprep.subr.mxu0 0.0
        %3062 = vmatpush2.msra.mxu0 0.0
        %3063 = vmatprep.subr.mxu0 0.0
        %3064 = vmatpush2.msra.mxu0 0.0
        %3065 = vmatprep.subr.mxu0 0.0
        %3066 = vmatpush2.msra.mxu0 0.0
        %3067 = vmatprep.subr.mxu0 0.0
        %3068 = vmatpush2.msra.mxu0 0.0
        %3069 = vmatprep.subr.mxu0 0.0
        %3070 = vmatpush2.msra.mxu0 0.0
        %3071 = vmatprep.subr.mxu0 0.0
        %3072 = vmatpush2.msra.mxu0 0.0
        %3073 = vmatprep.subr.mxu0 0.0
        %3074 = vmatpush2.msra.mxu0 0.0
        %3075 = vmatprep.subr.mxu0 0.0
        %3076 = vmatpush2.msra.mxu0 0.0
        %3077 = vmatprep.subr.mxu0 0.0
        %3078 = vmatpush2.msra.mxu0 0.0
        %3079 = vmatprep.subr.mxu0 0.0
        %3080 = vmatpush2.msra.mxu0 0.0
        %3081 = vmatprep.mubr.f32.mxu0 0.0
        %3082 = vmatmul.mubr.f32.gmra.mxu0 %v3011
        %v3083 = vpop.f32.mrf.mxu0
        %v3084 = vadd.f32 0.0, %v3083
        %v3085 = vpop.f32.mrf.mxu0
        %v3086 = vadd.f32 0.0, %v3085
        %3087 = vdwg.mxu0
        %v3088 = vadd.f32 %v3001, %v3084
        %v3089 = vadd.f32 %v3002, %v3086
        %s3090 = scalar_lea.vmem %s7, 16
        %v3091 = vld [vmem:[%s3090] sm:$0xf]
        %3092 = vrot.lane.b32.xlu0 %v2748, 111
        %v3093 = vpop.permute.xlu0 %3092
        %3094 = vrot.lane.b32.xlu0 %v2749, 111
        %v3095 = vpop.permute.xlu0 %3094
        %v3096 = vsel %vm1009, %v3093, %v3095
        %v3098 = vsel %vm1179, %v3091, 0
        %v3100 = vsel %vm1182, %v3096, 0
        %v3102 = vsel %vm1182, %v3095, 0
        %3104 = vmatprep.subr.mxu0 0.0
        %3105 = vmatpush1.msra.mxu0 0.0
        %3106 = vmatprep.subr.mxu0 0.0
        %3107 = vmatpush1.msra.mxu0 0.0
        %3108 = vmatprep.subr.mxu0 0.0
        %3109 = vmatpush1.msra.mxu0 0.0
        %3110 = vmatprep.subr.mxu0 0.0
        %3111 = vmatpush1.msra.mxu0 0.0
        %3112 = vmatprep.subr.mxu0 0.0
        %3113 = vmatpush1.msra.mxu0 0.0
        %3114 = vmatprep.subr.mxu0 0.0
        %3115 = vmatpush1.msra.mxu0 0.0
        %3116 = vmatprep.subr.mxu0 0.0
        %3117 = vmatpush1.msra.mxu0 0.0
        %3118 = vmatprep.subr.mxu0 0.0
        %3119 = vmatpush1.msra.mxu0 0.0
        %3120 = vmatprep.subr.mxu0 0.0
        %3121 = vmatpush1.msra.mxu0 0.0
        %3122 = vmatprep.subr.mxu0 0.0
        %3123 = vmatpush1.msra.mxu0 0.0
        %3124 = vmatprep.subr.mxu0 0.0
        %3125 = vmatpush1.msra.mxu0 0.0
        %3126 = vmatprep.subr.mxu0 0.0
        %3127 = vmatpush1.msra.mxu0 0.0
        %3128 = vmatprep.subr.mxu0 0.0
        %3129 = vmatpush1.msra.mxu0 0.0
        %3130 = vmatprep.subr.mxu0 0.0
        %3131 = vmatpush1.msra.mxu0 0.0
        %3132 = vmatprep.subr.mxu0 0.0
        %3133 = vmatpush1.msra.mxu0 0.0
        %3134 = vmatprep.subr.mxu0 %v3102
        %3135 = vmatpush1.msra.mxu0 %v3100
        %3136 = vmatprep.subr.mxu0 0.0
        %3137 = vmatpush2.msra.mxu0 0.0
        %3138 = vmatprep.subr.mxu0 0.0
        %3139 = vmatpush2.msra.mxu0 0.0
        %3140 = vmatprep.subr.mxu0 0.0
        %3141 = vmatpush2.msra.mxu0 0.0
        %3142 = vmatprep.subr.mxu0 0.0
        %3143 = vmatpush2.msra.mxu0 0.0
        %3144 = vmatprep.subr.mxu0 0.0
        %3145 = vmatpush2.msra.mxu0 0.0
        %3146 = vmatprep.subr.mxu0 0.0
        %3147 = vmatpush2.msra.mxu0 0.0
        %3148 = vmatprep.subr.mxu0 0.0
        %3149 = vmatpush2.msra.mxu0 0.0
        %3150 = vmatprep.subr.mxu0 0.0
        %3151 = vmatpush2.msra.mxu0 0.0
        %3152 = vmatprep.subr.mxu0 0.0
        %3153 = vmatpush2.msra.mxu0 0.0
        %3154 = vmatprep.subr.mxu0 0.0
        %3155 = vmatpush2.msra.mxu0 0.0
        %3156 = vmatprep.subr.mxu0 0.0
        %3157 = vmatpush2.msra.mxu0 0.0
        %3158 = vmatprep.subr.mxu0 0.0
        %3159 = vmatpush2.msra.mxu0 0.0
        %3160 = vmatprep.subr.mxu0 0.0
        %3161 = vmatpush2.msra.mxu0 0.0
        %3162 = vmatprep.subr.mxu0 0.0
        %3163 = vmatpush2.msra.mxu0 0.0
        %3164 = vmatprep.subr.mxu0 0.0
        %3165 = vmatpush2.msra.mxu0 0.0
        %3166 = vmatprep.subr.mxu0 0.0
        %3167 = vmatpush2.msra.mxu0 0.0
        %3168 = vmatprep.mubr.f32.mxu0 0.0
        %3169 = vmatmul.mubr.f32.gmra.mxu0 %v3098
        %v3170 = vpop.f32.mrf.mxu0
        %v3171 = vadd.f32 0.0, %v3170
        %v3172 = vpop.f32.mrf.mxu0
        %v3173 = vadd.f32 0.0, %v3172
        %3174 = vdwg.mxu0
        %v3175 = vadd.f32 %v3088, %v3171
        %v3176 = vadd.f32 %v3089, %v3173
        %s3177 = scalar_lea.vmem %s7, 20
        %v3178 = vld [vmem:[%s3177] sm:$0xf]
        %3179 = vrot.lane.b32.xlu0 %v2748, 110
        %v3180 = vpop.permute.xlu0 %3179
        %3181 = vrot.lane.b32.xlu0 %v2749, 110
        %v3182 = vpop.permute.xlu0 %3181
        %v3183 = vsel %vm2036, %v3180, %v3182
        %v3185 = vsel %vm1179, %v3178, 0
        %v3187 = vsel %vm1182, %v3183, 0
        %v3189 = vsel %vm1182, %v3182, 0
        %3191 = vmatprep.subr.mxu0 0.0
        %3192 = vmatpush1.msra.mxu0 0.0
        %3193 = vmatprep.subr.mxu0 0.0
        %3194 = vmatpush1.msra.mxu0 0.0
        %3195 = vmatprep.subr.mxu0 0.0
        %3196 = vmatpush1.msra.mxu0 0.0
        %3197 = vmatprep.subr.mxu0 0.0
        %3198 = vmatpush1.msra.mxu0 0.0
        %3199 = vmatprep.subr.mxu0 0.0
        %3200 = vmatpush1.msra.mxu0 0.0
        %3201 = vmatprep.subr.mxu0 0.0
        %3202 = vmatpush1.msra.mxu0 0.0
        %3203 = vmatprep.subr.mxu0 0.0
        %3204 = vmatpush1.msra.mxu0 0.0
        %3205 = vmatprep.subr.mxu0 0.0
        %3206 = vmatpush1.msra.mxu0 0.0
        %3207 = vmatprep.subr.mxu0 0.0
        %3208 = vmatpush1.msra.mxu0 0.0
        %3209 = vmatprep.subr.mxu0 0.0
        %3210 = vmatpush1.msra.mxu0 0.0
        %3211 = vmatprep.subr.mxu0 0.0
        %3212 = vmatpush1.msra.mxu0 0.0
        %3213 = vmatprep.subr.mxu0 0.0
        %3214 = vmatpush1.msra.mxu0 0.0
        %3215 = vmatprep.subr.mxu0 0.0
        %3216 = vmatpush1.msra.mxu0 0.0
        %3217 = vmatprep.subr.mxu0 0.0
        %3218 = vmatpush1.msra.mxu0 0.0
        %3219 = vmatprep.subr.mxu0 0.0
        %3220 = vmatpush1.msra.mxu0 0.0
        %3221 = vmatprep.subr.mxu0 %v3189
        %3222 = vmatpush1.msra.mxu0 %v3187
        %3223 = vmatprep.subr.mxu0 0.0
        %3224 = vmatpush2.msra.mxu0 0.0
        %3225 = vmatprep.subr.mxu0 0.0
        %3226 = vmatpush2.msra.mxu0 0.0
        %3227 = vmatprep.subr.mxu0 0.0
        %3228 = vmatpush2.msra.mxu0 0.0
        %3229 = vmatprep.subr.mxu0 0.0
        %3230 = vmatpush2.msra.mxu0 0.0
        %3231 = vmatprep.subr.mxu0 0.0
        %3232 = vmatpush2.msra.mxu0 0.0
        %3233 = vmatprep.subr.mxu0 0.0
        %3234 = vmatpush2.msra.mxu0 0.0
        %3235 = vmatprep.subr.mxu0 0.0
        %3236 = vmatpush2.msra.mxu0 0.0
        %3237 = vmatprep.subr.mxu0 0.0
        %3238 = vmatpush2.msra.mxu0 0.0
        %3239 = vmatprep.subr.mxu0 0.0
        %3240 = vmatpush2.msra.mxu0 0.0
        %3241 = vmatprep.subr.mxu0 0.0
        %3242 = vmatpush2.msra.mxu0 0.0
        %3243 = vmatprep.subr.mxu0 0.0
        %3244 = vmatpush2.msra.mxu0 0.0
        %3245 = vmatprep.subr.mxu0 0.0
        %3246 = vmatpush2.msra.mxu0 0.0
        %3247 = vmatprep.subr.mxu0 0.0
        %3248 = vmatpush2.msra.mxu0 0.0
        %3249 = vmatprep.subr.mxu0 0.0
        %3250 = vmatpush2.msra.mxu0 0.0
        %3251 = vmatprep.subr.mxu0 0.0
        %3252 = vmatpush2.msra.mxu0 0.0
        %3253 = vmatprep.subr.mxu0 0.0
        %3254 = vmatpush2.msra.mxu0 0.0
        %3255 = vmatprep.mubr.f32.mxu0 0.0
        %3256 = vmatmul.mubr.f32.gmra.mxu0 %v3185
        %v3257 = vpop.f32.mrf.mxu0
        %v3258 = vadd.f32 0.0, %v3257
        %v3259 = vpop.f32.mrf.mxu0
        %v3260 = vadd.f32 0.0, %v3259
        %3261 = vdwg.mxu0
        %v3262 = vadd.f32 %v3175, %v3258
        %v3263 = vadd.f32 %v3176, %v3260
        %s3264 = scalar_lea.vmem %s7, 24
        %v3265 = vld [vmem:[%s3264] sm:$0xf]
        %3266 = vrot.lane.b32.xlu0 %v2748, 96
        %v3267 = vpop.permute.xlu0 %3266
        %3268 = vrot.lane.b32.xlu0 %v2749, 96
        %v3269 = vpop.permute.xlu0 %3268
        %v3270 = vsel %vm2210, %v3267, %v3269
        %v3272 = vsel %vm1179, %v3265, 0
        %v3274 = vsel %vm1182, %v3270, 0
        %v3276 = vsel %vm1182, %v3269, 0
        %3278 = vmatprep.subr.mxu0 0.0
        %3279 = vmatpush1.msra.mxu0 0.0
        %3280 = vmatprep.subr.mxu0 0.0
        %3281 = vmatpush1.msra.mxu0 0.0
        %3282 = vmatprep.subr.mxu0 0.0
        %3283 = vmatpush1.msra.mxu0 0.0
        %3284 = vmatprep.subr.mxu0 0.0
        %3285 = vmatpush1.msra.mxu0 0.0
        %3286 = vmatprep.subr.mxu0 0.0
        %3287 = vmatpush1.msra.mxu0 0.0
        %3288 = vmatprep.subr.mxu0 0.0
        %3289 = vmatpush1.msra.mxu0 0.0
        %3290 = vmatprep.subr.mxu0 0.0
        %3291 = vmatpush1.msra.mxu0 0.0
        %3292 = vmatprep.subr.mxu0 0.0
        %3293 = vmatpush1.msra.mxu0 0.0
        %3294 = vmatprep.subr.mxu0 0.0
        %3295 = vmatpush1.msra.mxu0 0.0
        %3296 = vmatprep.subr.mxu0 0.0
        %3297 = vmatpush1.msra.mxu0 0.0
        %3298 = vmatprep.subr.mxu0 0.0
        %3299 = vmatpush1.msra.mxu0 0.0
        %3300 = vmatprep.subr.mxu0 0.0
        %3301 = vmatpush1.msra.mxu0 0.0
        %3302 = vmatprep.subr.mxu0 0.0
        %3303 = vmatpush1.msra.mxu0 0.0
        %3304 = vmatprep.subr.mxu0 0.0
        %3305 = vmatpush1.msra.mxu0 0.0
        %3306 = vmatprep.subr.mxu0 0.0
        %3307 = vmatpush1.msra.mxu0 0.0
        %3308 = vmatprep.subr.mxu0 %v3276
        %3309 = vmatpush1.msra.mxu0 %v3274
        %3310 = vmatprep.subr.mxu0 0.0
        %3311 = vmatpush2.msra.mxu0 0.0
        %3312 = vmatprep.subr.mxu0 0.0
        %3313 = vmatpush2.msra.mxu0 0.0
        %3314 = vmatprep.subr.mxu0 0.0
        %3315 = vmatpush2.msra.mxu0 0.0
        %3316 = vmatprep.subr.mxu0 0.0
        %3317 = vmatpush2.msra.mxu0 0.0
        %3318 = vmatprep.subr.mxu0 0.0
        %3319 = vmatpush2.msra.mxu0 0.0
        %3320 = vmatprep.subr.mxu0 0.0
        %3321 = vmatpush2.msra.mxu0 0.0
        %3322 = vmatprep.subr.mxu0 0.0
        %3323 = vmatpush2.msra.mxu0 0.0
        %3324 = vmatprep.subr.mxu0 0.0
        %3325 = vmatpush2.msra.mxu0 0.0
        %3326 = vmatprep.subr.mxu0 0.0
        %3327 = vmatpush2.msra.mxu0 0.0
        %3328 = vmatprep.subr.mxu0 0.0
        %3329 = vmatpush2.msra.mxu0 0.0
        %3330 = vmatprep.subr.mxu0 0.0
        %3331 = vmatpush2.msra.mxu0 0.0
        %3332 = vmatprep.subr.mxu0 0.0
        %3333 = vmatpush2.msra.mxu0 0.0
        %3334 = vmatprep.subr.mxu0 0.0
        %3335 = vmatpush2.msra.mxu0 0.0
        %3336 = vmatprep.subr.mxu0 0.0
        %3337 = vmatpush2.msra.mxu0 0.0
        %3338 = vmatprep.subr.mxu0 0.0
        %3339 = vmatpush2.msra.mxu0 0.0
        %3340 = vmatprep.subr.mxu0 0.0
        %3341 = vmatpush2.msra.mxu0 0.0
        %3342 = vmatprep.mubr.f32.mxu0 0.0
        %3343 = vmatmul.mubr.f32.gmra.mxu0 %v3272
        %v3344 = vpop.f32.mrf.mxu0
        %v3345 = vadd.f32 0.0, %v3344
        %v3346 = vpop.f32.mrf.mxu0
        %v3347 = vadd.f32 0.0, %v3346
        %3348 = vdwg.mxu0
        %v3349 = vadd.f32 %v3262, %v3345
        %v3350 = vadd.f32 %v3263, %v3347
        %s3351 = scalar_lea.vmem %s7, 28
        %v3352 = vld [vmem:[%s3351] sm:$0xf]
        %3353 = vrot.lane.b32.xlu0 %v2748, 95
        %v3354 = vpop.permute.xlu0 %3353
        %3355 = vrot.lane.b32.xlu0 %v2749, 95
        %v3356 = vpop.permute.xlu0 %3355
        %v3357 = vsel %vm2387, %v3354, %v3356
        %v3359 = vsel %vm1179, %v3352, 0
        %v3361 = vsel %vm1182, %v3357, 0
        %v3363 = vsel %vm1182, %v3356, 0
        %3365 = vmatprep.subr.mxu0 0.0
        %3366 = vmatpush1.msra.mxu0 0.0
        %3367 = vmatprep.subr.mxu0 0.0
        %3368 = vmatpush1.msra.mxu0 0.0
        %3369 = vmatprep.subr.mxu0 0.0
        %3370 = vmatpush1.msra.mxu0 0.0
        %3371 = vmatprep.subr.mxu0 0.0
        %3372 = vmatpush1.msra.mxu0 0.0
        %3373 = vmatprep.subr.mxu0 0.0
        %3374 = vmatpush1.msra.mxu0 0.0
        %3375 = vmatprep.subr.mxu0 0.0
        %3376 = vmatpush1.msra.mxu0 0.0
        %3377 = vmatprep.subr.mxu0 0.0
        %3378 = vmatpush1.msra.mxu0 0.0
        %3379 = vmatprep.subr.mxu0 0.0
        %3380 = vmatpush1.msra.mxu0 0.0
        %3381 = vmatprep.subr.mxu0 0.0
        %3382 = vmatpush1.msra.mxu0 0.0
        %3383 = vmatprep.subr.mxu0 0.0
        %3384 = vmatpush1.msra.mxu0 0.0
        %3385 = vmatprep.subr.mxu0 0.0
        %3386 = vmatpush1.msra.mxu0 0.0
        %3387 = vmatprep.subr.mxu0 0.0
        %3388 = vmatpush1.msra.mxu0 0.0
        %3389 = vmatprep.subr.mxu0 0.0
        %3390 = vmatpush1.msra.mxu0 0.0
        %3391 = vmatprep.subr.mxu0 0.0
        %3392 = vmatpush1.msra.mxu0 0.0
        %3393 = vmatprep.subr.mxu0 0.0
        %3394 = vmatpush1.msra.mxu0 0.0
        %3395 = vmatprep.subr.mxu0 %v3363
        %3396 = vmatpush1.msra.mxu0 %v3361
        %3397 = vmatprep.subr.mxu0 0.0
        %3398 = vmatpush2.msra.mxu0 0.0
        %3399 = vmatprep.subr.mxu0 0.0
        %3400 = vmatpush2.msra.mxu0 0.0
        %3401 = vmatprep.subr.mxu0 0.0
        %3402 = vmatpush2.msra.mxu0 0.0
        %3403 = vmatprep.subr.mxu0 0.0
        %3404 = vmatpush2.msra.mxu0 0.0
        %3405 = vmatprep.subr.mxu0 0.0
        %3406 = vmatpush2.msra.mxu0 0.0
        %3407 = vmatprep.subr.mxu0 0.0
        %3408 = vmatpush2.msra.mxu0 0.0
        %3409 = vmatprep.subr.mxu0 0.0
        %3410 = vmatpush2.msra.mxu0 0.0
        %3411 = vmatprep.subr.mxu0 0.0
        %3412 = vmatpush2.msra.mxu0 0.0
        %3413 = vmatprep.subr.mxu0 0.0
        %3414 = vmatpush2.msra.mxu0 0.0
        %3415 = vmatprep.subr.mxu0 0.0
        %3416 = vmatpush2.msra.mxu0 0.0
        %3417 = vmatprep.subr.mxu0 0.0
        %3418 = vmatpush2.msra.mxu0 0.0
        %3419 = vmatprep.subr.mxu0 0.0
        %3420 = vmatpush2.msra.mxu0 0.0
        %3421 = vmatprep.subr.mxu0 0.0
        %3422 = vmatpush2.msra.mxu0 0.0
        %3423 = vmatprep.subr.mxu0 0.0
        %3424 = vmatpush2.msra.mxu0 0.0
        %3425 = vmatprep.subr.mxu0 0.0
        %3426 = vmatpush2.msra.mxu0 0.0
        %3427 = vmatprep.subr.mxu0 0.0
        %3428 = vmatpush2.msra.mxu0 0.0
        %3429 = vmatprep.mubr.f32.mxu0 0.0
        %3430 = vmatmul.mubr.f32.gmra.mxu0 %v3359
        %v3431 = vpop.f32.mrf.mxu0
        %v3432 = vadd.f32 0.0, %v3431
        %v3433 = vpop.f32.mrf.mxu0
        %v3434 = vadd.f32 0.0, %v3433
        %3435 = vdwg.mxu0
        %v3436 = vadd.f32 %v3349, %v3432
        %v3437 = vadd.f32 %v3350, %v3434
        %s3438 = scalar_lea.vmem %s7, 32
        %v3439 = vld [vmem:[%s3438] sm:$0xf]
        %3440 = vrot.lane.b32.xlu0 %v2748, 94
        %v3441 = vpop.permute.xlu0 %3440
        %3442 = vrot.lane.b32.xlu0 %v2749, 94
        %v3443 = vpop.permute.xlu0 %3442
        %v3444 = vsel %vm2568, %v3441, %v3443
        %v3446 = vsel %vm1179, %v3439, 0
        %v3448 = vsel %vm1182, %v3444, 0
        %v3450 = vsel %vm1182, %v3443, 0
        %3452 = vmatprep.subr.mxu0 0.0
        %3453 = vmatpush1.msra.mxu0 0.0
        %3454 = vmatprep.subr.mxu0 0.0
        %3455 = vmatpush1.msra.mxu0 0.0
        %3456 = vmatprep.subr.mxu0 0.0
        %3457 = vmatpush1.msra.mxu0 0.0
        %3458 = vmatprep.subr.mxu0 0.0
        %3459 = vmatpush1.msra.mxu0 0.0
        %3460 = vmatprep.subr.mxu0 0.0
        %3461 = vmatpush1.msra.mxu0 0.0
        %3462 = vmatprep.subr.mxu0 0.0
        %3463 = vmatpush1.msra.mxu0 0.0
        %3464 = vmatprep.subr.mxu0 0.0
        %3465 = vmatpush1.msra.mxu0 0.0
        %3466 = vmatprep.subr.mxu0 0.0
        %3467 = vmatpush1.msra.mxu0 0.0
        %3468 = vmatprep.subr.mxu0 0.0
        %3469 = vmatpush1.msra.mxu0 0.0
        %3470 = vmatprep.subr.mxu0 0.0
        %3471 = vmatpush1.msra.mxu0 0.0
        %3472 = vmatprep.subr.mxu0 0.0
        %3473 = vmatpush1.msra.mxu0 0.0
        %3474 = vmatprep.subr.mxu0 0.0
        %3475 = vmatpush1.msra.mxu0 0.0
        %3476 = vmatprep.subr.mxu0 0.0
        %3477 = vmatpush1.msra.mxu0 0.0
        %3478 = vmatprep.subr.mxu0 0.0
        %3479 = vmatpush1.msra.mxu0 0.0
        %3480 = vmatprep.subr.mxu0 0.0
        %3481 = vmatpush1.msra.mxu0 0.0
        %3482 = vmatprep.subr.mxu0 %v3450
        %3483 = vmatpush1.msra.mxu0 %v3448
        %3484 = vmatprep.subr.mxu0 0.0
        %3485 = vmatpush2.msra.mxu0 0.0
        %3486 = vmatprep.subr.mxu0 0.0
        %3487 = vmatpush2.msra.mxu0 0.0
        %3488 = vmatprep.subr.mxu0 0.0
        %3489 = vmatpush2.msra.mxu0 0.0
        %3490 = vmatprep.subr.mxu0 0.0
        %3491 = vmatpush2.msra.mxu0 0.0
        %3492 = vmatprep.subr.mxu0 0.0
        %3493 = vmatpush2.msra.mxu0 0.0
        %3494 = vmatprep.subr.mxu0 0.0
        %3495 = vmatpush2.msra.mxu0 0.0
        %3496 = vmatprep.subr.mxu0 0.0
        %3497 = vmatpush2.msra.mxu0 0.0
        %3498 = vmatprep.subr.mxu0 0.0
        %3499 = vmatpush2.msra.mxu0 0.0
        %3500 = vmatprep.subr.mxu0 0.0
        %3501 = vmatpush2.msra.mxu0 0.0
        %3502 = vmatprep.subr.mxu0 0.0
        %3503 = vmatpush2.msra.mxu0 0.0
        %3504 = vmatprep.subr.mxu0 0.0
        %3505 = vmatpush2.msra.mxu0 0.0
        %3506 = vmatprep.subr.mxu0 0.0
        %3507 = vmatpush2.msra.mxu0 0.0
        %3508 = vmatprep.subr.mxu0 0.0
        %3509 = vmatpush2.msra.mxu0 0.0
        %3510 = vmatprep.subr.mxu0 0.0
        %3511 = vmatpush2.msra.mxu0 0.0
        %3512 = vmatprep.subr.mxu0 0.0
        %3513 = vmatpush2.msra.mxu0 0.0
        %3514 = vmatprep.subr.mxu0 0.0
        %3515 = vmatpush2.msra.mxu0 0.0
        %3516 = vmatprep.mubr.f32.mxu0 0.0
        %3517 = vmatmul.mubr.f32.gmra.mxu0 %v3446
        %v3518 = vpop.f32.mrf.mxu0
        %v3519 = vadd.f32 0.0, %v3518
        %v3520 = vpop.f32.mrf.mxu0
        %v3521 = vadd.f32 0.0, %v3520
        %3522 = vdwg.mxu0
        %v3523 = vadd.f32 %v3436, %v3519
        %v3524 = vadd.f32 %v3437, %v3521
        %v3525 = vld [vmem:[%s8] sm:$0xf]
        %3527 = vset.pattern.permute.xlu0 0
        %3528 = vperm.xlu0 %3527, %v3525
        %v3529 = vpop.permute.xlu0 %3528
        %v3531 = vadd.f32 %v3523, %v3529
        %v3532 = vadd.f32 %v3524, %v3529
        %v3533 = vmax.f32 %v3531, 0.0
        %v3534 = vmax.f32 %v3532, 0.0
        %v3537 = vcombine.low %v3533, %v3534
        %vm3539 = vcmask 392196
        %vm3540 = vmor %vm3539, %vm1182
        %3541 = vst.msk [vmem:[%s353] sm:$0xff] %vm3540, %v3537
        %s3542 = sand.u32 %s231, 1
        %s3543 = scalar_lea.sflag [#allocation4], %s3542
        %s3544 = sand.u32 %s231, 1
        %s3545 = smul.addr %s3544, 8
        %s3546 = scalar_lea.vmem [#allocation5], %s3545
        // Predicated region
        $region61: #{tpu_custom_call.1} parent=55 // pred_check
          %p3547 = pneg %p241
        $region62: #{tpu_custom_call.1} parent=55 // pred_check_branch
          %3549 = sbr.rel (%p3547) target = $region64
        $region63: #{tpu_custom_call.1} parent=55 // pred_region
          %s3551 = ssub.s32 128, 128
          %3552 = vsyncadd %s3543, %s3551
          %s3553 = smul.addr %s24, 2
          %s3554 = smul.addr %s3553, 64
          %s3555 = scalar_lea.hbm %s9, %s3554
          %s3557 = sshll.u32 %s3546, 4
          %s3558 = int_to_ptr.vmem [resolvable:$true] %s3557
          %3560 = dma.vmem_to_hbm [thread:$0]  %s3558, 128, %s3555, %s3543
        $region64: #{tpu_custom_call.1} parent=55 // pred_fallthru
          _
      $region56: #{tpu_custom_call.1} parent=5 // pred_fallthru
        _
      %p3561 = scmp.le.s32.totalorder 2, %s19
      // Predicated region
      $region65: #{tpu_custom_call.1} parent=5 // pred_check
        %p3562 = pneg %p3561
      $region66: #{tpu_custom_call.1} parent=5 // pred_check_branch
        %3564 = sbr.rel (%p3562) target = $region68
      $region67: #{tpu_custom_call.1} parent=5 // pred_region
        %s3565 = ssub.s32 %s19, 2
        // Predicated region
        $region69: #{tpu_custom_call.1} parent=67 // pred_check
          %p3566 = pneg %p247
        $region70: #{tpu_custom_call.1} parent=67 // pred_check_branch
          %3568 = sbr.rel (%p3566) target = $region72
        $region71: #{tpu_custom_call.1} parent=67 // pred_region
          %s3569 = sand.u32 %s232, 1
          %s3570 = scalar_lea.sflag [#allocation4], %s3569
          %s3571 = sand.u32 %s232, 1
          %s3572 = smul.addr %s3571, 8
          %s3573 = scalar_lea.vmem [#allocation5], %s3572
          %3574 = dma.done %s3570, 128
        $region72: #{tpu_custom_call.1} parent=67 // pred_fallthru
          _
      $region68: #{tpu_custom_call.1} parent=5 // pred_fallthru
        _
    $region6: #{tpu_custom_call.1} parent=1 // loop_footer
      %s23 = sadd.s32 1, %s19
    $region7: #{tpu_custom_call.1} parent=1 // loop_footer_branch
      %18 = sbr.rel target = $region3
    $region8: #{tpu_custom_call.1} parent=1 // loop_exit
      _
    %3575 = vsyncpa [#allocation3], 1
    %s3576 = scalar_lea.sflag [#allocation3], 1
    %3577 = vsyncpa %s3576, 1
    %3578 = vsyncpa [#allocation4], 1
    %s3579 = scalar_lea.sflag [#allocation4], 1
    %3580 = vsyncpa %s3579, 1

</llo_original>
